<compile_context>
chip_gen: v7x
topology: tpu7x:2x2x1
jax: 0.10.0
libtpu: 0.0.40
codegen_flags: <defaults>
</compile_context>

<pallas_src>
import math
import functools
import numpy as np
import jax
import jax.numpy as jnp
from jax import lax
from jax.experimental import pallas as pl
from jax.experimental.pallas import tpu as pltpu

# ----------------------------- synthetic config -----------------------------
D = 32                    # cfg.v_feat_out
NUM_HEADS = 4             # cfg.intra_num_heads
HEAD_DIM = D // NUM_HEADS
NUM_LAYERS = 2            # cfg.num_intra_graph_layers
SEQ_LENS = (4, 6, 6)      # cfg.intra_seq_lens == cfg.inter_seq_lens
L = sum(SEQ_LENS)
B = 2
BL = B * L
NEG_INF = -1.0e10
LN_EPS = 1e-5
EMBED_SCALE = math.sqrt(D)
_APPROX_RECIP = True      # set False for tight-tolerance numeric validation

# combined (batch x modality) boundaries for the in-kernel block-diagonal mask
_ALL_BOUNDARIES = tuple(
    int(b * L + c) for b in range(B) for c in np.cumsum(SEQ_LENS)
)[:-1]                    # e.g. (4, 10, 16, 20, 26) — 16 doubles as batch edge


# ------------------------------- Pallas kernel -------------------------------
def _intra_graph_kernel(x_ref, pos_ref, w_ref, vec_ref, o_ref):
    """Single invocation, whole batch: pos-encode + NUM_LAYERS masked MHA + LN.

    x_ref  : (B*L, D)             raw concatenated modality sequences
    pos_ref: (B*L, D)             static sinusoidal row per (batch, timestep)
    w_ref  : (NUM_LAYERS, D, 4D)  [Wq^T*scale | Wk^T | Wv^T | Wout^T] lane-dense
    vec_ref: (NUM_LAYERS+1, 4D)   row l: [bq*scale | bk | bv | bout];
                                  row NUM_LAYERS: [ln_gamma | ln_beta | 0 | 0]
    o_ref  : (B*L, D)
    """
    x = x_ref[...]
    # Fused positional encoding (eval-mode dropout == identity).  Rows whose
    # feature-0 is exactly zero get the padding (all-zero) embedding, matching
    # the reference SinusoidalPositionalEmbedding path.
    pos = pos_ref[...] * (x[:, 0:1] != 0.0).astype(jnp.float32)
    h = EMBED_SCALE * x + pos

    # Combined (batch, modality) block-diagonal additive mask, built in-kernel
    # from iota segment ids (0 inside a same-batch same-modality block,
    # -1e10 everywhere else — including across batch entries).
    ri = lax.broadcasted_iota(jnp.int32, (BL, BL), 0)
    ci = lax.broadcasted_iota(jnp.int32, (BL, BL), 1)
    rseg = jnp.zeros((BL, BL), jnp.int32)
    cseg = jnp.zeros((BL, BL), jnp.int32)
    for bnd in _ALL_BOUNDARIES:
        rseg = rseg + (ri >= bnd).astype(jnp.int32)
        cseg = cseg + (ci >= bnd).astype(jnp.int32)
    mask = jnp.where(rseg == cseg, jnp.float32(0.0), jnp.float32(NEG_INF))

    for layer in range(NUM_LAYERS):                       # static unroll (2)
        w = w_ref[layer]                                  # (D, 4D) lane-dense
        bias = vec_ref[layer:layer + 1, :]                # (1, 4D)
        # One fused in-projection over the batch-folded slab; the 4th quarter
        # (h @ Wout^T) is discarded — N=128 is still a single MXU pass.
        qkv = jnp.dot(h, w, preferred_element_type=jnp.float32) + bias
        q = qkv[:, 0 * D:1 * D]
        k = qkv[:, 1 * D:2 * D]
        v = qkv[:, 2 * D:3 * D]
        wo = w[:, 3 * D:4 * D]                            # (D, D) = Wout^T
        bo = bias[:, 3 * D:4 * D]                         # (1, D) = bout

        ctx_heads = []
        for hd in range(NUM_HEADS):                       # static unroll (4)
            cols = slice(hd * HEAD_DIM, (hd + 1) * HEAD_DIM)
            qh = q[:, cols]                               # (B*L, HEAD_DIM)
            kh = k[:, cols]
            # batch-fused scores: contract head_dim of both operands
            s = lax.dot_general(qh, kh, (((1,), (1,)), ((), ())),
                                preferred_element_type=jnp.float32) + mask
            m = jnp.max(s, axis=-1, keepdims=True)
            e = jnp.exp(s - m)
            z = jnp.sum(e, axis=-1, keepdims=True)
            if _APPROX_RECIP:
                p = e * pl.reciprocal(z, approx=True)     # EUP slot
            else:
                p = e / z
            ctx_heads.append(jnp.dot(p, v[:, cols],
                                     preferred_element_type=jnp.float32))
        # lane-concat the head contexts (cheap XLU) -> single out-proj matmul
        ctx = jnp.concatenate(ctx_heads, axis=-1)         # (B*L, D)
        h = jnp.dot(ctx, wo, preferred_element_type=jnp.float32) + bo

    # LayerNorm over the feature dimension (biased variance, torch convention)
    ln = vec_ref[NUM_LAYERS:NUM_LAYERS + 1, :]
    gamma = ln[:, 0:D]
    beta = ln[:, D:2 * D]
    mean = jnp.mean(h, axis=-1, keepdims=True)
    var = jnp.mean(jnp.square(h - mean), axis=-1, keepdims=True)
    o_ref[...] = (h - mean) * lax.rsqrt(var + LN_EPS) * gamma + beta


def _run_intra_graph_kernel(x2d, pos2d, weights, vectors):
    n, d = x2d.shape
    vmem = pl.BlockSpec(memory_space=pltpu.MemorySpace.VMEM)
    return pl.pallas_call(
        _intra_graph_kernel,
        out_shape=jax.ShapeDtypeStruct((n, d), jnp.float32),
        in_specs=[vmem, vmem, vmem, vmem],                # gridless, full blocks
        out_specs=vmem,
    )(x2d, pos2d, weights, vectors)


# ------------------- host-side one-time parameter packing --------------------
def pack_params_for_kernel(params):
    """Split the fused in-projection, transpose to `h @ W` layout, fold the
    1/sqrt(head_dim) scaling into Wq/bq, and pack each layer lane-dense as a
    (D, 4*D) weight slab plus one (4*D,) bias row.  Done once at init."""
    scaling = HEAD_DIM ** -0.5
    w_in, b_in = params["w_in"], params["b_in"]           # (NL, 3D, D), (NL, 3D)
    w_out, b_out = params["w_out"], params["b_out"]       # (NL, D, D),  (NL, D)

    w_slabs, rows = [], []
    for l in range(NUM_LAYERS):
        w_slabs.append(jnp.concatenate(
            [w_in[l, 0 * D:1 * D, :].T * scaling,         # Wq^T * scale
             w_in[l, 1 * D:2 * D, :].T,                   # Wk^T
             w_in[l, 2 * D:3 * D, :].T,                   # Wv^T
             w_out[l].T], axis=1))                        # Wout^T  -> (D, 4D)
        rows.append(jnp.concatenate(
            [b_in[l, 0 * D:1 * D] * scaling,
             b_in[l, 1 * D:2 * D],
             b_in[l, 2 * D:3 * D],
             b_out[l]], axis=0))                          # (4D,)
    rows.append(jnp.concatenate(
        [params["ln_gamma"], params["ln_beta"],
         jnp.zeros((2 * D,), jnp.float32)], axis=0))
    weights = jnp.stack(w_slabs, axis=0).astype(jnp.float32)   # (NL, D, 4D)
    vectors = jnp.stack(rows, axis=0).astype(jnp.float32)      # (NL+1, 4D)
    return weights, vectors


def sinusoidal_table(num_embeddings, dim, padding_idx=0):
    """fairseq/MulT SinusoidalPositionalEmbedding.get_embedding."""
    half = dim // 2
    freq = np.exp(np.arange(half, dtype=np.float32)
                  * -(math.log(10000.0) / (half - 1)))
    pos = np.arange(num_embeddings, dtype=np.float32)[:, None] * freq[None, :]
    emb = np.concatenate([np.sin(pos), np.cos(pos)], axis=1)
    if dim % 2 == 1:
        emb = np.concatenate([emb, np.zeros((num_embeddings, 1), np.float32)],
                             axis=1)
    emb[padding_idx] = 0.0
    return jnp.asarray(emb, jnp.float32)


def build_pos_slab(batch_size):
    """Static (B*L, D) positional rows (table row 1+batch_index for every
    timestep, per the literal reference behaviour); the padding gate
    (feature-0 == 0 -> zero embedding) is applied in-kernel."""
    # TODO(synk): if MMSA's SinusoidalPositionalEmbedding numbers positions
    # along the time dimension instead, switch to 1 + arange(T) per row.
    table = sinusoidal_table(batch_size + 2, D)
    rows = table[1 + jnp.arange(batch_size)]               # (B, D)
    pos = jnp.broadcast_to(rows[:, None, :], (batch_size, L, D))
    return pos.reshape(batch_size * L, D).astype(jnp.float32)


def init_params(key):
    """Parameters in the PyTorch nn.MultiheadAttention convention."""
    k0, k1, k2, k3 = jax.random.split(key, 4)
    scale = 1.0 / math.sqrt(D)
    return {
        "w_in":  jax.random.normal(k0, (NUM_LAYERS, 3 * D, D), jnp.float32) * scale,
        "b_in":  jax.random.normal(k1, (NUM_LAYERS, 3 * D), jnp.float32) * 0.02,
        "w_out": jax.random.normal(k2, (NUM_LAYERS, D, D), jnp.float32) * scale,
        "b_out": jax.random.normal(k3, (NUM_LAYERS, D), jnp.float32) * 0.02,
        "ln_gamma": jnp.ones((D,), jnp.float32),
        "ln_beta":  jnp.zeros((D,), jnp.float32),
    }


# --------------------------------- JAX glue ----------------------------------
@functools.partial(jax.jit, static_argnums=(1,))
def _jitted_forward(seqs, intra_split, pos_slab, weights, vectors):
    nodes = jnp.concatenate(seqs, axis=1)                  # (B, L, D) raw
    b_, l_, d_ = nodes.shape
    out2d = _run_intra_graph_kernel(nodes.reshape(b_ * l_, d_),
                                    pos_slab, weights, vectors)
    output = out2d.reshape(b_, l_, d_)
    split_points = list(np.cumsum(intra_split)[:-1])
    return output, tuple(jnp.split(output, split_points, axis=1))


def intra_graph_forward(intra_cat_seq, intra_split, packed):
    pos_slab, weights, vectors = packed
    output, split_output = _jitted_forward(tuple(intra_cat_seq),
                                           tuple(int(s) for s in intra_split),
                                           pos_slab, weights, vectors)
    return {"output_tensor": output, "split_output": list(split_output)}


# ----------------------------------- main ------------------------------------
if __name__ == "__main__":
    key = jax.random.PRNGKey(0)
    k_seq, k_param = jax.random.split(key)
    seq_keys = jax.random.split(k_seq, len(SEQ_LENS))
    intra_cat_seq = [
        jax.random.normal(k, (B, t, D), jnp.float32)
        for k, t in zip(seq_keys, SEQ_LENS)
    ]
    params = init_params(k_param)

    # one-time host-side packing, hoisted out of the per-call path
    weights, vectors = pack_params_for_kernel(params)
    pos_slab = build_pos_slab(B)
    packed = (pos_slab, weights, vectors)

    result = intra_graph_forward(intra_cat_seq, list(SEQ_LENS), packed)
    jax.block_until_ready(result["output_tensor"])
    assert result["output_tensor"].shape == (B, L, D)
    assert [s.shape[1] for s in result["split_output"]] == list(SEQ_LENS)
    print("KERNEL_OK")
</pallas_src>

<mosaic_0001>
module attributes {stable_mosaic.version = 11 : i64} {
  func.func @_intra_graph_kernel(%arg0: memref<32x32xf32, #tpu.memory_space<vmem>>, %arg1: memref<32x32xf32, #tpu.memory_space<vmem>>, %arg2: memref<2x32x128xf32, #tpu.memory_space<vmem>>, %arg3: memref<3x128xf32, #tpu.memory_space<vmem>>, %arg4: memref<32x32xf32, #tpu.memory_space<vmem>>) attributes {dimension_semantics = [], scalar_prefetch = 0 : i64, scratch_operands = 0 : i64, tpu.core_type = #tpu.core_type<tc>} {
    %c0 = arith.constant 0 : index
    %c0_0 = arith.constant 0 : index
    %0 = vector.load %arg0[%c0, %c0_0] : memref<32x32xf32, #tpu.memory_space<vmem>>, vector<32x32xf32>
    %c0_1 = arith.constant 0 : index
    %c0_2 = arith.constant 0 : index
    %1 = vector.load %arg1[%c0_1, %c0_2] : memref<32x32xf32, #tpu.memory_space<vmem>>, vector<32x32xf32>
    %2 = vector.extract_strided_slice %0 {offsets = [0, 0], sizes = [32, 1], strides = [1, 1]} : vector<32x32xf32> to vector<32x1xf32>
    %cst = arith.constant 0.000000e+00 : f32
    %3 = vector.broadcast %cst : f32 to vector<32x1xf32>
    %4 = arith.cmpf one, %2, %3 : vector<32x1xf32>
    %5 = arith.extui %4 : vector<32x1xi1> to vector<32x1xi32>
    %6 = arith.sitofp %5 : vector<32x1xi32> to vector<32x1xf32>
    %7 = vector.broadcast %6 : vector<32x1xf32> to vector<32x32xf32>
    %8 = arith.mulf %1, %7 : vector<32x32xf32>
    %cst_3 = arith.constant 5.65685415 : f32
    %9 = vector.broadcast %cst_3 : f32 to vector<32x32xf32>
    %10 = arith.mulf %9, %0 : vector<32x32xf32>
    %11 = arith.addf %10, %8 : vector<32x32xf32>
    %12 = tpu.iota {dimensions = array<i32: 0>} : vector<32x32xi32>
    %13 = tpu.iota {dimensions = array<i32: 1>} : vector<32x32xi32>
    %c0_i32 = arith.constant 0 : i32
    %14 = vector.broadcast %c0_i32 : i32 to vector<32x32xi32>
    %c0_i32_4 = arith.constant 0 : i32
    %15 = vector.broadcast %c0_i32_4 : i32 to vector<32x32xi32>
    %c4_i32 = arith.constant 4 : i32
    %16 = vector.broadcast %c4_i32 : i32 to vector<32x32xi32>
    %17 = arith.cmpi sge, %12, %16 : vector<32x32xi32>
    %18 = arith.extui %17 : vector<32x32xi1> to vector<32x32xi32>
    %19 = arith.addi %14, %18 : vector<32x32xi32>
    %c4_i32_5 = arith.constant 4 : i32
    %20 = vector.broadcast %c4_i32_5 : i32 to vector<32x32xi32>
    %21 = arith.cmpi sge, %13, %20 : vector<32x32xi32>
    %22 = arith.extui %21 : vector<32x32xi1> to vector<32x32xi32>
    %23 = arith.addi %15, %22 : vector<32x32xi32>
    %c10_i32 = arith.constant 10 : i32
    %24 = vector.broadcast %c10_i32 : i32 to vector<32x32xi32>
    %25 = arith.cmpi sge, %12, %24 : vector<32x32xi32>
    %26 = arith.extui %25 : vector<32x32xi1> to vector<32x32xi32>
    %27 = arith.addi %19, %26 : vector<32x32xi32>
    %c10_i32_6 = arith.constant 10 : i32
    %28 = vector.broadcast %c10_i32_6 : i32 to vector<32x32xi32>
    %29 = arith.cmpi sge, %13, %28 : vector<32x32xi32>
    %30 = arith.extui %29 : vector<32x32xi1> to vector<32x32xi32>
    %31 = arith.addi %23, %30 : vector<32x32xi32>
    %c16_i32 = arith.constant 16 : i32
    %32 = vector.broadcast %c16_i32 : i32 to vector<32x32xi32>
    %33 = arith.cmpi sge, %12, %32 : vector<32x32xi32>
    %34 = arith.extui %33 : vector<32x32xi1> to vector<32x32xi32>
    %35 = arith.addi %27, %34 : vector<32x32xi32>
    %c16_i32_7 = arith.constant 16 : i32
    %36 = vector.broadcast %c16_i32_7 : i32 to vector<32x32xi32>
    %37 = arith.cmpi sge, %13, %36 : vector<32x32xi32>
    %38 = arith.extui %37 : vector<32x32xi1> to vector<32x32xi32>
    %39 = arith.addi %31, %38 : vector<32x32xi32>
    %c20_i32 = arith.constant 20 : i32
    %40 = vector.broadcast %c20_i32 : i32 to vector<32x32xi32>
    %41 = arith.cmpi sge, %12, %40 : vector<32x32xi32>
    %42 = arith.extui %41 : vector<32x32xi1> to vector<32x32xi32>
    %43 = arith.addi %35, %42 : vector<32x32xi32>
    %c20_i32_8 = arith.constant 20 : i32
    %44 = vector.broadcast %c20_i32_8 : i32 to vector<32x32xi32>
    %45 = arith.cmpi sge, %13, %44 : vector<32x32xi32>
    %46 = arith.extui %45 : vector<32x32xi1> to vector<32x32xi32>
    %47 = arith.addi %39, %46 : vector<32x32xi32>
    %c26_i32 = arith.constant 26 : i32
    %48 = vector.broadcast %c26_i32 : i32 to vector<32x32xi32>
    %49 = arith.cmpi sge, %12, %48 : vector<32x32xi32>
    %50 = arith.extui %49 : vector<32x32xi1> to vector<32x32xi32>
    %51 = arith.addi %43, %50 : vector<32x32xi32>
    %c26_i32_9 = arith.constant 26 : i32
    %52 = vector.broadcast %c26_i32_9 : i32 to vector<32x32xi32>
    %53 = arith.cmpi sge, %13, %52 : vector<32x32xi32>
    %54 = arith.extui %53 : vector<32x32xi1> to vector<32x32xi32>
    %55 = arith.addi %47, %54 : vector<32x32xi32>
    %56 = arith.cmpi eq, %51, %55 : vector<32x32xi32>
    %cst_10 = arith.constant 0.000000e+00 : f32
    %cst_11 = arith.constant -1.000000e+10 : f32
    %57 = vector.broadcast %cst_10 : f32 to vector<32x32xf32>
    %58 = vector.broadcast %cst_11 : f32 to vector<32x32xf32>
    %59 = arith.select %56, %57, %58 : vector<32x32xi1>, vector<32x32xf32>
    %c0_12 = arith.constant 0 : index
    %c0_13 = arith.constant 0 : index
    %c0_14 = arith.constant 0 : index
    %60 = vector.load %arg2[%c0_12, %c0_13, %c0_14] : memref<2x32x128xf32, #tpu.memory_space<vmem>>, vector<1x32x128xf32>
    %61 = vector.shape_cast %60 : vector<1x32x128xf32> to vector<32x128xf32>
    %c0_15 = arith.constant 0 : index
    %c0_16 = arith.constant 0 : index
    %62 = vector.load %arg3[%c0_15, %c0_16] : memref<3x128xf32, #tpu.memory_space<vmem>>, vector<1x128xf32>
    %cst_17 = arith.constant dense<0.000000e+00> : vector<32x128xf32>
    %63 = tpu.matmul %11, %61, %cst_17 {dimension_numbers = #tpu.dot_dimension_numbers<[1], [0], [0], [1], [0, 0, 1, 1], [], []>} : vector<32x32xf32>, vector<32x128xf32>, vector<32x128xf32> -> vector<32x128xf32>
    %64 = vector.broadcast %62 : vector<1x128xf32> to vector<32x128xf32>
    %65 = arith.addf %63, %64 : vector<32x128xf32>
    %66 = vector.extract_strided_slice %65 {offsets = [0, 0], sizes = [32, 32], strides = [1, 1]} : vector<32x128xf32> to vector<32x32xf32>
    %67 = vector.extract_strided_slice %65 {offsets = [0, 32], sizes = [32, 32], strides = [1, 1]} : vector<32x128xf32> to vector<32x32xf32>
    %68 = vector.extract_strided_slice %65 {offsets = [0, 64], sizes = [32, 32], strides = [1, 1]} : vector<32x128xf32> to vector<32x32xf32>
    %69 = vector.extract_strided_slice %61 {offsets = [0, 96], sizes = [32, 32], strides = [1, 1]} : vector<32x128xf32> to vector<32x32xf32>
    %70 = vector.extract_strided_slice %62 {offsets = [0, 96], sizes = [1, 32], strides = [1, 1]} : vector<1x128xf32> to vector<1x32xf32>
    %71 = vector.extract_strided_slice %66 {offsets = [0, 0], sizes = [32, 8], strides = [1, 1]} : vector<32x32xf32> to vector<32x8xf32>
    %72 = vector.extract_strided_slice %67 {offsets = [0, 0], sizes = [32, 8], strides = [1, 1]} : vector<32x32xf32> to vector<32x8xf32>
    %cst_18 = arith.constant dense<0.000000e+00> : vector<32x32xf32>
    %73 = tpu.matmul %71, %72, %cst_18 {dimension_numbers = #tpu.dot_dimension_numbers<[1], [1], [0], [0], [0, 0, 1, 0], [], []>} : vector<32x8xf32>, vector<32x8xf32>, vector<32x32xf32> -> vector<32x32xf32>
    %74 = arith.addf %73, %59 : vector<32x32xf32>
    %cst_19 = arith.constant dense<0xFF800000> : vector<32xf32>
    %75 = vector.multi_reduction <maximumf>, %74, %cst_19 [1] : vector<32x32xf32> to vector<32xf32>
    %76 = vector.shape_cast %75 : vector<32xf32> to vector<32x1xf32>
    %77 = vector.broadcast %76 : vector<32x1xf32> to vector<32x32xf32>
    %78 = arith.subf %74, %77 : vector<32x32xf32>
    %79 = math.exp %78 : vector<32x32xf32>
    %cst_20 = arith.constant dense<0.000000e+00> : vector<32xf32>
    %80 = vector.multi_reduction <add>, %79, %cst_20 [1] : vector<32x32xf32> to vector<32xf32>
    %81 = vector.shape_cast %80 : vector<32xf32> to vector<32x1xf32>
    %82 = tpu.reciprocal %81 {approx = true} : vector<32x1xf32> -> vector<32x1xf32>
    %83 = vector.broadcast %82 : vector<32x1xf32> to vector<32x32xf32>
    %84 = arith.mulf %79, %83 : vector<32x32xf32>
    %85 = vector.extract_strided_slice %68 {offsets = [0, 0], sizes = [32, 8], strides = [1, 1]} : vector<32x32xf32> to vector<32x8xf32>
    %cst_21 = arith.constant dense<0.000000e+00> : vector<32x8xf32>
    %86 = tpu.matmul %84, %85, %cst_21 {dimension_numbers = #tpu.dot_dimension_numbers<[1], [0], [0], [1], [0, 0, 1, 1], [], []>} : vector<32x32xf32>, vector<32x8xf32>, vector<32x8xf32> -> vector<32x8xf32>
    %87 = vector.extract_strided_slice %66 {offsets = [0, 8], sizes = [32, 8], strides = [1, 1]} : vector<32x32xf32> to vector<32x8xf32>
    %88 = vector.extract_strided_slice %67 {offsets = [0, 8], sizes = [32, 8], strides = [1, 1]} : vector<32x32xf32> to vector<32x8xf32>
    %cst_22 = arith.constant dense<0.000000e+00> : vector<32x32xf32>
    %89 = tpu.matmul %87, %88, %cst_22 {dimension_numbers = #tpu.dot_dimension_numbers<[1], [1], [0], [0], [0, 0, 1, 0], [], []>} : vector<32x8xf32>, vector<32x8xf32>, vector<32x32xf32> -> vector<32x32xf32>
    %90 = arith.addf %89, %59 : vector<32x32xf32>
    %cst_23 = arith.constant dense<0xFF800000> : vector<32xf32>
    %91 = vector.multi_reduction <maximumf>, %90, %cst_23 [1] : vector<32x32xf32> to vector<32xf32>
    %92 = vector.shape_cast %91 : vector<32xf32> to vector<32x1xf32>
    %93 = vector.broadcast %92 : vector<32x1xf32> to vector<32x32xf32>
    %94 = arith.subf %90, %93 : vector<32x32xf32>
    %95 = math.exp %94 : vector<32x32xf32>
    %cst_24 = arith.constant dense<0.000000e+00> : vector<32xf32>
    %96 = vector.multi_reduction <add>, %95, %cst_24 [1] : vector<32x32xf32> to vector<32xf32>
    %97 = vector.shape_cast %96 : vector<32xf32> to vector<32x1xf32>
    %98 = tpu.reciprocal %97 {approx = true} : vector<32x1xf32> -> vector<32x1xf32>
    %99 = vector.broadcast %98 : vector<32x1xf32> to vector<32x32xf32>
    %100 = arith.mulf %95, %99 : vector<32x32xf32>
    %101 = vector.extract_strided_slice %68 {offsets = [0, 8], sizes = [32, 8], strides = [1, 1]} : vector<32x32xf32> to vector<32x8xf32>
    %cst_25 = arith.constant dense<0.000000e+00> : vector<32x8xf32>
    %102 = tpu.matmul %100, %101, %cst_25 {dimension_numbers = #tpu.dot_dimension_numbers<[1], [0], [0], [1], [0, 0, 1, 1], [], []>} : vector<32x32xf32>, vector<32x8xf32>, vector<32x8xf32> -> vector<32x8xf32>
    %103 = vector.extract_strided_slice %66 {offsets = [0, 16], sizes = [32, 8], strides = [1, 1]} : vector<32x32xf32> to vector<32x8xf32>
    %104 = vector.extract_strided_slice %67 {offsets = [0, 16], sizes = [32, 8], strides = [1, 1]} : vector<32x32xf32> to vector<32x8xf32>
    %cst_26 = arith.constant dense<0.000000e+00> : vector<32x32xf32>
    %105 = tpu.matmul %103, %104, %cst_26 {dimension_numbers = #tpu.dot_dimension_numbers<[1], [1], [0], [0], [0, 0, 1, 0], [], []>} : vector<32x8xf32>, vector<32x8xf32>, vector<32x32xf32> -> vector<32x32xf32>
    %106 = arith.addf %105, %59 : vector<32x32xf32>
    %cst_27 = arith.constant dense<0xFF800000> : vector<32xf32>
    %107 = vector.multi_reduction <maximumf>, %106, %cst_27 [1] : vector<32x32xf32> to vector<32xf32>
    %108 = vector.shape_cast %107 : vector<32xf32> to vector<32x1xf32>
    %109 = vector.broadcast %108 : vector<32x1xf32> to vector<32x32xf32>
    %110 = arith.subf %106, %109 : vector<32x32xf32>
    %111 = math.exp %110 : vector<32x32xf32>
    %cst_28 = arith.constant dense<0.000000e+00> : vector<32xf32>
    %112 = vector.multi_reduction <add>, %111, %cst_28 [1] : vector<32x32xf32> to vector<32xf32>
    %113 = vector.shape_cast %112 : vector<32xf32> to vector<32x1xf32>
    %114 = tpu.reciprocal %113 {approx = true} : vector<32x1xf32> -> vector<32x1xf32>
    %115 = vector.broadcast %114 : vector<32x1xf32> to vector<32x32xf32>
    %116 = arith.mulf %111, %115 : vector<32x32xf32>
    %117 = vector.extract_strided_slice %68 {offsets = [0, 16], sizes = [32, 8], strides = [1, 1]} : vector<32x32xf32> to vector<32x8xf32>
    %cst_29 = arith.constant dense<0.000000e+00> : vector<32x8xf32>
    %118 = tpu.matmul %116, %117, %cst_29 {dimension_numbers = #tpu.dot_dimension_numbers<[1], [0], [0], [1], [0, 0, 1, 1], [], []>} : vector<32x32xf32>, vector<32x8xf32>, vector<32x8xf32> -> vector<32x8xf32>
    %119 = vector.extract_strided_slice %66 {offsets = [0, 24], sizes = [32, 8], strides = [1, 1]} : vector<32x32xf32> to vector<32x8xf32>
    %120 = vector.extract_strided_slice %67 {offsets = [0, 24], sizes = [32, 8], strides = [1, 1]} : vector<32x32xf32> to vector<32x8xf32>
    %cst_30 = arith.constant dense<0.000000e+00> : vector<32x32xf32>
    %121 = tpu.matmul %119, %120, %cst_30 {dimension_numbers = #tpu.dot_dimension_numbers<[1], [1], [0], [0], [0, 0, 1, 0], [], []>} : vector<32x8xf32>, vector<32x8xf32>, vector<32x32xf32> -> vector<32x32xf32>
    %122 = arith.addf %121, %59 : vector<32x32xf32>
    %cst_31 = arith.constant dense<0xFF800000> : vector<32xf32>
    %123 = vector.multi_reduction <maximumf>, %122, %cst_31 [1] : vector<32x32xf32> to vector<32xf32>
    %124 = vector.shape_cast %123 : vector<32xf32> to vector<32x1xf32>
    %125 = vector.broadcast %124 : vector<32x1xf32> to vector<32x32xf32>
    %126 = arith.subf %122, %125 : vector<32x32xf32>
    %127 = math.exp %126 : vector<32x32xf32>
    %cst_32 = arith.constant dense<0.000000e+00> : vector<32xf32>
    %128 = vector.multi_reduction <add>, %127, %cst_32 [1] : vector<32x32xf32> to vector<32xf32>
    %129 = vector.shape_cast %128 : vector<32xf32> to vector<32x1xf32>
    %130 = tpu.reciprocal %129 {approx = true} : vector<32x1xf32> -> vector<32x1xf32>
    %131 = vector.broadcast %130 : vector<32x1xf32> to vector<32x32xf32>
    %132 = arith.mulf %127, %131 : vector<32x32xf32>
    %133 = vector.extract_strided_slice %68 {offsets = [0, 24], sizes = [32, 8], strides = [1, 1]} : vector<32x32xf32> to vector<32x8xf32>
    %cst_33 = arith.constant dense<0.000000e+00> : vector<32x8xf32>
    %134 = tpu.matmul %132, %133, %cst_33 {dimension_numbers = #tpu.dot_dimension_numbers<[1], [0], [0], [1], [0, 0, 1, 1], [], []>} : vector<32x32xf32>, vector<32x8xf32>, vector<32x8xf32> -> vector<32x8xf32>
    %135 = tpu.concatenate %86, %102, %118, %134 in 1 : vector<32x8xf32>, vector<32x8xf32>, vector<32x8xf32>, vector<32x8xf32> -> vector<32x32xf32>
    %cst_34 = arith.constant dense<0.000000e+00> : vector<32x32xf32>
    %136 = tpu.matmul %135, %69, %cst_34 {dimension_numbers = #tpu.dot_dimension_numbers<[1], [0], [0], [1], [0, 0, 1, 1], [], []>} : vector<32x32xf32>, vector<32x32xf32>, vector<32x32xf32> -> vector<32x32xf32>
    %137 = vector.broadcast %70 : vector<1x32xf32> to vector<32x32xf32>
    %138 = arith.addf %136, %137 : vector<32x32xf32>
    %c1 = arith.constant 1 : index
    %c0_35 = arith.constant 0 : index
    %c0_36 = arith.constant 0 : index
    %139 = vector.load %arg2[%c1, %c0_35, %c0_36] : memref<2x32x128xf32, #tpu.memory_space<vmem>>, vector<1x32x128xf32>
    %140 = vector.shape_cast %139 : vector<1x32x128xf32> to vector<32x128xf32>
    %c1_37 = arith.constant 1 : index
    %c0_38 = arith.constant 0 : index
    %141 = vector.load %arg3[%c1_37, %c0_38] : memref<3x128xf32, #tpu.memory_space<vmem>>, vector<1x128xf32>
    %cst_39 = arith.constant dense<0.000000e+00> : vector<32x128xf32>
    %142 = tpu.matmul %138, %140, %cst_39 {dimension_numbers = #tpu.dot_dimension_numbers<[1], [0], [0], [1], [0, 0, 1, 1], [], []>} : vector<32x32xf32>, vector<32x128xf32>, vector<32x128xf32> -> vector<32x128xf32>
    %143 = vector.broadcast %141 : vector<1x128xf32> to vector<32x128xf32>
    %144 = arith.addf %142, %143 : vector<32x128xf32>
    %145 = vector.extract_strided_slice %144 {offsets = [0, 0], sizes = [32, 32], strides = [1, 1]} : vector<32x128xf32> to vector<32x32xf32>
    %146 = vector.extract_strided_slice %144 {offsets = [0, 32], sizes = [32, 32], strides = [1, 1]} : vector<32x128xf32> to vector<32x32xf32>
    %147 = vector.extract_strided_slice %144 {offsets = [0, 64], sizes = [32, 32], strides = [1, 1]} : vector<32x128xf32> to vector<32x32xf32>
    %148 = vector.extract_strided_slice %140 {offsets = [0, 96], sizes = [32, 32], strides = [1, 1]} : vector<32x128xf32> to vector<32x32xf32>
    %149 = vector.extract_strided_slice %141 {offsets = [0, 96], sizes = [1, 32], strides = [1, 1]} : vector<1x128xf32> to vector<1x32xf32>
    %150 = vector.extract_strided_slice %145 {offsets = [0, 0], sizes = [32, 8], strides = [1, 1]} : vector<32x32xf32> to vector<32x8xf32>
    %151 = vector.extract_strided_slice %146 {offsets = [0, 0], sizes = [32, 8], strides = [1, 1]} : vector<32x32xf32> to vector<32x8xf32>
    %cst_40 = arith.constant dense<0.000000e+00> : vector<32x32xf32>
    %152 = tpu.matmul %150, %151, %cst_40 {dimension_numbers = #tpu.dot_dimension_numbers<[1], [1], [0], [0], [0, 0, 1, 0], [], []>} : vector<32x8xf32>, vector<32x8xf32>, vector<32x32xf32> -> vector<32x32xf32>
    %153 = arith.addf %152, %59 : vector<32x32xf32>
    %cst_41 = arith.constant dense<0xFF800000> : vector<32xf32>
    %154 = vector.multi_reduction <maximumf>, %153, %cst_41 [1] : vector<32x32xf32> to vector<32xf32>
    %155 = vector.shape_cast %154 : vector<32xf32> to vector<32x1xf32>
    %156 = vector.broadcast %155 : vector<32x1xf32> to vector<32x32xf32>
    %157 = arith.subf %153, %156 : vector<32x32xf32>
    %158 = math.exp %157 : vector<32x32xf32>
    %cst_42 = arith.constant dense<0.000000e+00> : vector<32xf32>
    %159 = vector.multi_reduction <add>, %158, %cst_42 [1] : vector<32x32xf32> to vector<32xf32>
    %160 = vector.shape_cast %159 : vector<32xf32> to vector<32x1xf32>
    %161 = tpu.reciprocal %160 {approx = true} : vector<32x1xf32> -> vector<32x1xf32>
    %162 = vector.broadcast %161 : vector<32x1xf32> to vector<32x32xf32>
    %163 = arith.mulf %158, %162 : vector<32x32xf32>
    %164 = vector.extract_strided_slice %147 {offsets = [0, 0], sizes = [32, 8], strides = [1, 1]} : vector<32x32xf32> to vector<32x8xf32>
    %cst_43 = arith.constant dense<0.000000e+00> : vector<32x8xf32>
    %165 = tpu.matmul %163, %164, %cst_43 {dimension_numbers = #tpu.dot_dimension_numbers<[1], [0], [0], [1], [0, 0, 1, 1], [], []>} : vector<32x32xf32>, vector<32x8xf32>, vector<32x8xf32> -> vector<32x8xf32>
    %166 = vector.extract_strided_slice %145 {offsets = [0, 8], sizes = [32, 8], strides = [1, 1]} : vector<32x32xf32> to vector<32x8xf32>
    %167 = vector.extract_strided_slice %146 {offsets = [0, 8], sizes = [32, 8], strides = [1, 1]} : vector<32x32xf32> to vector<32x8xf32>
    %cst_44 = arith.constant dense<0.000000e+00> : vector<32x32xf32>
    %168 = tpu.matmul %166, %167, %cst_44 {dimension_numbers = #tpu.dot_dimension_numbers<[1], [1], [0], [0], [0, 0, 1, 0], [], []>} : vector<32x8xf32>, vector<32x8xf32>, vector<32x32xf32> -> vector<32x32xf32>
    %169 = arith.addf %168, %59 : vector<32x32xf32>
    %cst_45 = arith.constant dense<0xFF800000> : vector<32xf32>
    %170 = vector.multi_reduction <maximumf>, %169, %cst_45 [1] : vector<32x32xf32> to vector<32xf32>
    %171 = vector.shape_cast %170 : vector<32xf32> to vector<32x1xf32>
    %172 = vector.broadcast %171 : vector<32x1xf32> to vector<32x32xf32>
    %173 = arith.subf %169, %172 : vector<32x32xf32>
    %174 = math.exp %173 : vector<32x32xf32>
    %cst_46 = arith.constant dense<0.000000e+00> : vector<32xf32>
    %175 = vector.multi_reduction <add>, %174, %cst_46 [1] : vector<32x32xf32> to vector<32xf32>
    %176 = vector.shape_cast %175 : vector<32xf32> to vector<32x1xf32>
    %177 = tpu.reciprocal %176 {approx = true} : vector<32x1xf32> -> vector<32x1xf32>
    %178 = vector.broadcast %177 : vector<32x1xf32> to vector<32x32xf32>
    %179 = arith.mulf %174, %178 : vector<32x32xf32>
    %180 = vector.extract_strided_slice %147 {offsets = [0, 8], sizes = [32, 8], strides = [1, 1]} : vector<32x32xf32> to vector<32x8xf32>
    %cst_47 = arith.constant dense<0.000000e+00> : vector<32x8xf32>
    %181 = tpu.matmul %179, %180, %cst_47 {dimension_numbers = #tpu.dot_dimension_numbers<[1], [0], [0], [1], [0, 0, 1, 1], [], []>} : vector<32x32xf32>, vector<32x8xf32>, vector<32x8xf32> -> vector<32x8xf32>
    %182 = vector.extract_strided_slice %145 {offsets = [0, 16], sizes = [32, 8], strides = [1, 1]} : vector<32x32xf32> to vector<32x8xf32>
    %183 = vector.extract_strided_slice %146 {offsets = [0, 16], sizes = [32, 8], strides = [1, 1]} : vector<32x32xf32> to vector<32x8xf32>
    %cst_48 = arith.constant dense<0.000000e+00> : vector<32x32xf32>
    %184 = tpu.matmul %182, %183, %cst_48 {dimension_numbers = #tpu.dot_dimension_numbers<[1], [1], [0], [0], [0, 0, 1, 0], [], []>} : vector<32x8xf32>, vector<32x8xf32>, vector<32x32xf32> -> vector<32x32xf32>
    %185 = arith.addf %184, %59 : vector<32x32xf32>
    %cst_49 = arith.constant dense<0xFF800000> : vector<32xf32>
    %186 = vector.multi_reduction <maximumf>, %185, %cst_49 [1] : vector<32x32xf32> to vector<32xf32>
    %187 = vector.shape_cast %186 : vector<32xf32> to vector<32x1xf32>
    %188 = vector.broadcast %187 : vector<32x1xf32> to vector<32x32xf32>
    %189 = arith.subf %185, %188 : vector<32x32xf32>
    %190 = math.exp %189 : vector<32x32xf32>
    %cst_50 = arith.constant dense<0.000000e+00> : vector<32xf32>
    %191 = vector.multi_reduction <add>, %190, %cst_50 [1] : vector<32x32xf32> to vector<32xf32>
    %192 = vector.shape_cast %191 : vector<32xf32> to vector<32x1xf32>
    %193 = tpu.reciprocal %192 {approx = true} : vector<32x1xf32> -> vector<32x1xf32>
    %194 = vector.broadcast %193 : vector<32x1xf32> to vector<32x32xf32>
    %195 = arith.mulf %190, %194 : vector<32x32xf32>
    %196 = vector.extract_strided_slice %147 {offsets = [0, 16], sizes = [32, 8], strides = [1, 1]} : vector<32x32xf32> to vector<32x8xf32>
    %cst_51 = arith.constant dense<0.000000e+00> : vector<32x8xf32>
    %197 = tpu.matmul %195, %196, %cst_51 {dimension_numbers = #tpu.dot_dimension_numbers<[1], [0], [0], [1], [0, 0, 1, 1], [], []>} : vector<32x32xf32>, vector<32x8xf32>, vector<32x8xf32> -> vector<32x8xf32>
    %198 = vector.extract_strided_slice %145 {offsets = [0, 24], sizes = [32, 8], strides = [1, 1]} : vector<32x32xf32> to vector<32x8xf32>
    %199 = vector.extract_strided_slice %146 {offsets = [0, 24], sizes = [32, 8], strides = [1, 1]} : vector<32x32xf32> to vector<32x8xf32>
    %cst_52 = arith.constant dense<0.000000e+00> : vector<32x32xf32>
    %200 = tpu.matmul %198, %199, %cst_52 {dimension_numbers = #tpu.dot_dimension_numbers<[1], [1], [0], [0], [0, 0, 1, 0], [], []>} : vector<32x8xf32>, vector<32x8xf32>, vector<32x32xf32> -> vector<32x32xf32>
    %201 = arith.addf %200, %59 : vector<32x32xf32>
    %cst_53 = arith.constant dense<0xFF800000> : vector<32xf32>
    %202 = vector.multi_reduction <maximumf>, %201, %cst_53 [1] : vector<32x32xf32> to vector<32xf32>
    %203 = vector.shape_cast %202 : vector<32xf32> to vector<32x1xf32>
    %204 = vector.broadcast %203 : vector<32x1xf32> to vector<32x32xf32>
    %205 = arith.subf %201, %204 : vector<32x32xf32>
    %206 = math.exp %205 : vector<32x32xf32>
    %cst_54 = arith.constant dense<0.000000e+00> : vector<32xf32>
    %207 = vector.multi_reduction <add>, %206, %cst_54 [1] : vector<32x32xf32> to vector<32xf32>
    %208 = vector.shape_cast %207 : vector<32xf32> to vector<32x1xf32>
    %209 = tpu.reciprocal %208 {approx = true} : vector<32x1xf32> -> vector<32x1xf32>
    %210 = vector.broadcast %209 : vector<32x1xf32> to vector<32x32xf32>
    %211 = arith.mulf %206, %210 : vector<32x32xf32>
    %212 = vector.extract_strided_slice %147 {offsets = [0, 24], sizes = [32, 8], strides = [1, 1]} : vector<32x32xf32> to vector<32x8xf32>
    %cst_55 = arith.constant dense<0.000000e+00> : vector<32x8xf32>
    %213 = tpu.matmul %211, %212, %cst_55 {dimension_numbers = #tpu.dot_dimension_numbers<[1], [0], [0], [1], [0, 0, 1, 1], [], []>} : vector<32x32xf32>, vector<32x8xf32>, vector<32x8xf32> -> vector<32x8xf32>
    %214 = tpu.concatenate %165, %181, %197, %213 in 1 : vector<32x8xf32>, vector<32x8xf32>, vector<32x8xf32>, vector<32x8xf32> -> vector<32x32xf32>
    %cst_56 = arith.constant dense<0.000000e+00> : vector<32x32xf32>
    %215 = tpu.matmul %214, %148, %cst_56 {dimension_numbers = #tpu.dot_dimension_numbers<[1], [0], [0], [1], [0, 0, 1, 1], [], []>} : vector<32x32xf32>, vector<32x32xf32>, vector<32x32xf32> -> vector<32x32xf32>
    %216 = vector.broadcast %149 : vector<1x32xf32> to vector<32x32xf32>
    %217 = arith.addf %215, %216 : vector<32x32xf32>
    %c2 = arith.constant 2 : index
    %c0_57 = arith.constant 0 : index
    %218 = vector.load %arg3[%c2, %c0_57] : memref<3x128xf32, #tpu.memory_space<vmem>>, vector<1x128xf32>
    %219 = vector.extract_strided_slice %218 {offsets = [0, 0], sizes = [1, 32], strides = [1, 1]} : vector<1x128xf32> to vector<1x32xf32>
    %220 = vector.extract_strided_slice %218 {offsets = [0, 32], sizes = [1, 32], strides = [1, 1]} : vector<1x128xf32> to vector<1x32xf32>
    %cst_58 = arith.constant dense<0.000000e+00> : vector<32xf32>
    %221 = vector.multi_reduction <add>, %217, %cst_58 [1] : vector<32x32xf32> to vector<32xf32>
    %222 = vector.shape_cast %221 : vector<32xf32> to vector<32x1xf32>
    %cst_59 = arith.constant 3.200000e+01 : f32
    %223 = vector.broadcast %cst_59 : f32 to vector<32x1xf32>
    %224 = arith.divf %222, %223 : vector<32x1xf32>
    %225 = vector.broadcast %224 : vector<32x1xf32> to vector<32x32xf32>
    %226 = arith.subf %217, %225 : vector<32x32xf32>
    %227 = arith.mulf %226, %226 : vector<32x32xf32>
    %cst_60 = arith.constant dense<0.000000e+00> : vector<32xf32>
    %228 = vector.multi_reduction <add>, %227, %cst_60 [1] : vector<32x32xf32> to vector<32xf32>
    %229 = vector.shape_cast %228 : vector<32xf32> to vector<32x1xf32>
    %cst_61 = arith.constant 3.200000e+01 : f32
    %230 = vector.broadcast %cst_61 : f32 to vector<32x1xf32>
    %231 = arith.divf %229, %230 : vector<32x1xf32>
    %232 = vector.broadcast %224 : vector<32x1xf32> to vector<32x32xf32>
    %233 = arith.subf %217, %232 : vector<32x32xf32>
    %cst_62 = arith.constant 9.99999974E-6 : f32
    %234 = vector.broadcast %cst_62 : f32 to vector<32x1xf32>
    %235 = arith.addf %231, %234 : vector<32x1xf32>
    %236 = math.rsqrt %235 : vector<32x1xf32>
    %237 = vector.broadcast %236 : vector<32x1xf32> to vector<32x32xf32>
    %238 = arith.mulf %233, %237 : vector<32x32xf32>
    %239 = vector.broadcast %219 : vector<1x32xf32> to vector<32x32xf32>
    %240 = arith.mulf %238, %239 : vector<32x32xf32>
    %241 = vector.broadcast %220 : vector<1x32xf32> to vector<32x32xf32>
    %242 = arith.addf %240, %241 : vector<32x32xf32>
    %c0_63 = arith.constant 0 : index
    %c0_64 = arith.constant 0 : index
    %243 = vector.load %arg4[%c0_63, %c0_64] : memref<32x32xf32, #tpu.memory_space<vmem>>, vector<32x32xf32>
    tpu.vector_store %arg4[%c0_63, %c0_64], %242 {strides = array<i32>} : memref<32x32xf32, #tpu.memory_space<vmem>>, vector<32x32xf32>,
    return
  }
}

</mosaic_0001>

<llo_original>
// kernel: split.0
$region0: #{split.0}
  #allocation0 [shape = 'u32[2048]{0}', space=vmem, size = 0x2000, scoped, tag = 'scoped memory for split.0']
  #allocation1 [shape = 'u32[2048]{0}', space=vmem, size = 0x2000, scoped, tag = 'scoped memory for split.0']
  #allocation2 [shape = 'u32[2048]{0}', space=vmem, size = 0x2000, scoped, tag = 'scoped memory for split.0']
  #allocation3 [shape = 'u32[2048]{0}', space=vmem, size = 0x2000, scoped, tag = 'scoped memory for split.0']
  #allocation4 [shape = 'u32[2048]{0}', space=vmem, size = 0x2000, scoped, tag = 'scoped memory for split.0']
  #allocation7 [shape = 's32[1]{0}', space=sflag, size = 0x4, scoped, tag = 'scoped memory for split.0']
  %s0 = inlined_call_operand.vmem [shape: f32[2,16,32], index: 0, kind: input, shape index: {}]
  %s1 = inlined_call_operand.hbm [shape: f32[2,4,32], index: 1, kind: output, shape index: {}]
  $region1: #{split.0} parent=0
    #allocation5 [shape = 'u8[4096]{0}', space=vmem, size = 0x1000, scoped, tag = 'operand span for operand 1']
    #allocation6 [shape = 's32[1]{0}', space=sflag, size = 0x4, scoped, tag = 'scoped memory for split.0']
    %2 = vsyncpa [#allocation6], 0
    %v3 = vld [vmem:[%s0] sm:$0xff]
    %4 = vst [vmem:[#allocation5] sm:$0xf] %v3
    %s5 = scalar_lea.vmem %s0, 16
    %v6 = vld [vmem:[%s5] sm:$0xff]
    %s7 = scalar_lea.vmem [#allocation5], 4
    %8 = vst [vmem:[%s7] sm:$0xf] %v6
    %s10 = ssub.s32 128, 128
    %11 = vsyncadd [#allocation6], %s10
    %s12 = sshll.u32 [#allocation5], 4
    %s13 = int_to_ptr.vmem [resolvable:$true] %s12
    %18 = dma.vmem_to_hbm [thread:$0]  %s13, 128, %s1, [#allocation6], 64, 64, 4
    %19 = dma.done [#allocation6], 128
    %20 = vsyncpa [#allocation6], 1

// kernel: _jitted_forward.1
$region0: #{_jitted_forward.1}
  #allocation0 [shape = 'u32[]', space=smem, size = 0x4, offset = 0x4, fixed_abs, tag = 'smem constant byte address 0x4 - core index']
  #allocation1 [shape = 'u32[144,128]{1,0:T(1,128)}', space=vmem, size = 0x12000, scoped, tag = 'internal scratch']
  %s0 = inlined_call_operand.vmem [shape: f32[32,32], index: 0, kind: input, shape index: {}]
  %s1 = inlined_call_operand.vmem [shape: f32[32,32], index: 1, kind: input, shape index: {}]
  %s2 = inlined_call_operand.vmem [shape: f32[2,32,128], index: 2, kind: input, shape index: {}]
  %s3 = inlined_call_operand.vmem [shape: f32[3,128], index: 3, kind: input, shape index: {}]
  %s4 = inlined_call_operand.vmem [shape: f32[32,32], index: 4, kind: output, shape index: {}]
  %s5 = sld [smem:[#allocation0]]
  $region26: #{_jitted_forward.1} parent=0
    _
  %s7 = ssub.s32 1, %s5
  %s8 = scalar_select 0, %s7, %s5
  // Predicated region
  $region2: #{_jitted_forward.1} parent=0 // pred_check
    _
  $region3: #{_jitted_forward.1} parent=0 // pred_check_branch
    %10 = sbr.rel (0) target = $region5
  $region4: #{_jitted_forward.1} parent=0 // pred_region
    _
  $region5: #{_jitted_forward.1} parent=0 // pred_fallthru
    _
  // Predicated region
  $region6: #{_jitted_forward.1} parent=0 // pred_check
    _
  $region7: #{_jitted_forward.1} parent=0 // pred_check_branch
    %12 = sbr.rel (0) target = $region9
  $region8: #{_jitted_forward.1} parent=0 // pred_region
    _
  $region9: #{_jitted_forward.1} parent=0 // pred_fallthru
    _
  // Predicated region
  $region10: #{_jitted_forward.1} parent=0 // pred_check
    _
  $region11: #{_jitted_forward.1} parent=0 // pred_check_branch
    %14 = sbr.rel (0) target = $region13
  $region12: #{_jitted_forward.1} parent=0 // pred_region
    _
  $region13: #{_jitted_forward.1} parent=0 // pred_fallthru
    _
  // Predicated region
  $region14: #{_jitted_forward.1} parent=0 // pred_check
    _
  $region15: #{_jitted_forward.1} parent=0 // pred_check_branch
    %16 = sbr.rel (0) target = $region17
  $region16: #{_jitted_forward.1} parent=0 // pred_region
    _
  $region17: #{_jitted_forward.1} parent=0 // pred_fallthru
    _
  %v17 = vld [vmem:[%s0] sm:$0xff]
  %v18 = vld [vmem:[%s0 + $0x8] sm:$0xff]
  %v19 = vld [vmem:[%s0 + $0x10] sm:$0xff]
  %v20 = vld [vmem:[%s0 + $0x18] sm:$0xff]
  %v21 = vld [vmem:[%s1] sm:$0xff]
  %v22 = vld [vmem:[%s1 + $0x8] sm:$0xff]
  %v23 = vld [vmem:[%s1 + $0x10] sm:$0xff]
  %v24 = vld [vmem:[%s1 + $0x18] sm:$0xff]
  %vm25 = vcmp.ne.f32.partialorder %v17, 0.0
  %vm26 = vcmp.ne.f32.partialorder %v18, 0.0
  %vm27 = vcmp.ne.f32.partialorder %v19, 0.0
  %vm28 = vcmp.ne.f32.partialorder %v20, 0.0
  %v29 = vsel %vm25, 1, 0
  %v30 = vsel %vm26, 1, 0
  %v31 = vsel %vm27, 1, 0
  %v32 = vsel %vm28, 1, 0
  %v33 = vcvt.s32.f32 %v29
  %v34 = vcvt.s32.f32 %v30
  %v35 = vcvt.s32.f32 %v31
  %v36 = vcvt.s32.f32 %v32
  %38 = vset.pattern.permute.xlu0 0
  %39 = vperm.xlu0 %38, %v33
  %v40 = vpop.permute.xlu0 %39
  %43 = vset.pattern.permute.xlu0 0
  %44 = vperm.xlu0 %43, %v34
  %v45 = vpop.permute.xlu0 %44
  %48 = vset.pattern.permute.xlu0 0
  %49 = vperm.xlu0 %48, %v35
  %v50 = vpop.permute.xlu0 %49
  %53 = vset.pattern.permute.xlu0 0
  %54 = vperm.xlu0 %53, %v36
  %v55 = vpop.permute.xlu0 %54
  %v57 = vmul.f32 %v21, %v40
  %v58 = vmul.f32 %v22, %v45
  %v59 = vmul.f32 %v23, %v50
  %v60 = vmul.f32 %v24, %v55
  %v61 = vmul.f32 %v17, 5.656854
  %v62 = vmul.f32 %v18, 5.656854
  %v63 = vmul.f32 %v19, 5.656854
  %v64 = vmul.f32 %v20, 5.656854
  %v65 = vadd.f32 %v61, %v57
  %v66 = vadd.f32 %v62, %v58
  %v67 = vadd.f32 %v63, %v59
  %v68 = vadd.f32 %v64, %v60
  %v69 = vlaneseq
  %v70 = vshrl.u32 %v69, 7
  %v71 = vadd.s32 %v70, 8
  %v72 = vadd.s32 %v70, 16
  %v73 = vadd.s32 %v70, 24
  %v74 = vlaneseq
  %v75 = vand.u32 %v74, 127
  %vm76 = vcmp.ge.s32.totalorder %v70, 4
  %vm77 = vcmp.ge.s32.totalorder %v71, 4
  %vm78 = vcmp.ge.s32.totalorder %v72, 4
  %vm79 = vcmp.ge.s32.totalorder %v73, 4
  %v80 = vsel %vm76, 1, 0
  %v81 = vsel %vm77, 1, 0
  %v82 = vsel %vm78, 1, 0
  %v83 = vsel %vm79, 1, 0
  %vm84 = vcmp.ge.s32.totalorder %v75, 4
  %v85 = vsel %vm84, 1, 0
  %vm86 = vcmp.ge.s32.totalorder %v70, 10
  %vm87 = vcmp.ge.s32.totalorder %v71, 10
  %vm88 = vcmp.ge.s32.totalorder %v72, 10
  %vm89 = vcmp.ge.s32.totalorder %v73, 10
  %v90 = vsel %vm86, 1, 0
  %v91 = vsel %vm87, 1, 0
  %v92 = vsel %vm88, 1, 0
  %v93 = vsel %vm89, 1, 0
  %v94 = vadd.s32 %v80, %v90
  %v95 = vadd.s32 %v81, %v91
  %v96 = vadd.s32 %v82, %v92
  %v97 = vadd.s32 %v83, %v93
  %vm98 = vcmp.ge.s32.totalorder %v75, 10
  %v99 = vsel %vm98, 1, 0
  %v100 = vadd.s32 %v85, %v99
  %vm101 = vcmp.ge.s32.totalorder %v70, 16
  %vm102 = vcmp.ge.s32.totalorder %v71, 16
  %vm103 = vcmp.ge.s32.totalorder %v72, 16
  %vm104 = vcmp.ge.s32.totalorder %v73, 16
  %v105 = vsel %vm101, 1, 0
  %v106 = vsel %vm102, 1, 0
  %v107 = vsel %vm103, 1, 0
  %v108 = vsel %vm104, 1, 0
  %v109 = vadd.s32 %v94, %v105
  %v110 = vadd.s32 %v95, %v106
  %v111 = vadd.s32 %v96, %v107
  %v112 = vadd.s32 %v97, %v108
  %vm113 = vcmp.ge.s32.totalorder %v75, 16
  %v114 = vsel %vm113, 1, 0
  %v115 = vadd.s32 %v100, %v114
  %vm116 = vcmp.ge.s32.totalorder %v70, 20
  %vm117 = vcmp.ge.s32.totalorder %v71, 20
  %vm118 = vcmp.ge.s32.totalorder %v72, 20
  %vm119 = vcmp.ge.s32.totalorder %v73, 20
  %v120 = vsel %vm116, 1, 0
  %v121 = vsel %vm117, 1, 0
  %v122 = vsel %vm118, 1, 0
  %v123 = vsel %vm119, 1, 0
  %v124 = vadd.s32 %v109, %v120
  %v125 = vadd.s32 %v110, %v121
  %v126 = vadd.s32 %v111, %v122
  %v127 = vadd.s32 %v112, %v123
  %vm128 = vcmp.ge.s32.totalorder %v75, 20
  %v129 = vsel %vm128, 1, 0
  %v130 = vadd.s32 %v115, %v129
  %vm131 = vcmp.ge.s32.totalorder %v70, 26
  %vm132 = vcmp.ge.s32.totalorder %v71, 26
  %vm133 = vcmp.ge.s32.totalorder %v72, 26
  %vm134 = vcmp.ge.s32.totalorder %v73, 26
  %v135 = vsel %vm131, 1, 0
  %v136 = vsel %vm132, 1, 0
  %v137 = vsel %vm133, 1, 0
  %v138 = vsel %vm134, 1, 0
  %v139 = vadd.s32 %v124, %v135
  %v140 = vadd.s32 %v125, %v136
  %v141 = vadd.s32 %v126, %v137
  %v142 = vadd.s32 %v127, %v138
  %vm143 = vcmp.ge.s32.totalorder %v75, 26
  %v144 = vsel %vm143, 1, 0
  %v145 = vadd.s32 %v130, %v144
  %vm146 = vcmp.eq.s32.totalorder %v139, %v145
  %vm147 = vcmp.eq.s32.totalorder %v140, %v145
  %vm148 = vcmp.eq.s32.totalorder %v141, %v145
  %vm149 = vcmp.eq.s32.totalorder %v142, %v145
  %v150 = vsel %vm146, 0.0, -1e+10
  %v151 = vsel %vm147, 0.0, -1e+10
  %v152 = vsel %vm148, 0.0, -1e+10
  %v153 = vsel %vm149, 0.0, -1e+10
  %v154 = vld [vmem:[%s2] sm:$0xff]
  %v155 = vld [vmem:[%s2 + $0x8] sm:$0xff]
  %v156 = vld [vmem:[%s2 + $0x10] sm:$0xff]
  %v157 = vld [vmem:[%s2 + $0x18] sm:$0xff]
  %v158 = vld [vmem:[%s3] sm:$0x1]
  %v159 = vlaneseq
  %v160 = vshrl.u32 %v159, 7
  %v161 = vsub.s32 0, %v160
  %v162 = vrot.slane %v158, %v161
  %vm163 = vcmask 261120
  %v165 = vsel %vm163, %v65, 0
  %v168 = vsel %vm163, %v66, 0
  %v171 = vsel %vm163, %v67, 0
  %v174 = vsel %vm163, %v68, 0
  %176 = vmatprep.subr.mxu0 0.0
  %177 = vmatpush1.msra.mxu0 %v154
  %178 = vmatprep.subr.mxu0 0.0
  %179 = vmatpush1.msra.mxu0 %v155
  %180 = vmatprep.subr.mxu0 0.0
  %181 = vmatpush1.msra.mxu0 %v156
  %182 = vmatprep.subr.mxu0 0.0
  %183 = vmatpush1.msra.mxu0 %v157
  %184 = vmatprep.subr.mxu0 0.0
  %185 = vmatpush1.msra.mxu0 0.0
  %186 = vmatprep.subr.mxu0 0.0
  %187 = vmatpush1.msra.mxu0 0.0
  %188 = vmatprep.subr.mxu0 0.0
  %189 = vmatpush1.msra.mxu0 0.0
  %190 = vmatprep.subr.mxu0 0.0
  %191 = vmatpush1.msra.mxu0 0.0
  %192 = vmatprep.subr.mxu0 0.0
  %193 = vmatpush1.msra.mxu0 0.0
  %194 = vmatprep.subr.mxu0 0.0
  %195 = vmatpush1.msra.mxu0 0.0
  %196 = vmatprep.subr.mxu0 0.0
  %197 = vmatpush1.msra.mxu0 0.0
  %198 = vmatprep.subr.mxu0 0.0
  %199 = vmatpush1.msra.mxu0 0.0
  %200 = vmatprep.subr.mxu0 0.0
  %201 = vmatpush1.msra.mxu0 0.0
  %202 = vmatprep.subr.mxu0 0.0
  %203 = vmatpush1.msra.mxu0 0.0
  %204 = vmatprep.subr.mxu0 0.0
  %205 = vmatpush1.msra.mxu0 0.0
  %206 = vmatprep.subr.mxu0 0.0
  %207 = vmatpush1.msra.mxu0 0.0
  %208 = vmatprep.subr.mxu0 0.0
  %209 = vmatpush1.msra.mxu0 0.0
  %210 = vmatprep.subr.mxu0 0.0
  %211 = vmatpush1.msra.mxu0 0.0
  %212 = vmatprep.subr.mxu0 0.0
  %213 = vmatpush1.msra.mxu0 0.0
  %214 = vmatprep.subr.mxu0 0.0
  %215 = vmatpush1.msra.mxu0 0.0
  %216 = vmatprep.subr.mxu0 0.0
  %217 = vmatpush1.msra.mxu0 0.0
  %218 = vmatprep.subr.mxu0 0.0
  %219 = vmatpush1.msra.mxu0 0.0
  %220 = vmatprep.subr.mxu0 0.0
  %221 = vmatpush1.msra.mxu0 0.0
  %222 = vmatprep.subr.mxu0 0.0
  %223 = vmatpush1.msra.mxu0 0.0
  %224 = vmatprep.subr.mxu0 0.0
  %225 = vmatpush1.msra.mxu0 0.0
  %226 = vmatprep.subr.mxu0 0.0
  %227 = vmatpush1.msra.mxu0 0.0
  %228 = vmatprep.subr.mxu0 0.0
  %229 = vmatpush1.msra.mxu0 0.0
  %230 = vmatprep.subr.mxu0 0.0
  %231 = vmatpush1.msra.mxu0 0.0
  %232 = vmatprep.subr.mxu0 0.0
  %233 = vmatpush1.msra.mxu0 0.0
  %234 = vmatprep.subr.mxu0 0.0
  %235 = vmatpush1.msra.mxu0 0.0
  %236 = vmatprep.subr.mxu0 0.0
  %237 = vmatpush1.msra.mxu0 0.0
  %238 = vmatprep.subr.mxu0 0.0
  %239 = vmatpush1.msra.mxu0 0.0
  %240 = vmatprep.mubr.f32.mxu0 0.0
  %241 = vmatmul.mubr.f32.gmra.mrb[0].mxu0 %v165
  %v242 = vpop.f32.mrb[0].mxu0
  %v243 = vadd.f32 %v162, %v242
  %v244 = vpop.f32.mrb[0].mxu0
  %245 = vmatprep.mubr.f32.mxu0 0.0
  %246 = vmatmul.mubr.f32.gmra.mrb[0].mxu0 %v168
  %v247 = vpop.f32.mrb[0].mxu0
  %v248 = vadd.f32 %v162, %v247
  %v249 = vpop.f32.mrb[0].mxu0
  %250 = vmatprep.mubr.f32.mxu0 0.0
  %251 = vmatmul.mubr.f32.gmra.mrb[0].mxu0 %v171
  %v252 = vpop.f32.mrb[0].mxu0
  %v253 = vadd.f32 %v162, %v252
  %v254 = vpop.f32.mrb[0].mxu0
  %255 = vmatprep.mubr.f32.mxu0 0.0
  %256 = vmatmul.mubr.f32.gmra.mrb[0].mxu0 %v174
  %v257 = vpop.f32.mrb[0].mxu0
  %v258 = vadd.f32 %v162, %v257
  %v259 = vpop.f32.mrb[0].mxu0
  %260 = vdwg.mxu0
  %265 = vrot.lane.b32.xlu0 %v243, 96
  %v266 = vpop.permute.xlu0 %265
  %267 = vrot.lane.b32.xlu0 %v248, 96
  %v268 = vpop.permute.xlu0 %267
  %269 = vrot.lane.b32.xlu0 %v253, 96
  %v270 = vpop.permute.xlu0 %269
  %271 = vrot.lane.b32.xlu0 %v258, 96
  %v272 = vpop.permute.xlu0 %271
  %vm273 = vcmask 64512
  %v274 = vsel %vm273, %v243, 0
  %v276 = vsel %vm273, %v248, 0
  %v278 = vsel %vm273, %v253, 0
  %v280 = vsel %vm273, %v258, 0
  %v282 = vsel %vm273, %v266, 0
  %v284 = vsel %vm273, %v268, 0
  %v286 = vsel %vm273, %v270, 0
  %v288 = vsel %vm273, %v272, 0
  %290 = vmatprep.subr.mxu0 0.0
  %291 = vmatpush1.xpose.msra.mxu0 %v282
  %292 = vmatprep.subr.mxu0 0.0
  %293 = vmatpush1.xpose.msra.mxu0 %v284
  %294 = vmatprep.subr.mxu0 0.0
  %295 = vmatpush1.xpose.msra.mxu0 %v286
  %296 = vmatprep.subr.mxu0 0.0
  %297 = vmatpush1.xpose.msra.mxu0 %v288
  %298 = vmatprep.subr.mxu0 0.0
  %299 = vmatpush1.xpose.msra.mxu0 0.0
  %300 = vmatprep.subr.mxu0 0.0
  %301 = vmatpush1.xpose.msra.mxu0 0.0
  %302 = vmatprep.subr.mxu0 0.0
  %303 = vmatpush1.xpose.msra.mxu0 0.0
  %304 = vmatprep.subr.mxu0 0.0
  %305 = vmatpush1.xpose.msra.mxu0 0.0
  %306 = vmatprep.subr.mxu0 0.0
  %307 = vmatpush1.xpose.msra.mxu0 0.0
  %308 = vmatprep.subr.mxu0 0.0
  %309 = vmatpush1.xpose.msra.mxu0 0.0
  %310 = vmatprep.subr.mxu0 0.0
  %311 = vmatpush1.xpose.msra.mxu0 0.0
  %312 = vmatprep.subr.mxu0 0.0
  %313 = vmatpush1.xpose.msra.mxu0 0.0
  %314 = vmatprep.subr.mxu0 0.0
  %315 = vmatpush1.xpose.msra.mxu0 0.0
  %316 = vmatprep.subr.mxu0 0.0
  %317 = vmatpush1.xpose.msra.mxu0 0.0
  %318 = vmatprep.subr.mxu0 0.0
  %319 = vmatpush1.xpose.msra.mxu0 0.0
  %320 = vmatprep.subr.mxu0 0.0
  %321 = vmatpush1.xpose.msra.mxu0 0.0
  %322 = vmatprep.subr.mxu0 0.0
  %323 = vmatpush1.xpose.msra.mxu0 0.0
  %324 = vmatprep.subr.mxu0 0.0
  %325 = vmatpush1.xpose.msra.mxu0 0.0
  %326 = vmatprep.subr.mxu0 0.0
  %327 = vmatpush1.xpose.msra.mxu0 0.0
  %328 = vmatprep.subr.mxu0 0.0
  %329 = vmatpush1.xpose.msra.mxu0 0.0
  %330 = vmatprep.subr.mxu0 0.0
  %331 = vmatpush1.xpose.msra.mxu0 0.0
  %332 = vmatprep.subr.mxu0 0.0
  %333 = vmatpush1.xpose.msra.mxu0 0.0
  %334 = vmatprep.subr.mxu0 0.0
  %335 = vmatpush1.xpose.msra.mxu0 0.0
  %336 = vmatprep.subr.mxu0 0.0
  %337 = vmatpush1.xpose.msra.mxu0 0.0
  %338 = vmatprep.subr.mxu0 0.0
  %339 = vmatpush1.xpose.msra.mxu0 0.0
  %340 = vmatprep.subr.mxu0 0.0
  %341 = vmatpush1.xpose.msra.mxu0 0.0
  %342 = vmatprep.subr.mxu0 0.0
  %343 = vmatpush1.xpose.msra.mxu0 0.0
  %344 = vmatprep.subr.mxu0 0.0
  %345 = vmatpush1.xpose.msra.mxu0 0.0
  %346 = vmatprep.subr.mxu0 0.0
  %347 = vmatpush1.xpose.msra.mxu0 0.0
  %348 = vmatprep.subr.mxu0 0.0
  %349 = vmatpush1.xpose.msra.mxu0 0.0
  %350 = vmatprep.subr.mxu0 0.0
  %351 = vmatpush1.xpose.msra.mxu0 0.0
  %352 = vmatprep.subr.mxu0 0.0
  %353 = vmatpush1.xpose.msra.mxu0 0.0
  %354 = vmatprep.mubr.f32.mxu0 0.0
  %355 = vmatmul.mubr.f32.gmra.mrb[0].mxu0 %v274
  %v356 = vpop.f32.mrb[0].mxu0
  %v357 = vadd.f32 %v150, %v356
  %v358 = vpop.f32.mrb[0].mxu0
  %359 = vmatprep.mubr.f32.mxu0 0.0
  %360 = vmatmul.mubr.f32.gmra.mrb[0].mxu0 %v276
  %v361 = vpop.f32.mrb[0].mxu0
  %v362 = vadd.f32 %v151, %v361
  %v363 = vpop.f32.mrb[0].mxu0
  %364 = vmatprep.mubr.f32.mxu0 0.0
  %365 = vmatmul.mubr.f32.gmra.mrb[0].mxu0 %v278
  %v366 = vpop.f32.mrb[0].mxu0
  %v367 = vadd.f32 %v152, %v366
  %v368 = vpop.f32.mrb[0].mxu0
  %369 = vmatprep.mubr.f32.mxu0 0.0
  %370 = vmatmul.mubr.f32.gmra.mrb[0].mxu0 %v280
  %v371 = vpop.f32.mrb[0].mxu0
  %v372 = vadd.f32 %v153, %v371
  %v373 = vpop.f32.mrb[0].mxu0
  %374 = vdwg.mxu0
  %v375 = vsel %vm163, %v357, -inf
  %376 = vmax.xlane.f32.xlu0 %v375
  %v377 = vpop.xlane.xlu0 %376
  %v378 = vsel %vm163, %v362, -inf
  %379 = vmax.xlane.f32.xlu0 %v378
  %v380 = vpop.xlane.xlu0 %379
  %v381 = vsel %vm163, %v367, -inf
  %382 = vmax.xlane.f32.xlu0 %v381
  %v383 = vpop.xlane.xlu0 %382
  %v384 = vsel %vm163, %v372, -inf
  %385 = vmax.xlane.f32.xlu0 %v384
  %v386 = vpop.xlane.xlu0 %385
  %v387 = vsub.f32 %v357, %v377
  %v388 = vsub.f32 %v362, %v380
  %v389 = vsub.f32 %v367, %v383
  %v390 = vsub.f32 %v372, %v386
  %v391 = vmul.f32 %v387, 1.442695
  %v392 = vpow.pop %v391
  %v393 = vmul.f32 %v388, 1.442695
  %v394 = vpow.pop %v393
  %v395 = vmul.f32 %v389, 1.442695
  %v396 = vpow.pop %v395
  %v397 = vmul.f32 %v390, 1.442695
  %v398 = vpow.pop %v397
  %v399 = vsel %vm163, %v392, 0.0
  %400 = vadd.xlane.f32.xlu0 %v399
  %v401 = vpop.xlane.xlu0 %400
  %v402 = vsel %vm163, %v394, 0.0
  %403 = vadd.xlane.f32.xlu0 %v402
  %v404 = vpop.xlane.xlu0 %403
  %v405 = vsel %vm163, %v396, 0.0
  %406 = vadd.xlane.f32.xlu0 %v405
  %v407 = vpop.xlane.xlu0 %406
  %v408 = vsel %vm163, %v398, 0.0
  %409 = vadd.xlane.f32.xlu0 %v408
  %v410 = vpop.xlane.xlu0 %409
  %v411 = vrcp.pop %v401
  %v412 = vrcp.pop %v404
  %v413 = vrcp.pop %v407
  %v414 = vrcp.pop %v410
  %v415 = vmul.f32 %v392, %v411
  %v416 = vmul.f32 %v394, %v412
  %v417 = vmul.f32 %v396, %v413
  %v418 = vmul.f32 %v398, %v414
  %419 = vrot.lane.b32.xlu0 %v243, 64
  %v420 = vpop.permute.xlu0 %419
  %421 = vrot.lane.b32.xlu0 %v248, 64
  %v422 = vpop.permute.xlu0 %421
  %423 = vrot.lane.b32.xlu0 %v253, 64
  %v424 = vpop.permute.xlu0 %423
  %425 = vrot.lane.b32.xlu0 %v258, 64
  %v426 = vpop.permute.xlu0 %425
  %v432 = vsel %vm163, %v415, 0
  %v435 = vsel %vm163, %v416, 0
  %v438 = vsel %vm163, %v417, 0
  %v441 = vsel %vm163, %v418, 0
  %443 = vmatprep.subr.mxu0 0.0
  %444 = vmatpush1.msra.mxu0 %v420
  %445 = vmatprep.subr.mxu0 0.0
  %446 = vmatpush1.msra.mxu0 %v422
  %447 = vmatprep.subr.mxu0 0.0
  %448 = vmatpush1.msra.mxu0 %v424
  %449 = vmatprep.subr.mxu0 0.0
  %450 = vmatpush1.msra.mxu0 %v426
  %451 = vmatprep.subr.mxu0 0.0
  %452 = vmatpush1.msra.mxu0 0.0
  %453 = vmatprep.subr.mxu0 0.0
  %454 = vmatpush1.msra.mxu0 0.0
  %455 = vmatprep.subr.mxu0 0.0
  %456 = vmatpush1.msra.mxu0 0.0
  %457 = vmatprep.subr.mxu0 0.0
  %458 = vmatpush1.msra.mxu0 0.0
  %459 = vmatprep.subr.mxu0 0.0
  %460 = vmatpush1.msra.mxu0 0.0
  %461 = vmatprep.subr.mxu0 0.0
  %462 = vmatpush1.msra.mxu0 0.0
  %463 = vmatprep.subr.mxu0 0.0
  %464 = vmatpush1.msra.mxu0 0.0
  %465 = vmatprep.subr.mxu0 0.0
  %466 = vmatpush1.msra.mxu0 0.0
  %467 = vmatprep.subr.mxu0 0.0
  %468 = vmatpush1.msra.mxu0 0.0
  %469 = vmatprep.subr.mxu0 0.0
  %470 = vmatpush1.msra.mxu0 0.0
  %471 = vmatprep.subr.mxu0 0.0
  %472 = vmatpush1.msra.mxu0 0.0
  %473 = vmatprep.subr.mxu0 0.0
  %474 = vmatpush1.msra.mxu0 0.0
  %475 = vmatprep.subr.mxu0 0.0
  %476 = vmatpush1.msra.mxu0 0.0
  %477 = vmatprep.subr.mxu0 0.0
  %478 = vmatpush1.msra.mxu0 0.0
  %479 = vmatprep.subr.mxu0 0.0
  %480 = vmatpush1.msra.mxu0 0.0
  %481 = vmatprep.subr.mxu0 0.0
  %482 = vmatpush1.msra.mxu0 0.0
  %483 = vmatprep.subr.mxu0 0.0
  %484 = vmatpush1.msra.mxu0 0.0
  %485 = vmatprep.subr.mxu0 0.0
  %486 = vmatpush1.msra.mxu0 0.0
  %487 = vmatprep.subr.mxu0 0.0
  %488 = vmatpush1.msra.mxu0 0.0
  %489 = vmatprep.subr.mxu0 0.0
  %490 = vmatpush1.msra.mxu0 0.0
  %491 = vmatprep.subr.mxu0 0.0
  %492 = vmatpush1.msra.mxu0 0.0
  %493 = vmatprep.subr.mxu0 0.0
  %494 = vmatpush1.msra.mxu0 0.0
  %495 = vmatprep.subr.mxu0 0.0
  %496 = vmatpush1.msra.mxu0 0.0
  %497 = vmatprep.subr.mxu0 0.0
  %498 = vmatpush1.msra.mxu0 0.0
  %499 = vmatprep.subr.mxu0 0.0
  %500 = vmatpush1.msra.mxu0 0.0
  %501 = vmatprep.subr.mxu0 0.0
  %502 = vmatpush1.msra.mxu0 0.0
  %503 = vmatprep.subr.mxu0 0.0
  %504 = vmatpush1.msra.mxu0 0.0
  %505 = vmatprep.subr.mxu0 0.0
  %506 = vmatpush1.msra.mxu0 0.0
  %507 = vmatprep.mubr.f32.mxu0 0.0
  %508 = vmatmul.mubr.f32.gmra.mrb[0].mxu0 %v432
  %v509 = vpop.f32.mrb[0].mxu0
  %v510 = vadd.f32 0.0, %v509
  %v511 = vpop.f32.mrb[0].mxu0
  %512 = vmatprep.mubr.f32.mxu0 0.0
  %513 = vmatmul.mubr.f32.gmra.mrb[0].mxu0 %v435
  %v514 = vpop.f32.mrb[0].mxu0
  %v515 = vadd.f32 0.0, %v514
  %v516 = vpop.f32.mrb[0].mxu0
  %517 = vmatprep.mubr.f32.mxu0 0.0
  %518 = vmatmul.mubr.f32.gmra.mrb[0].mxu0 %v438
  %v519 = vpop.f32.mrb[0].mxu0
  %v520 = vadd.f32 0.0, %v519
  %v521 = vpop.f32.mrb[0].mxu0
  %522 = vmatprep.mubr.f32.mxu0 0.0
  %523 = vmatmul.mubr.f32.gmra.mrb[0].mxu0 %v441
  %v524 = vpop.f32.mrb[0].mxu0
  %v525 = vadd.f32 0.0, %v524
  %v526 = vpop.f32.mrb[0].mxu0
  %527 = vdwg.mxu0
  %528 = vrot.lane.b32.xlu0 %v243, 120
  %v529 = vpop.permute.xlu0 %528
  %530 = vrot.lane.b32.xlu0 %v248, 120
  %v531 = vpop.permute.xlu0 %530
  %532 = vrot.lane.b32.xlu0 %v253, 120
  %v533 = vpop.permute.xlu0 %532
  %534 = vrot.lane.b32.xlu0 %v258, 120
  %v535 = vpop.permute.xlu0 %534
  %536 = vrot.lane.b32.xlu0 %v243, 88
  %v537 = vpop.permute.xlu0 %536
  %538 = vrot.lane.b32.xlu0 %v248, 88
  %v539 = vpop.permute.xlu0 %538
  %540 = vrot.lane.b32.xlu0 %v253, 88
  %v541 = vpop.permute.xlu0 %540
  %542 = vrot.lane.b32.xlu0 %v258, 88
  %v543 = vpop.permute.xlu0 %542
  %v544 = vsel %vm273, %v529, 0
  %v546 = vsel %vm273, %v531, 0
  %v548 = vsel %vm273, %v533, 0
  %v550 = vsel %vm273, %v535, 0
  %v552 = vsel %vm273, %v537, 0
  %v554 = vsel %vm273, %v539, 0
  %v556 = vsel %vm273, %v541, 0
  %v558 = vsel %vm273, %v543, 0
  %560 = vmatprep.subr.mxu0 0.0
  %561 = vmatpush1.xpose.msra.mxu0 %v552
  %562 = vmatprep.subr.mxu0 0.0
  %563 = vmatpush1.xpose.msra.mxu0 %v554
  %564 = vmatprep.subr.mxu0 0.0
  %565 = vmatpush1.xpose.msra.mxu0 %v556
  %566 = vmatprep.subr.mxu0 0.0
  %567 = vmatpush1.xpose.msra.mxu0 %v558
  %568 = vmatprep.subr.mxu0 0.0
  %569 = vmatpush1.xpose.msra.mxu0 0.0
  %570 = vmatprep.subr.mxu0 0.0
  %571 = vmatpush1.xpose.msra.mxu0 0.0
  %572 = vmatprep.subr.mxu0 0.0
  %573 = vmatpush1.xpose.msra.mxu0 0.0
  %574 = vmatprep.subr.mxu0 0.0
  %575 = vmatpush1.xpose.msra.mxu0 0.0
  %576 = vmatprep.subr.mxu0 0.0
  %577 = vmatpush1.xpose.msra.mxu0 0.0
  %578 = vmatprep.subr.mxu0 0.0
  %579 = vmatpush1.xpose.msra.mxu0 0.0
  %580 = vmatprep.subr.mxu0 0.0
  %581 = vmatpush1.xpose.msra.mxu0 0.0
  %582 = vmatprep.subr.mxu0 0.0
  %583 = vmatpush1.xpose.msra.mxu0 0.0
  %584 = vmatprep.subr.mxu0 0.0
  %585 = vmatpush1.xpose.msra.mxu0 0.0
  %586 = vmatprep.subr.mxu0 0.0
  %587 = vmatpush1.xpose.msra.mxu0 0.0
  %588 = vmatprep.subr.mxu0 0.0
  %589 = vmatpush1.xpose.msra.mxu0 0.0
  %590 = vmatprep.subr.mxu0 0.0
  %591 = vmatpush1.xpose.msra.mxu0 0.0
  %592 = vmatprep.subr.mxu0 0.0
  %593 = vmatpush1.xpose.msra.mxu0 0.0
  %594 = vmatprep.subr.mxu0 0.0
  %595 = vmatpush1.xpose.msra.mxu0 0.0
  %596 = vmatprep.subr.mxu0 0.0
  %597 = vmatpush1.xpose.msra.mxu0 0.0
  %598 = vmatprep.subr.mxu0 0.0
  %599 = vmatpush1.xpose.msra.mxu0 0.0
  %600 = vmatprep.subr.mxu0 0.0
  %601 = vmatpush1.xpose.msra.mxu0 0.0
  %602 = vmatprep.subr.mxu0 0.0
  %603 = vmatpush1.xpose.msra.mxu0 0.0
  %604 = vmatprep.subr.mxu0 0.0
  %605 = vmatpush1.xpose.msra.mxu0 0.0
  %606 = vmatprep.subr.mxu0 0.0
  %607 = vmatpush1.xpose.msra.mxu0 0.0
  %608 = vmatprep.subr.mxu0 0.0
  %609 = vmatpush1.xpose.msra.mxu0 0.0
  %610 = vmatprep.subr.mxu0 0.0
  %611 = vmatpush1.xpose.msra.mxu0 0.0
  %612 = vmatprep.subr.mxu0 0.0
  %613 = vmatpush1.xpose.msra.mxu0 0.0
  %614 = vmatprep.subr.mxu0 0.0
  %615 = vmatpush1.xpose.msra.mxu0 0.0
  %616 = vmatprep.subr.mxu0 0.0
  %617 = vmatpush1.xpose.msra.mxu0 0.0
  %618 = vmatprep.subr.mxu0 0.0
  %619 = vmatpush1.xpose.msra.mxu0 0.0
  %620 = vmatprep.subr.mxu0 0.0
  %621 = vmatpush1.xpose.msra.mxu0 0.0
  %622 = vmatprep.subr.mxu0 0.0
  %623 = vmatpush1.xpose.msra.mxu0 0.0
  %624 = vmatprep.mubr.f32.mxu0 0.0
  %625 = vmatmul.mubr.f32.gmra.mrb[0].mxu0 %v544
  %v626 = vpop.f32.mrb[0].mxu0
  %v627 = vadd.f32 %v150, %v626
  %v628 = vpop.f32.mrb[0].mxu0
  %629 = vmatprep.mubr.f32.mxu0 0.0
  %630 = vmatmul.mubr.f32.gmra.mrb[0].mxu0 %v546
  %v631 = vpop.f32.mrb[0].mxu0
  %v632 = vadd.f32 %v151, %v631
  %v633 = vpop.f32.mrb[0].mxu0
  %634 = vmatprep.mubr.f32.mxu0 0.0
  %635 = vmatmul.mubr.f32.gmra.mrb[0].mxu0 %v548
  %v636 = vpop.f32.mrb[0].mxu0
  %v637 = vadd.f32 %v152, %v636
  %v638 = vpop.f32.mrb[0].mxu0
  %639 = vmatprep.mubr.f32.mxu0 0.0
  %640 = vmatmul.mubr.f32.gmra.mrb[0].mxu0 %v550
  %v641 = vpop.f32.mrb[0].mxu0
  %v642 = vadd.f32 %v153, %v641
  %v643 = vpop.f32.mrb[0].mxu0
  %644 = vdwg.mxu0
  %v645 = vsel %vm163, %v627, -inf
  %646 = vmax.xlane.f32.xlu0 %v645
  %v647 = vpop.xlane.xlu0 %646
  %v648 = vsel %vm163, %v632, -inf
  %649 = vmax.xlane.f32.xlu0 %v648
  %v650 = vpop.xlane.xlu0 %649
  %v651 = vsel %vm163, %v637, -inf
  %652 = vmax.xlane.f32.xlu0 %v651
  %v653 = vpop.xlane.xlu0 %652
  %v654 = vsel %vm163, %v642, -inf
  %655 = vmax.xlane.f32.xlu0 %v654
  %v656 = vpop.xlane.xlu0 %655
  %v657 = vsub.f32 %v627, %v647
  %v658 = vsub.f32 %v632, %v650
  %v659 = vsub.f32 %v637, %v653
  %v660 = vsub.f32 %v642, %v656
  %v661 = vmul.f32 %v657, 1.442695
  %v662 = vpow.pop %v661
  %v663 = vmul.f32 %v658, 1.442695
  %v664 = vpow.pop %v663
  %v665 = vmul.f32 %v659, 1.442695
  %v666 = vpow.pop %v665
  %v667 = vmul.f32 %v660, 1.442695
  %v668 = vpow.pop %v667
  %v669 = vsel %vm163, %v662, 0.0
  %670 = vadd.xlane.f32.xlu0 %v669
  %v671 = vpop.xlane.xlu0 %670
  %v672 = vsel %vm163, %v664, 0.0
  %673 = vadd.xlane.f32.xlu0 %v672
  %v674 = vpop.xlane.xlu0 %673
  %v675 = vsel %vm163, %v666, 0.0
  %676 = vadd.xlane.f32.xlu0 %v675
  %v677 = vpop.xlane.xlu0 %676
  %v678 = vsel %vm163, %v668, 0.0
  %679 = vadd.xlane.f32.xlu0 %v678
  %v680 = vpop.xlane.xlu0 %679
  %v681 = vrcp.pop %v671
  %v682 = vrcp.pop %v674
  %v683 = vrcp.pop %v677
  %v684 = vrcp.pop %v680
  %v685 = vmul.f32 %v662, %v681
  %v686 = vmul.f32 %v664, %v682
  %v687 = vmul.f32 %v666, %v683
  %v688 = vmul.f32 %v668, %v684
  %689 = vrot.lane.b32.xlu0 %v243, 56
  %v690 = vpop.permute.xlu0 %689
  %691 = vrot.lane.b32.xlu0 %v248, 56
  %v692 = vpop.permute.xlu0 %691
  %693 = vrot.lane.b32.xlu0 %v253, 56
  %v694 = vpop.permute.xlu0 %693
  %695 = vrot.lane.b32.xlu0 %v258, 56
  %v696 = vpop.permute.xlu0 %695
  %v702 = vsel %vm163, %v685, 0
  %v705 = vsel %vm163, %v686, 0
  %v708 = vsel %vm163, %v687, 0
  %v711 = vsel %vm163, %v688, 0
  %713 = vmatprep.subr.mxu0 0.0
  %714 = vmatpush1.msra.mxu0 %v690
  %715 = vmatprep.subr.mxu0 0.0
  %716 = vmatpush1.msra.mxu0 %v692
  %717 = vmatprep.subr.mxu0 0.0
  %718 = vmatpush1.msra.mxu0 %v694
  %719 = vmatprep.subr.mxu0 0.0
  %720 = vmatpush1.msra.mxu0 %v696
  %721 = vmatprep.subr.mxu0 0.0
  %722 = vmatpush1.msra.mxu0 0.0
  %723 = vmatprep.subr.mxu0 0.0
  %724 = vmatpush1.msra.mxu0 0.0
  %725 = vmatprep.subr.mxu0 0.0
  %726 = vmatpush1.msra.mxu0 0.0
  %727 = vmatprep.subr.mxu0 0.0
  %728 = vmatpush1.msra.mxu0 0.0
  %729 = vmatprep.subr.mxu0 0.0
  %730 = vmatpush1.msra.mxu0 0.0
  %731 = vmatprep.subr.mxu0 0.0
  %732 = vmatpush1.msra.mxu0 0.0
  %733 = vmatprep.subr.mxu0 0.0
  %734 = vmatpush1.msra.mxu0 0.0
  %735 = vmatprep.subr.mxu0 0.0
  %736 = vmatpush1.msra.mxu0 0.0
  %737 = vmatprep.subr.mxu0 0.0
  %738 = vmatpush1.msra.mxu0 0.0
  %739 = vmatprep.subr.mxu0 0.0
  %740 = vmatpush1.msra.mxu0 0.0
  %741 = vmatprep.subr.mxu0 0.0
  %742 = vmatpush1.msra.mxu0 0.0
  %743 = vmatprep.subr.mxu0 0.0
  %744 = vmatpush1.msra.mxu0 0.0
  %745 = vmatprep.subr.mxu0 0.0
  %746 = vmatpush1.msra.mxu0 0.0
  %747 = vmatprep.subr.mxu0 0.0
  %748 = vmatpush1.msra.mxu0 0.0
  %749 = vmatprep.subr.mxu0 0.0
  %750 = vmatpush1.msra.mxu0 0.0
  %751 = vmatprep.subr.mxu0 0.0
  %752 = vmatpush1.msra.mxu0 0.0
  %753 = vmatprep.subr.mxu0 0.0
  %754 = vmatpush1.msra.mxu0 0.0
  %755 = vmatprep.subr.mxu0 0.0
  %756 = vmatpush1.msra.mxu0 0.0
  %757 = vmatprep.subr.mxu0 0.0
  %758 = vmatpush1.msra.mxu0 0.0
  %759 = vmatprep.subr.mxu0 0.0
  %760 = vmatpush1.msra.mxu0 0.0
  %761 = vmatprep.subr.mxu0 0.0
  %762 = vmatpush1.msra.mxu0 0.0
  %763 = vmatprep.subr.mxu0 0.0
  %764 = vmatpush1.msra.mxu0 0.0
  %765 = vmatprep.subr.mxu0 0.0
  %766 = vmatpush1.msra.mxu0 0.0
  %767 = vmatprep.subr.mxu0 0.0
  %768 = vmatpush1.msra.mxu0 0.0
  %769 = vmatprep.subr.mxu0 0.0
  %770 = vmatpush1.msra.mxu0 0.0
  %771 = vmatprep.subr.mxu0 0.0
  %772 = vmatpush1.msra.mxu0 0.0
  %773 = vmatprep.subr.mxu0 0.0
  %774 = vmatpush1.msra.mxu0 0.0
  %775 = vmatprep.subr.mxu0 0.0
  %776 = vmatpush1.msra.mxu0 0.0
  %777 = vmatprep.mubr.f32.mxu0 0.0
  %778 = vmatmul.mubr.f32.gmra.mrb[0].mxu0 %v702
  %v779 = vpop.f32.mrb[0].mxu0
  %v780 = vadd.f32 0.0, %v779
  %v781 = vpop.f32.mrb[0].mxu0
  %782 = vmatprep.mubr.f32.mxu0 0.0
  %783 = vmatmul.mubr.f32.gmra.mrb[0].mxu0 %v705
  %v784 = vpop.f32.mrb[0].mxu0
  %v785 = vadd.f32 0.0, %v784
  %v786 = vpop.f32.mrb[0].mxu0
  %787 = vmatprep.mubr.f32.mxu0 0.0
  %788 = vmatmul.mubr.f32.gmra.mrb[0].mxu0 %v708
  %v789 = vpop.f32.mrb[0].mxu0
  %v790 = vadd.f32 0.0, %v789
  %v791 = vpop.f32.mrb[0].mxu0
  %792 = vmatprep.mubr.f32.mxu0 0.0
  %793 = vmatmul.mubr.f32.gmra.mrb[0].mxu0 %v711
  %v794 = vpop.f32.mrb[0].mxu0
  %v795 = vadd.f32 0.0, %v794
  %v796 = vpop.f32.mrb[0].mxu0
  %797 = vdwg.mxu0
  %798 = vrot.lane.b32.xlu0 %v243, 112
  %v799 = vpop.permute.xlu0 %798
  %800 = vrot.lane.b32.xlu0 %v248, 112
  %v801 = vpop.permute.xlu0 %800
  %802 = vrot.lane.b32.xlu0 %v253, 112
  %v803 = vpop.permute.xlu0 %802
  %804 = vrot.lane.b32.xlu0 %v258, 112
  %v805 = vpop.permute.xlu0 %804
  %806 = vrot.lane.b32.xlu0 %v243, 80
  %v807 = vpop.permute.xlu0 %806
  %808 = vrot.lane.b32.xlu0 %v248, 80
  %v809 = vpop.permute.xlu0 %808
  %810 = vrot.lane.b32.xlu0 %v253, 80
  %v811 = vpop.permute.xlu0 %810
  %812 = vrot.lane.b32.xlu0 %v258, 80
  %v813 = vpop.permute.xlu0 %812
  %v814 = vsel %vm273, %v799, 0
  %v816 = vsel %vm273, %v801, 0
  %v818 = vsel %vm273, %v803, 0
  %v820 = vsel %vm273, %v805, 0
  %v822 = vsel %vm273, %v807, 0
  %v824 = vsel %vm273, %v809, 0
  %v826 = vsel %vm273, %v811, 0
  %v828 = vsel %vm273, %v813, 0
  %830 = vmatprep.subr.mxu0 0.0
  %831 = vmatpush1.xpose.msra.mxu0 %v822
  %832 = vmatprep.subr.mxu0 0.0
  %833 = vmatpush1.xpose.msra.mxu0 %v824
  %834 = vmatprep.subr.mxu0 0.0
  %835 = vmatpush1.xpose.msra.mxu0 %v826
  %836 = vmatprep.subr.mxu0 0.0
  %837 = vmatpush1.xpose.msra.mxu0 %v828
  %838 = vmatprep.subr.mxu0 0.0
  %839 = vmatpush1.xpose.msra.mxu0 0.0
  %840 = vmatprep.subr.mxu0 0.0
  %841 = vmatpush1.xpose.msra.mxu0 0.0
  %842 = vmatprep.subr.mxu0 0.0
  %843 = vmatpush1.xpose.msra.mxu0 0.0
  %844 = vmatprep.subr.mxu0 0.0
  %845 = vmatpush1.xpose.msra.mxu0 0.0
  %846 = vmatprep.subr.mxu0 0.0
  %847 = vmatpush1.xpose.msra.mxu0 0.0
  %848 = vmatprep.subr.mxu0 0.0
  %849 = vmatpush1.xpose.msra.mxu0 0.0
  %850 = vmatprep.subr.mxu0 0.0
  %851 = vmatpush1.xpose.msra.mxu0 0.0
  %852 = vmatprep.subr.mxu0 0.0
  %853 = vmatpush1.xpose.msra.mxu0 0.0
  %854 = vmatprep.subr.mxu0 0.0
  %855 = vmatpush1.xpose.msra.mxu0 0.0
  %856 = vmatprep.subr.mxu0 0.0
  %857 = vmatpush1.xpose.msra.mxu0 0.0
  %858 = vmatprep.subr.mxu0 0.0
  %859 = vmatpush1.xpose.msra.mxu0 0.0
  %860 = vmatprep.subr.mxu0 0.0
  %861 = vmatpush1.xpose.msra.mxu0 0.0
  %862 = vmatprep.subr.mxu0 0.0
  %863 = vmatpush1.xpose.msra.mxu0 0.0
  %864 = vmatprep.subr.mxu0 0.0
  %865 = vmatpush1.xpose.msra.mxu0 0.0
  %866 = vmatprep.subr.mxu0 0.0
  %867 = vmatpush1.xpose.msra.mxu0 0.0
  %868 = vmatprep.subr.mxu0 0.0
  %869 = vmatpush1.xpose.msra.mxu0 0.0
  %870 = vmatprep.subr.mxu0 0.0
  %871 = vmatpush1.xpose.msra.mxu0 0.0
  %872 = vmatprep.subr.mxu0 0.0
  %873 = vmatpush1.xpose.msra.mxu0 0.0
  %874 = vmatprep.subr.mxu0 0.0
  %875 = vmatpush1.xpose.msra.mxu0 0.0
  %876 = vmatprep.subr.mxu0 0.0
  %877 = vmatpush1.xpose.msra.mxu0 0.0
  %878 = vmatprep.subr.mxu0 0.0
  %879 = vmatpush1.xpose.msra.mxu0 0.0
  %880 = vmatprep.subr.mxu0 0.0
  %881 = vmatpush1.xpose.msra.mxu0 0.0
  %882 = vmatprep.subr.mxu0 0.0
  %883 = vmatpush1.xpose.msra.mxu0 0.0
  %884 = vmatprep.subr.mxu0 0.0
  %885 = vmatpush1.xpose.msra.mxu0 0.0
  %886 = vmatprep.subr.mxu0 0.0
  %887 = vmatpush1.xpose.msra.mxu0 0.0
  %888 = vmatprep.subr.mxu0 0.0
  %889 = vmatpush1.xpose.msra.mxu0 0.0
  %890 = vmatprep.subr.mxu0 0.0
  %891 = vmatpush1.xpose.msra.mxu0 0.0
  %892 = vmatprep.subr.mxu0 0.0
  %893 = vmatpush1.xpose.msra.mxu0 0.0
  %894 = vmatprep.mubr.f32.mxu0 0.0
  %895 = vmatmul.mubr.f32.gmra.mrb[0].mxu0 %v814
  %v896 = vpop.f32.mrb[0].mxu0
  %v897 = vadd.f32 %v150, %v896
  %v898 = vpop.f32.mrb[0].mxu0
  %899 = vmatprep.mubr.f32.mxu0 0.0
  %900 = vmatmul.mubr.f32.gmra.mrb[0].mxu0 %v816
  %v901 = vpop.f32.mrb[0].mxu0
  %v902 = vadd.f32 %v151, %v901
  %v903 = vpop.f32.mrb[0].mxu0
  %904 = vmatprep.mubr.f32.mxu0 0.0
  %905 = vmatmul.mubr.f32.gmra.mrb[0].mxu0 %v818
  %v906 = vpop.f32.mrb[0].mxu0
  %v907 = vadd.f32 %v152, %v906
  %v908 = vpop.f32.mrb[0].mxu0
  %909 = vmatprep.mubr.f32.mxu0 0.0
  %910 = vmatmul.mubr.f32.gmra.mrb[0].mxu0 %v820
  %v911 = vpop.f32.mrb[0].mxu0
  %v912 = vadd.f32 %v153, %v911
  %v913 = vpop.f32.mrb[0].mxu0
  %914 = vdwg.mxu0
  %v915 = vsel %vm163, %v897, -inf
  %916 = vmax.xlane.f32.xlu0 %v915
  %v917 = vpop.xlane.xlu0 %916
  %v918 = vsel %vm163, %v902, -inf
  %919 = vmax.xlane.f32.xlu0 %v918
  %v920 = vpop.xlane.xlu0 %919
  %v921 = vsel %vm163, %v907, -inf
  %922 = vmax.xlane.f32.xlu0 %v921
  %v923 = vpop.xlane.xlu0 %922
  %v924 = vsel %vm163, %v912, -inf
  %925 = vmax.xlane.f32.xlu0 %v924
  %v926 = vpop.xlane.xlu0 %925
  %v927 = vsub.f32 %v897, %v917
  %v928 = vsub.f32 %v902, %v920
  %v929 = vsub.f32 %v907, %v923
  %v930 = vsub.f32 %v912, %v926
  %v931 = vmul.f32 %v927, 1.442695
  %v932 = vpow.pop %v931
  %v933 = vmul.f32 %v928, 1.442695
  %v934 = vpow.pop %v933
  %v935 = vmul.f32 %v929, 1.442695
  %v936 = vpow.pop %v935
  %v937 = vmul.f32 %v930, 1.442695
  %v938 = vpow.pop %v937
  %v939 = vsel %vm163, %v932, 0.0
  %940 = vadd.xlane.f32.xlu0 %v939
  %v941 = vpop.xlane.xlu0 %940
  %v942 = vsel %vm163, %v934, 0.0
  %943 = vadd.xlane.f32.xlu0 %v942
  %v944 = vpop.xlane.xlu0 %943
  %v945 = vsel %vm163, %v936, 0.0
  %946 = vadd.xlane.f32.xlu0 %v945
  %v947 = vpop.xlane.xlu0 %946
  %v948 = vsel %vm163, %v938, 0.0
  %949 = vadd.xlane.f32.xlu0 %v948
  %v950 = vpop.xlane.xlu0 %949
  %v951 = vrcp.pop %v941
  %v952 = vrcp.pop %v944
  %v953 = vrcp.pop %v947
  %v954 = vrcp.pop %v950
  %v955 = vmul.f32 %v932, %v951
  %v956 = vmul.f32 %v934, %v952
  %v957 = vmul.f32 %v936, %v953
  %v958 = vmul.f32 %v938, %v954
  %959 = vrot.lane.b32.xlu0 %v243, 48
  %v960 = vpop.permute.xlu0 %959
  %961 = vrot.lane.b32.xlu0 %v248, 48
  %v962 = vpop.permute.xlu0 %961
  %963 = vrot.lane.b32.xlu0 %v253, 48
  %v964 = vpop.permute.xlu0 %963
  %965 = vrot.lane.b32.xlu0 %v258, 48
  %v966 = vpop.permute.xlu0 %965
  %v972 = vsel %vm163, %v955, 0
  %v975 = vsel %vm163, %v956, 0
  %v978 = vsel %vm163, %v957, 0
  %v981 = vsel %vm163, %v958, 0
  %983 = vmatprep.subr.mxu0 0.0
  %984 = vmatpush1.msra.mxu0 %v960
  %985 = vmatprep.subr.mxu0 0.0
  %986 = vmatpush1.msra.mxu0 %v962
  %987 = vmatprep.subr.mxu0 0.0
  %988 = vmatpush1.msra.mxu0 %v964
  %989 = vmatprep.subr.mxu0 0.0
  %990 = vmatpush1.msra.mxu0 %v966
  %991 = vmatprep.subr.mxu0 0.0
  %992 = vmatpush1.msra.mxu0 0.0
  %993 = vmatprep.subr.mxu0 0.0
  %994 = vmatpush1.msra.mxu0 0.0
  %995 = vmatprep.subr.mxu0 0.0
  %996 = vmatpush1.msra.mxu0 0.0
  %997 = vmatprep.subr.mxu0 0.0
  %998 = vmatpush1.msra.mxu0 0.0
  %999 = vmatprep.subr.mxu0 0.0
  %1000 = vmatpush1.msra.mxu0 0.0
  %1001 = vmatprep.subr.mxu0 0.0
  %1002 = vmatpush1.msra.mxu0 0.0
  %1003 = vmatprep.subr.mxu0 0.0
  %1004 = vmatpush1.msra.mxu0 0.0
  %1005 = vmatprep.subr.mxu0 0.0
  %1006 = vmatpush1.msra.mxu0 0.0
  %1007 = vmatprep.subr.mxu0 0.0
  %1008 = vmatpush1.msra.mxu0 0.0
  %1009 = vmatprep.subr.mxu0 0.0
  %1010 = vmatpush1.msra.mxu0 0.0
  %1011 = vmatprep.subr.mxu0 0.0
  %1012 = vmatpush1.msra.mxu0 0.0
  %1013 = vmatprep.subr.mxu0 0.0
  %1014 = vmatpush1.msra.mxu0 0.0
  %1015 = vmatprep.subr.mxu0 0.0
  %1016 = vmatpush1.msra.mxu0 0.0
  %1017 = vmatprep.subr.mxu0 0.0
  %1018 = vmatpush1.msra.mxu0 0.0
  %1019 = vmatprep.subr.mxu0 0.0
  %1020 = vmatpush1.msra.mxu0 0.0
  %1021 = vmatprep.subr.mxu0 0.0
  %1022 = vmatpush1.msra.mxu0 0.0
  %1023 = vmatprep.subr.mxu0 0.0
  %1024 = vmatpush1.msra.mxu0 0.0
  %1025 = vmatprep.subr.mxu0 0.0
  %1026 = vmatpush1.msra.mxu0 0.0
  %1027 = vmatprep.subr.mxu0 0.0
  %1028 = vmatpush1.msra.mxu0 0.0
  %1029 = vmatprep.subr.mxu0 0.0
  %1030 = vmatpush1.msra.mxu0 0.0
  %1031 = vmatprep.subr.mxu0 0.0
  %1032 = vmatpush1.msra.mxu0 0.0
  %1033 = vmatprep.subr.mxu0 0.0
  %1034 = vmatpush1.msra.mxu0 0.0
  %1035 = vmatprep.subr.mxu0 0.0
  %1036 = vmatpush1.msra.mxu0 0.0
  %1037 = vmatprep.subr.mxu0 0.0
  %1038 = vmatpush1.msra.mxu0 0.0
  %1039 = vmatprep.subr.mxu0 0.0
  %1040 = vmatpush1.msra.mxu0 0.0
  %1041 = vmatprep.subr.mxu0 0.0
  %1042 = vmatpush1.msra.mxu0 0.0
  %1043 = vmatprep.subr.mxu0 0.0
  %1044 = vmatpush1.msra.mxu0 0.0
  %1045 = vmatprep.subr.mxu0 0.0
  %1046 = vmatpush1.msra.mxu0 0.0
  %1047 = vmatprep.mubr.f32.mxu0 0.0
  %1048 = vmatmul.mubr.f32.gmra.mrb[0].mxu0 %v972
  %v1049 = vpop.f32.mrb[0].mxu0
  %v1050 = vadd.f32 0.0, %v1049
  %v1051 = vpop.f32.mrb[0].mxu0
  %1052 = vmatprep.mubr.f32.mxu0 0.0
  %1053 = vmatmul.mubr.f32.gmra.mrb[0].mxu0 %v975
  %v1054 = vpop.f32.mrb[0].mxu0
  %v1055 = vadd.f32 0.0, %v1054
  %v1056 = vpop.f32.mrb[0].mxu0
  %1057 = vmatprep.mubr.f32.mxu0 0.0
  %1058 = vmatmul.mubr.f32.gmra.mrb[0].mxu0 %v978
  %v1059 = vpop.f32.mrb[0].mxu0
  %v1060 = vadd.f32 0.0, %v1059
  %v1061 = vpop.f32.mrb[0].mxu0
  %1062 = vmatprep.mubr.f32.mxu0 0.0
  %1063 = vmatmul.mubr.f32.gmra.mrb[0].mxu0 %v981
  %v1064 = vpop.f32.mrb[0].mxu0
  %v1065 = vadd.f32 0.0, %v1064
  %v1066 = vpop.f32.mrb[0].mxu0
  %1067 = vdwg.mxu0
  %1068 = vrot.lane.b32.xlu0 %v243, 104
  %v1069 = vpop.permute.xlu0 %1068
  %1070 = vrot.lane.b32.xlu0 %v248, 104
  %v1071 = vpop.permute.xlu0 %1070
  %1072 = vrot.lane.b32.xlu0 %v253, 104
  %v1073 = vpop.permute.xlu0 %1072
  %1074 = vrot.lane.b32.xlu0 %v258, 104
  %v1075 = vpop.permute.xlu0 %1074
  %1076 = vrot.lane.b32.xlu0 %v243, 72
  %v1077 = vpop.permute.xlu0 %1076
  %1078 = vrot.lane.b32.xlu0 %v248, 72
  %v1079 = vpop.permute.xlu0 %1078
  %1080 = vrot.lane.b32.xlu0 %v253, 72
  %v1081 = vpop.permute.xlu0 %1080
  %1082 = vrot.lane.b32.xlu0 %v258, 72
  %v1083 = vpop.permute.xlu0 %1082
  %v1084 = vsel %vm273, %v1069, 0
  %v1086 = vsel %vm273, %v1071, 0
  %v1088 = vsel %vm273, %v1073, 0
  %v1090 = vsel %vm273, %v1075, 0
  %v1092 = vsel %vm273, %v1077, 0
  %v1094 = vsel %vm273, %v1079, 0
  %v1096 = vsel %vm273, %v1081, 0
  %v1098 = vsel %vm273, %v1083, 0
  %1100 = vmatprep.subr.mxu0 0.0
  %1101 = vmatpush1.xpose.msra.mxu0 %v1092
  %1102 = vmatprep.subr.mxu0 0.0
  %1103 = vmatpush1.xpose.msra.mxu0 %v1094
  %1104 = vmatprep.subr.mxu0 0.0
  %1105 = vmatpush1.xpose.msra.mxu0 %v1096
  %1106 = vmatprep.subr.mxu0 0.0
  %1107 = vmatpush1.xpose.msra.mxu0 %v1098
  %1108 = vmatprep.subr.mxu0 0.0
  %1109 = vmatpush1.xpose.msra.mxu0 0.0
  %1110 = vmatprep.subr.mxu0 0.0
  %1111 = vmatpush1.xpose.msra.mxu0 0.0
  %1112 = vmatprep.subr.mxu0 0.0
  %1113 = vmatpush1.xpose.msra.mxu0 0.0
  %1114 = vmatprep.subr.mxu0 0.0
  %1115 = vmatpush1.xpose.msra.mxu0 0.0
  %1116 = vmatprep.subr.mxu0 0.0
  %1117 = vmatpush1.xpose.msra.mxu0 0.0
  %1118 = vmatprep.subr.mxu0 0.0
  %1119 = vmatpush1.xpose.msra.mxu0 0.0
  %1120 = vmatprep.subr.mxu0 0.0
  %1121 = vmatpush1.xpose.msra.mxu0 0.0
  %1122 = vmatprep.subr.mxu0 0.0
  %1123 = vmatpush1.xpose.msra.mxu0 0.0
  %1124 = vmatprep.subr.mxu0 0.0
  %1125 = vmatpush1.xpose.msra.mxu0 0.0
  %1126 = vmatprep.subr.mxu0 0.0
  %1127 = vmatpush1.xpose.msra.mxu0 0.0
  %1128 = vmatprep.subr.mxu0 0.0
  %1129 = vmatpush1.xpose.msra.mxu0 0.0
  %1130 = vmatprep.subr.mxu0 0.0
  %1131 = vmatpush1.xpose.msra.mxu0 0.0
  %1132 = vmatprep.subr.mxu0 0.0
  %1133 = vmatpush1.xpose.msra.mxu0 0.0
  %1134 = vmatprep.subr.mxu0 0.0
  %1135 = vmatpush1.xpose.msra.mxu0 0.0
  %1136 = vmatprep.subr.mxu0 0.0
  %1137 = vmatpush1.xpose.msra.mxu0 0.0
  %1138 = vmatprep.subr.mxu0 0.0
  %1139 = vmatpush1.xpose.msra.mxu0 0.0
  %1140 = vmatprep.subr.mxu0 0.0
  %1141 = vmatpush1.xpose.msra.mxu0 0.0
  %1142 = vmatprep.subr.mxu0 0.0
  %1143 = vmatpush1.xpose.msra.mxu0 0.0
  %1144 = vmatprep.subr.mxu0 0.0
  %1145 = vmatpush1.xpose.msra.mxu0 0.0
  %1146 = vmatprep.subr.mxu0 0.0
  %1147 = vmatpush1.xpose.msra.mxu0 0.0
  %1148 = vmatprep.subr.mxu0 0.0
  %1149 = vmatpush1.xpose.msra.mxu0 0.0
  %1150 = vmatprep.subr.mxu0 0.0
  %1151 = vmatpush1.xpose.msra.mxu0 0.0
  %1152 = vmatprep.subr.mxu0 0.0
  %1153 = vmatpush1.xpose.msra.mxu0 0.0
  %1154 = vmatprep.subr.mxu0 0.0
  %1155 = vmatpush1.xpose.msra.mxu0 0.0
  %1156 = vmatprep.subr.mxu0 0.0
  %1157 = vmatpush1.xpose.msra.mxu0 0.0
  %1158 = vmatprep.subr.mxu0 0.0
  %1159 = vmatpush1.xpose.msra.mxu0 0.0
  %1160 = vmatprep.subr.mxu0 0.0
  %1161 = vmatpush1.xpose.msra.mxu0 0.0
  %1162 = vmatprep.subr.mxu0 0.0
  %1163 = vmatpush1.xpose.msra.mxu0 0.0
  %1164 = vmatprep.mubr.f32.mxu0 0.0
  %1165 = vmatmul.mubr.f32.gmra.mrb[0].mxu0 %v1084
  %v1166 = vpop.f32.mrb[0].mxu0
  %v1167 = vadd.f32 %v150, %v1166
  %v1168 = vpop.f32.mrb[0].mxu0
  %1169 = vmatprep.mubr.f32.mxu0 0.0
  %1170 = vmatmul.mubr.f32.gmra.mrb[0].mxu0 %v1086
  %v1171 = vpop.f32.mrb[0].mxu0
  %v1172 = vadd.f32 %v151, %v1171
  %v1173 = vpop.f32.mrb[0].mxu0
  %1174 = vmatprep.mubr.f32.mxu0 0.0
  %1175 = vmatmul.mubr.f32.gmra.mrb[0].mxu0 %v1088
  %v1176 = vpop.f32.mrb[0].mxu0
  %v1177 = vadd.f32 %v152, %v1176
  %v1178 = vpop.f32.mrb[0].mxu0
  %1179 = vmatprep.mubr.f32.mxu0 0.0
  %1180 = vmatmul.mubr.f32.gmra.mrb[0].mxu0 %v1090
  %v1181 = vpop.f32.mrb[0].mxu0
  %v1182 = vadd.f32 %v153, %v1181
  %v1183 = vpop.f32.mrb[0].mxu0
  %1184 = vdwg.mxu0
  %v1185 = vsel %vm163, %v1167, -inf
  %1186 = vmax.xlane.f32.xlu0 %v1185
  %v1187 = vpop.xlane.xlu0 %1186
  %v1188 = vsel %vm163, %v1172, -inf
  %1189 = vmax.xlane.f32.xlu0 %v1188
  %v1190 = vpop.xlane.xlu0 %1189
  %v1191 = vsel %vm163, %v1177, -inf
  %1192 = vmax.xlane.f32.xlu0 %v1191
  %v1193 = vpop.xlane.xlu0 %1192
  %v1194 = vsel %vm163, %v1182, -inf
  %1195 = vmax.xlane.f32.xlu0 %v1194
  %v1196 = vpop.xlane.xlu0 %1195
  %v1197 = vsub.f32 %v1167, %v1187
  %v1198 = vsub.f32 %v1172, %v1190
  %v1199 = vsub.f32 %v1177, %v1193
  %v1200 = vsub.f32 %v1182, %v1196
  %v1201 = vmul.f32 %v1197, 1.442695
  %v1202 = vpow.pop %v1201
  %v1203 = vmul.f32 %v1198, 1.442695
  %v1204 = vpow.pop %v1203
  %v1205 = vmul.f32 %v1199, 1.442695
  %v1206 = vpow.pop %v1205
  %v1207 = vmul.f32 %v1200, 1.442695
  %v1208 = vpow.pop %v1207
  %v1209 = vsel %vm163, %v1202, 0.0
  %1210 = vadd.xlane.f32.xlu0 %v1209
  %v1211 = vpop.xlane.xlu0 %1210
  %v1212 = vsel %vm163, %v1204, 0.0
  %1213 = vadd.xlane.f32.xlu0 %v1212
  %v1214 = vpop.xlane.xlu0 %1213
  %v1215 = vsel %vm163, %v1206, 0.0
  %1216 = vadd.xlane.f32.xlu0 %v1215
  %v1217 = vpop.xlane.xlu0 %1216
  %v1218 = vsel %vm163, %v1208, 0.0
  %1219 = vadd.xlane.f32.xlu0 %v1218
  %v1220 = vpop.xlane.xlu0 %1219
  %v1221 = vrcp.pop %v1211
  %v1222 = vrcp.pop %v1214
  %v1223 = vrcp.pop %v1217
  %v1224 = vrcp.pop %v1220
  %v1225 = vmul.f32 %v1202, %v1221
  %v1226 = vmul.f32 %v1204, %v1222
  %v1227 = vmul.f32 %v1206, %v1223
  %v1228 = vmul.f32 %v1208, %v1224
  %1229 = vrot.lane.b32.xlu0 %v243, 40
  %v1230 = vpop.permute.xlu0 %1229
  %1231 = vrot.lane.b32.xlu0 %v248, 40
  %v1232 = vpop.permute.xlu0 %1231
  %1233 = vrot.lane.b32.xlu0 %v253, 40
  %v1234 = vpop.permute.xlu0 %1233
  %1235 = vrot.lane.b32.xlu0 %v258, 40
  %v1236 = vpop.permute.xlu0 %1235
  %v1242 = vsel %vm163, %v1225, 0
  %v1245 = vsel %vm163, %v1226, 0
  %v1248 = vsel %vm163, %v1227, 0
  %v1251 = vsel %vm163, %v1228, 0
  %1253 = vmatprep.subr.mxu0 0.0
  %1254 = vmatpush1.msra.mxu0 %v1230
  %1255 = vmatprep.subr.mxu0 0.0
  %1256 = vmatpush1.msra.mxu0 %v1232
  %1257 = vmatprep.subr.mxu0 0.0
  %1258 = vmatpush1.msra.mxu0 %v1234
  %1259 = vmatprep.subr.mxu0 0.0
  %1260 = vmatpush1.msra.mxu0 %v1236
  %1261 = vmatprep.subr.mxu0 0.0
  %1262 = vmatpush1.msra.mxu0 0.0
  %1263 = vmatprep.subr.mxu0 0.0
  %1264 = vmatpush1.msra.mxu0 0.0
  %1265 = vmatprep.subr.mxu0 0.0
  %1266 = vmatpush1.msra.mxu0 0.0
  %1267 = vmatprep.subr.mxu0 0.0
  %1268 = vmatpush1.msra.mxu0 0.0
  %1269 = vmatprep.subr.mxu0 0.0
  %1270 = vmatpush1.msra.mxu0 0.0
  %1271 = vmatprep.subr.mxu0 0.0
  %1272 = vmatpush1.msra.mxu0 0.0
  %1273 = vmatprep.subr.mxu0 0.0
  %1274 = vmatpush1.msra.mxu0 0.0
  %1275 = vmatprep.subr.mxu0 0.0
  %1276 = vmatpush1.msra.mxu0 0.0
  %1277 = vmatprep.subr.mxu0 0.0
  %1278 = vmatpush1.msra.mxu0 0.0
  %1279 = vmatprep.subr.mxu0 0.0
  %1280 = vmatpush1.msra.mxu0 0.0
  %1281 = vmatprep.subr.mxu0 0.0
  %1282 = vmatpush1.msra.mxu0 0.0
  %1283 = vmatprep.subr.mxu0 0.0
  %1284 = vmatpush1.msra.mxu0 0.0
  %1285 = vmatprep.subr.mxu0 0.0
  %1286 = vmatpush1.msra.mxu0 0.0
  %1287 = vmatprep.subr.mxu0 0.0
  %1288 = vmatpush1.msra.mxu0 0.0
  %1289 = vmatprep.subr.mxu0 0.0
  %1290 = vmatpush1.msra.mxu0 0.0
  %1291 = vmatprep.subr.mxu0 0.0
  %1292 = vmatpush1.msra.mxu0 0.0
  %1293 = vmatprep.subr.mxu0 0.0
  %1294 = vmatpush1.msra.mxu0 0.0
  %1295 = vmatprep.subr.mxu0 0.0
  %1296 = vmatpush1.msra.mxu0 0.0
  %1297 = vmatprep.subr.mxu0 0.0
  %1298 = vmatpush1.msra.mxu0 0.0
  %1299 = vmatprep.subr.mxu0 0.0
  %1300 = vmatpush1.msra.mxu0 0.0
  %1301 = vmatprep.subr.mxu0 0.0
  %1302 = vmatpush1.msra.mxu0 0.0
  %1303 = vmatprep.subr.mxu0 0.0
  %1304 = vmatpush1.msra.mxu0 0.0
  %1305 = vmatprep.subr.mxu0 0.0
  %1306 = vmatpush1.msra.mxu0 0.0
  %1307 = vmatprep.subr.mxu0 0.0
  %1308 = vmatpush1.msra.mxu0 0.0
  %1309 = vmatprep.subr.mxu0 0.0
  %1310 = vmatpush1.msra.mxu0 0.0
  %1311 = vmatprep.subr.mxu0 0.0
  %1312 = vmatpush1.msra.mxu0 0.0
  %1313 = vmatprep.subr.mxu0 0.0
  %1314 = vmatpush1.msra.mxu0 0.0
  %1315 = vmatprep.subr.mxu0 0.0
  %1316 = vmatpush1.msra.mxu0 0.0
  %1317 = vmatprep.mubr.f32.mxu0 0.0
  %1318 = vmatmul.mubr.f32.gmra.mrb[0].mxu0 %v1242
  %v1319 = vpop.f32.mrb[0].mxu0
  %v1320 = vadd.f32 0.0, %v1319
  %v1321 = vpop.f32.mrb[0].mxu0
  %1322 = vmatprep.mubr.f32.mxu0 0.0
  %1323 = vmatmul.mubr.f32.gmra.mrb[0].mxu0 %v1245
  %v1324 = vpop.f32.mrb[0].mxu0
  %v1325 = vadd.f32 0.0, %v1324
  %v1326 = vpop.f32.mrb[0].mxu0
  %1327 = vmatprep.mubr.f32.mxu0 0.0
  %1328 = vmatmul.mubr.f32.gmra.mrb[0].mxu0 %v1248
  %v1329 = vpop.f32.mrb[0].mxu0
  %v1330 = vadd.f32 0.0, %v1329
  %v1331 = vpop.f32.mrb[0].mxu0
  %1332 = vmatprep.mubr.f32.mxu0 0.0
  %1333 = vmatmul.mubr.f32.gmra.mrb[0].mxu0 %v1251
  %v1334 = vpop.f32.mrb[0].mxu0
  %v1335 = vadd.f32 0.0, %v1334
  %v1336 = vpop.f32.mrb[0].mxu0
  %1337 = vdwg.mxu0
  %1342 = vrot.lane.b32.xlu0 %v780, 8
  %v1343 = vpop.permute.xlu0 %1342
  %1344 = vrot.lane.b32.xlu0 %v785, 8
  %v1345 = vpop.permute.xlu0 %1344
  %1346 = vrot.lane.b32.xlu0 %v790, 8
  %v1347 = vpop.permute.xlu0 %1346
  %1348 = vrot.lane.b32.xlu0 %v795, 8
  %v1349 = vpop.permute.xlu0 %1348
  %1358 = vrot.lane.b32.xlu0 %v1050, 16
  %v1359 = vpop.permute.xlu0 %1358
  %1360 = vrot.lane.b32.xlu0 %v1055, 16
  %v1361 = vpop.permute.xlu0 %1360
  %1362 = vrot.lane.b32.xlu0 %v1060, 16
  %v1363 = vpop.permute.xlu0 %1362
  %1364 = vrot.lane.b32.xlu0 %v1065, 16
  %v1365 = vpop.permute.xlu0 %1364
  %1374 = vrot.lane.b32.xlu0 %v1320, 24
  %v1375 = vpop.permute.xlu0 %1374
  %1376 = vrot.lane.b32.xlu0 %v1325, 24
  %v1377 = vpop.permute.xlu0 %1376
  %1378 = vrot.lane.b32.xlu0 %v1330, 24
  %v1379 = vpop.permute.xlu0 %1378
  %1380 = vrot.lane.b32.xlu0 %v1335, 24
  %v1381 = vpop.permute.xlu0 %1380
  %v1386 = vsel %vm273, %v510, %v1343
  %v1387 = vsel %vm273, %v515, %v1345
  %v1388 = vsel %vm273, %v520, %v1347
  %v1389 = vsel %vm273, %v525, %v1349
  %vm1390 = vcmask 130048
  %v1391 = vsel %vm1390, %v1386, %v1359
  %v1392 = vsel %vm1390, %v1387, %v1361
  %v1393 = vsel %vm1390, %v1388, %v1363
  %v1394 = vsel %vm1390, %v1389, %v1365
  %vm1395 = vcmask 195584
  %v1396 = vsel %vm1395, %v1391, %v1375
  %v1397 = vsel %vm1395, %v1392, %v1377
  %v1398 = vsel %vm1395, %v1393, %v1379
  %v1399 = vsel %vm1395, %v1394, %v1381
  %1404 = vrot.lane.b32.xlu0 %v154, 32
  %v1405 = vpop.permute.xlu0 %1404
  %1406 = vrot.lane.b32.xlu0 %v155, 32
  %v1407 = vpop.permute.xlu0 %1406
  %1408 = vrot.lane.b32.xlu0 %v156, 32
  %v1409 = vpop.permute.xlu0 %1408
  %1410 = vrot.lane.b32.xlu0 %v157, 32
  %v1411 = vpop.permute.xlu0 %1410
  %1417 = vrot.lane.b32.xlu0 %v162, 32
  %v1418 = vpop.permute.xlu0 %1417
  %v1421 = vsel %vm163, %v1396, 0
  %v1424 = vsel %vm163, %v1397, 0
  %v1427 = vsel %vm163, %v1398, 0
  %v1430 = vsel %vm163, %v1399, 0
  %1432 = vmatprep.subr.mxu0 0.0
  %1433 = vmatpush1.msra.mxu0 %v1405
  %1434 = vmatprep.subr.mxu0 0.0
  %1435 = vmatpush1.msra.mxu0 %v1407
  %1436 = vmatprep.subr.mxu0 0.0
  %1437 = vmatpush1.msra.mxu0 %v1409
  %1438 = vmatprep.subr.mxu0 0.0
  %1439 = vmatpush1.msra.mxu0 %v1411
  %1440 = vmatprep.subr.mxu0 0.0
  %1441 = vmatpush1.msra.mxu0 0.0
  %1442 = vmatprep.subr.mxu0 0.0
  %1443 = vmatpush1.msra.mxu0 0.0
  %1444 = vmatprep.subr.mxu0 0.0
  %1445 = vmatpush1.msra.mxu0 0.0
  %1446 = vmatprep.subr.mxu0 0.0
  %1447 = vmatpush1.msra.mxu0 0.0
  %1448 = vmatprep.subr.mxu0 0.0
  %1449 = vmatpush1.msra.mxu0 0.0
  %1450 = vmatprep.subr.mxu0 0.0
  %1451 = vmatpush1.msra.mxu0 0.0
  %1452 = vmatprep.subr.mxu0 0.0
  %1453 = vmatpush1.msra.mxu0 0.0
  %1454 = vmatprep.subr.mxu0 0.0
  %1455 = vmatpush1.msra.mxu0 0.0
  %1456 = vmatprep.subr.mxu0 0.0
  %1457 = vmatpush1.msra.mxu0 0.0
  %1458 = vmatprep.subr.mxu0 0.0
  %1459 = vmatpush1.msra.mxu0 0.0
  %1460 = vmatprep.subr.mxu0 0.0
  %1461 = vmatpush1.msra.mxu0 0.0
  %1462 = vmatprep.subr.mxu0 0.0
  %1463 = vmatpush1.msra.mxu0 0.0
  %1464 = vmatprep.subr.mxu0 0.0
  %1465 = vmatpush1.msra.mxu0 0.0
  %1466 = vmatprep.subr.mxu0 0.0
  %1467 = vmatpush1.msra.mxu0 0.0
  %1468 = vmatprep.subr.mxu0 0.0
  %1469 = vmatpush1.msra.mxu0 0.0
  %1470 = vmatprep.subr.mxu0 0.0
  %1471 = vmatpush1.msra.mxu0 0.0
  %1472 = vmatprep.subr.mxu0 0.0
  %1473 = vmatpush1.msra.mxu0 0.0
  %1474 = vmatprep.subr.mxu0 0.0
  %1475 = vmatpush1.msra.mxu0 0.0
  %1476 = vmatprep.subr.mxu0 0.0
  %1477 = vmatpush1.msra.mxu0 0.0
  %1478 = vmatprep.subr.mxu0 0.0
  %1479 = vmatpush1.msra.mxu0 0.0
  %1480 = vmatprep.subr.mxu0 0.0
  %1481 = vmatpush1.msra.mxu0 0.0
  %1482 = vmatprep.subr.mxu0 0.0
  %1483 = vmatpush1.msra.mxu0 0.0
  %1484 = vmatprep.subr.mxu0 0.0
  %1485 = vmatpush1.msra.mxu0 0.0
  %1486 = vmatprep.subr.mxu0 0.0
  %1487 = vmatpush1.msra.mxu0 0.0
  %1488 = vmatprep.subr.mxu0 0.0
  %1489 = vmatpush1.msra.mxu0 0.0
  %1490 = vmatprep.subr.mxu0 0.0
  %1491 = vmatpush1.msra.mxu0 0.0
  %1492 = vmatprep.subr.mxu0 0.0
  %1493 = vmatpush1.msra.mxu0 0.0
  %1494 = vmatprep.subr.mxu0 0.0
  %1495 = vmatpush1.msra.mxu0 0.0
  %1496 = vmatprep.mubr.f32.mxu0 0.0
  %1497 = vmatmul.mubr.f32.gmra.mrb[0].mxu0 %v1421
  %v1498 = vpop.f32.mrb[0].mxu0
  %v1499 = vadd.f32 %v1418, %v1498
  %v1500 = vpop.f32.mrb[0].mxu0
  %1501 = vmatprep.mubr.f32.mxu0 0.0
  %1502 = vmatmul.mubr.f32.gmra.mrb[0].mxu0 %v1424
  %v1503 = vpop.f32.mrb[0].mxu0
  %v1504 = vadd.f32 %v1418, %v1503
  %v1505 = vpop.f32.mrb[0].mxu0
  %1506 = vmatprep.mubr.f32.mxu0 0.0
  %1507 = vmatmul.mubr.f32.gmra.mrb[0].mxu0 %v1427
  %v1508 = vpop.f32.mrb[0].mxu0
  %v1509 = vadd.f32 %v1418, %v1508
  %v1510 = vpop.f32.mrb[0].mxu0
  %1511 = vmatprep.mubr.f32.mxu0 0.0
  %1512 = vmatmul.mubr.f32.gmra.mrb[0].mxu0 %v1430
  %v1513 = vpop.f32.mrb[0].mxu0
  %v1514 = vadd.f32 %v1418, %v1513
  %v1515 = vpop.f32.mrb[0].mxu0
  %1516 = vdwg.mxu0
  %s1517 = scalar_lea.vmem %s2, 32
  %v1518 = vld [vmem:[%s1517] sm:$0xff]
  %v1519 = vld [vmem:[%s1517 + $0x8] sm:$0xff]
  %v1520 = vld [vmem:[%s1517 + $0x10] sm:$0xff]
  %v1521 = vld [vmem:[%s1517 + $0x18] sm:$0xff]
  %v1522 = vld [vmem:[%s3 + $0x1] sm:$0x1]
  %v1523 = vlaneseq
  %v1524 = vshrl.u32 %v1523, 7
  %v1525 = vsub.s32 0, %v1524
  %v1526 = vrot.slane %v1522, %v1525
  %v1528 = vsel %vm163, %v1499, 0
  %v1531 = vsel %vm163, %v1504, 0
  %v1534 = vsel %vm163, %v1509, 0
  %v1537 = vsel %vm163, %v1514, 0
  %1539 = vmatprep.subr.mxu0 0.0
  %1540 = vmatpush1.msra.mxu0 %v1518
  %1541 = vmatprep.subr.mxu0 0.0
  %1542 = vmatpush1.msra.mxu0 %v1519
  %1543 = vmatprep.subr.mxu0 0.0
  %1544 = vmatpush1.msra.mxu0 %v1520
  %1545 = vmatprep.subr.mxu0 0.0
  %1546 = vmatpush1.msra.mxu0 %v1521
  %1547 = vmatprep.subr.mxu0 0.0
  %1548 = vmatpush1.msra.mxu0 0.0
  %1549 = vmatprep.subr.mxu0 0.0
  %1550 = vmatpush1.msra.mxu0 0.0
  %1551 = vmatprep.subr.mxu0 0.0
  %1552 = vmatpush1.msra.mxu0 0.0
  %1553 = vmatprep.subr.mxu0 0.0
  %1554 = vmatpush1.msra.mxu0 0.0
  %1555 = vmatprep.subr.mxu0 0.0
  %1556 = vmatpush1.msra.mxu0 0.0
  %1557 = vmatprep.subr.mxu0 0.0
  %1558 = vmatpush1.msra.mxu0 0.0
  %1559 = vmatprep.subr.mxu0 0.0
  %1560 = vmatpush1.msra.mxu0 0.0
  %1561 = vmatprep.subr.mxu0 0.0
  %1562 = vmatpush1.msra.mxu0 0.0
  %1563 = vmatprep.subr.mxu0 0.0
  %1564 = vmatpush1.msra.mxu0 0.0
  %1565 = vmatprep.subr.mxu0 0.0
  %1566 = vmatpush1.msra.mxu0 0.0
  %1567 = vmatprep.subr.mxu0 0.0
  %1568 = vmatpush1.msra.mxu0 0.0
  %1569 = vmatprep.subr.mxu0 0.0
  %1570 = vmatpush1.msra.mxu0 0.0
  %1571 = vmatprep.subr.mxu0 0.0
  %1572 = vmatpush1.msra.mxu0 0.0
  %1573 = vmatprep.subr.mxu0 0.0
  %1574 = vmatpush1.msra.mxu0 0.0
  %1575 = vmatprep.subr.mxu0 0.0
  %1576 = vmatpush1.msra.mxu0 0.0
  %1577 = vmatprep.subr.mxu0 0.0
  %1578 = vmatpush1.msra.mxu0 0.0
  %1579 = vmatprep.subr.mxu0 0.0
  %1580 = vmatpush1.msra.mxu0 0.0
  %1581 = vmatprep.subr.mxu0 0.0
  %1582 = vmatpush1.msra.mxu0 0.0
  %1583 = vmatprep.subr.mxu0 0.0
  %1584 = vmatpush1.msra.mxu0 0.0
  %1585 = vmatprep.subr.mxu0 0.0
  %1586 = vmatpush1.msra.mxu0 0.0
  %1587 = vmatprep.subr.mxu0 0.0
  %1588 = vmatpush1.msra.mxu0 0.0
  %1589 = vmatprep.subr.mxu0 0.0
  %1590 = vmatpush1.msra.mxu0 0.0
  %1591 = vmatprep.subr.mxu0 0.0
  %1592 = vmatpush1.msra.mxu0 0.0
  %1593 = vmatprep.subr.mxu0 0.0
  %1594 = vmatpush1.msra.mxu0 0.0
  %1595 = vmatprep.subr.mxu0 0.0
  %1596 = vmatpush1.msra.mxu0 0.0
  %1597 = vmatprep.subr.mxu0 0.0
  %1598 = vmatpush1.msra.mxu0 0.0
  %1599 = vmatprep.subr.mxu0 0.0
  %1600 = vmatpush1.msra.mxu0 0.0
  %1601 = vmatprep.subr.mxu0 0.0
  %1602 = vmatpush1.msra.mxu0 0.0
  %1603 = vmatprep.mubr.f32.mxu0 0.0
  %1604 = vmatmul.mubr.f32.gmra.mrb[0].mxu0 %v1528
  %v1605 = vpop.f32.mrb[0].mxu0
  %v1606 = vadd.f32 %v1526, %v1605
  %v1607 = vpop.f32.mrb[0].mxu0
  %1608 = vmatprep.mubr.f32.mxu0 0.0
  %1609 = vmatmul.mubr.f32.gmra.mrb[0].mxu0 %v1531
  %v1610 = vpop.f32.mrb[0].mxu0
  %v1611 = vadd.f32 %v1526, %v1610
  %v1612 = vpop.f32.mrb[0].mxu0
  %1613 = vmatprep.mubr.f32.mxu0 0.0
  %1614 = vmatmul.mubr.f32.gmra.mrb[0].mxu0 %v1534
  %v1615 = vpop.f32.mrb[0].mxu0
  %v1616 = vadd.f32 %v1526, %v1615
  %v1617 = vpop.f32.mrb[0].mxu0
  %1618 = vmatprep.mubr.f32.mxu0 0.0
  %1619 = vmatmul.mubr.f32.gmra.mrb[0].mxu0 %v1537
  %v1620 = vpop.f32.mrb[0].mxu0
  %v1621 = vadd.f32 %v1526, %v1620
  %v1622 = vpop.f32.mrb[0].mxu0
  %1623 = vdwg.mxu0
  %1628 = vrot.lane.b32.xlu0 %v1606, 96
  %v1629 = vpop.permute.xlu0 %1628
  %1630 = vrot.lane.b32.xlu0 %v1611, 96
  %v1631 = vpop.permute.xlu0 %1630
  %1632 = vrot.lane.b32.xlu0 %v1616, 96
  %v1633 = vpop.permute.xlu0 %1632
  %1634 = vrot.lane.b32.xlu0 %v1621, 96
  %v1635 = vpop.permute.xlu0 %1634
  %v1636 = vsel %vm273, %v1606, 0
  %v1638 = vsel %vm273, %v1611, 0
  %v1640 = vsel %vm273, %v1616, 0
  %v1642 = vsel %vm273, %v1621, 0
  %v1644 = vsel %vm273, %v1629, 0
  %v1646 = vsel %vm273, %v1631, 0
  %v1648 = vsel %vm273, %v1633, 0
  %v1650 = vsel %vm273, %v1635, 0
  %1652 = vmatprep.subr.mxu0 0.0
  %1653 = vmatpush1.xpose.msra.mxu0 %v1644
  %1654 = vmatprep.subr.mxu0 0.0
  %1655 = vmatpush1.xpose.msra.mxu0 %v1646
  %1656 = vmatprep.subr.mxu0 0.0
  %1657 = vmatpush1.xpose.msra.mxu0 %v1648
  %1658 = vmatprep.subr.mxu0 0.0
  %1659 = vmatpush1.xpose.msra.mxu0 %v1650
  %1660 = vmatprep.subr.mxu0 0.0
  %1661 = vmatpush1.xpose.msra.mxu0 0.0
  %1662 = vmatprep.subr.mxu0 0.0
  %1663 = vmatpush1.xpose.msra.mxu0 0.0
  %1664 = vmatprep.subr.mxu0 0.0
  %1665 = vmatpush1.xpose.msra.mxu0 0.0
  %1666 = vmatprep.subr.mxu0 0.0
  %1667 = vmatpush1.xpose.msra.mxu0 0.0
  %1668 = vmatprep.subr.mxu0 0.0
  %1669 = vmatpush1.xpose.msra.mxu0 0.0
  %1670 = vmatprep.subr.mxu0 0.0
  %1671 = vmatpush1.xpose.msra.mxu0 0.0
  %1672 = vmatprep.subr.mxu0 0.0
  %1673 = vmatpush1.xpose.msra.mxu0 0.0
  %1674 = vmatprep.subr.mxu0 0.0
  %1675 = vmatpush1.xpose.msra.mxu0 0.0
  %1676 = vmatprep.subr.mxu0 0.0
  %1677 = vmatpush1.xpose.msra.mxu0 0.0
  %1678 = vmatprep.subr.mxu0 0.0
  %1679 = vmatpush1.xpose.msra.mxu0 0.0
  %1680 = vmatprep.subr.mxu0 0.0
  %1681 = vmatpush1.xpose.msra.mxu0 0.0
  %1682 = vmatprep.subr.mxu0 0.0
  %1683 = vmatpush1.xpose.msra.mxu0 0.0
  %1684 = vmatprep.subr.mxu0 0.0
  %1685 = vmatpush1.xpose.msra.mxu0 0.0
  %1686 = vmatprep.subr.mxu0 0.0
  %1687 = vmatpush1.xpose.msra.mxu0 0.0
  %1688 = vmatprep.subr.mxu0 0.0
  %1689 = vmatpush1.xpose.msra.mxu0 0.0
  %1690 = vmatprep.subr.mxu0 0.0
  %1691 = vmatpush1.xpose.msra.mxu0 0.0
  %1692 = vmatprep.subr.mxu0 0.0
  %1693 = vmatpush1.xpose.msra.mxu0 0.0
  %1694 = vmatprep.subr.mxu0 0.0
  %1695 = vmatpush1.xpose.msra.mxu0 0.0
  %1696 = vmatprep.subr.mxu0 0.0
  %1697 = vmatpush1.xpose.msra.mxu0 0.0
  %1698 = vmatprep.subr.mxu0 0.0
  %1699 = vmatpush1.xpose.msra.mxu0 0.0
  %1700 = vmatprep.subr.mxu0 0.0
  %1701 = vmatpush1.xpose.msra.mxu0 0.0
  %1702 = vmatprep.subr.mxu0 0.0
  %1703 = vmatpush1.xpose.msra.mxu0 0.0
  %1704 = vmatprep.subr.mxu0 0.0
  %1705 = vmatpush1.xpose.msra.mxu0 0.0
  %1706 = vmatprep.subr.mxu0 0.0
  %1707 = vmatpush1.xpose.msra.mxu0 0.0
  %1708 = vmatprep.subr.mxu0 0.0
  %1709 = vmatpush1.xpose.msra.mxu0 0.0
  %1710 = vmatprep.subr.mxu0 0.0
  %1711 = vmatpush1.xpose.msra.mxu0 0.0
  %1712 = vmatprep.subr.mxu0 0.0
  %1713 = vmatpush1.xpose.msra.mxu0 0.0
  %1714 = vmatprep.subr.mxu0 0.0
  %1715 = vmatpush1.xpose.msra.mxu0 0.0
  %1716 = vmatprep.mubr.f32.mxu0 0.0
  %1717 = vmatmul.mubr.f32.gmra.mrb[0].mxu0 %v1636
  %v1718 = vpop.f32.mrb[0].mxu0
  %v1719 = vadd.f32 %v150, %v1718
  %v1720 = vpop.f32.mrb[0].mxu0
  %1721 = vmatprep.mubr.f32.mxu0 0.0
  %1722 = vmatmul.mubr.f32.gmra.mrb[0].mxu0 %v1638
  %v1723 = vpop.f32.mrb[0].mxu0
  %v1724 = vadd.f32 %v151, %v1723
  %v1725 = vpop.f32.mrb[0].mxu0
  %1726 = vmatprep.mubr.f32.mxu0 0.0
  %1727 = vmatmul.mubr.f32.gmra.mrb[0].mxu0 %v1640
  %v1728 = vpop.f32.mrb[0].mxu0
  %v1729 = vadd.f32 %v152, %v1728
  %v1730 = vpop.f32.mrb[0].mxu0
  %1731 = vmatprep.mubr.f32.mxu0 0.0
  %1732 = vmatmul.mubr.f32.gmra.mrb[0].mxu0 %v1642
  %v1733 = vpop.f32.mrb[0].mxu0
  %v1734 = vadd.f32 %v153, %v1733
  %v1735 = vpop.f32.mrb[0].mxu0
  %1736 = vdwg.mxu0
  %v1737 = vsel %vm163, %v1719, -inf
  %1738 = vmax.xlane.f32.xlu0 %v1737
  %v1739 = vpop.xlane.xlu0 %1738
  %v1740 = vsel %vm163, %v1724, -inf
  %1741 = vmax.xlane.f32.xlu0 %v1740
  %v1742 = vpop.xlane.xlu0 %1741
  %v1743 = vsel %vm163, %v1729, -inf
  %1744 = vmax.xlane.f32.xlu0 %v1743
  %v1745 = vpop.xlane.xlu0 %1744
  %v1746 = vsel %vm163, %v1734, -inf
  %1747 = vmax.xlane.f32.xlu0 %v1746
  %v1748 = vpop.xlane.xlu0 %1747
  %v1749 = vsub.f32 %v1719, %v1739
  %v1750 = vsub.f32 %v1724, %v1742
  %v1751 = vsub.f32 %v1729, %v1745
  %v1752 = vsub.f32 %v1734, %v1748
  %v1753 = vmul.f32 %v1749, 1.442695
  %v1754 = vpow.pop %v1753
  %v1755 = vmul.f32 %v1750, 1.442695
  %v1756 = vpow.pop %v1755
  %v1757 = vmul.f32 %v1751, 1.442695
  %v1758 = vpow.pop %v1757
  %v1759 = vmul.f32 %v1752, 1.442695
  %v1760 = vpow.pop %v1759
  %v1761 = vsel %vm163, %v1754, 0.0
  %1762 = vadd.xlane.f32.xlu0 %v1761
  %v1763 = vpop.xlane.xlu0 %1762
  %v1764 = vsel %vm163, %v1756, 0.0
  %1765 = vadd.xlane.f32.xlu0 %v1764
  %v1766 = vpop.xlane.xlu0 %1765
  %v1767 = vsel %vm163, %v1758, 0.0
  %1768 = vadd.xlane.f32.xlu0 %v1767
  %v1769 = vpop.xlane.xlu0 %1768
  %v1770 = vsel %vm163, %v1760, 0.0
  %1771 = vadd.xlane.f32.xlu0 %v1770
  %v1772 = vpop.xlane.xlu0 %1771
  %v1773 = vrcp.pop %v1763
  %v1774 = vrcp.pop %v1766
  %v1775 = vrcp.pop %v1769
  %v1776 = vrcp.pop %v1772
  %v1777 = vmul.f32 %v1754, %v1773
  %v1778 = vmul.f32 %v1756, %v1774
  %v1779 = vmul.f32 %v1758, %v1775
  %v1780 = vmul.f32 %v1760, %v1776
  %1781 = vrot.lane.b32.xlu0 %v1606, 64
  %v1782 = vpop.permute.xlu0 %1781
  %1783 = vrot.lane.b32.xlu0 %v1611, 64
  %v1784 = vpop.permute.xlu0 %1783
  %1785 = vrot.lane.b32.xlu0 %v1616, 64
  %v1786 = vpop.permute.xlu0 %1785
  %1787 = vrot.lane.b32.xlu0 %v1621, 64
  %v1788 = vpop.permute.xlu0 %1787
  %v1794 = vsel %vm163, %v1777, 0
  %v1797 = vsel %vm163, %v1778, 0
  %v1800 = vsel %vm163, %v1779, 0
  %v1803 = vsel %vm163, %v1780, 0
  %1805 = vmatprep.subr.mxu0 0.0
  %1806 = vmatpush1.msra.mxu0 %v1782
  %1807 = vmatprep.subr.mxu0 0.0
  %1808 = vmatpush1.msra.mxu0 %v1784
  %1809 = vmatprep.subr.mxu0 0.0
  %1810 = vmatpush1.msra.mxu0 %v1786
  %1811 = vmatprep.subr.mxu0 0.0
  %1812 = vmatpush1.msra.mxu0 %v1788
  %1813 = vmatprep.subr.mxu0 0.0
  %1814 = vmatpush1.msra.mxu0 0.0
  %1815 = vmatprep.subr.mxu0 0.0
  %1816 = vmatpush1.msra.mxu0 0.0
  %1817 = vmatprep.subr.mxu0 0.0
  %1818 = vmatpush1.msra.mxu0 0.0
  %1819 = vmatprep.subr.mxu0 0.0
  %1820 = vmatpush1.msra.mxu0 0.0
  %1821 = vmatprep.subr.mxu0 0.0
  %1822 = vmatpush1.msra.mxu0 0.0
  %1823 = vmatprep.subr.mxu0 0.0
  %1824 = vmatpush1.msra.mxu0 0.0
  %1825 = vmatprep.subr.mxu0 0.0
  %1826 = vmatpush1.msra.mxu0 0.0
  %1827 = vmatprep.subr.mxu0 0.0
  %1828 = vmatpush1.msra.mxu0 0.0
  %1829 = vmatprep.subr.mxu0 0.0
  %1830 = vmatpush1.msra.mxu0 0.0
  %1831 = vmatprep.subr.mxu0 0.0
  %1832 = vmatpush1.msra.mxu0 0.0
  %1833 = vmatprep.subr.mxu0 0.0
  %1834 = vmatpush1.msra.mxu0 0.0
  %1835 = vmatprep.subr.mxu0 0.0
  %1836 = vmatpush1.msra.mxu0 0.0
  %1837 = vmatprep.subr.mxu0 0.0
  %1838 = vmatpush1.msra.mxu0 0.0
  %1839 = vmatprep.subr.mxu0 0.0
  %1840 = vmatpush1.msra.mxu0 0.0
  %1841 = vmatprep.subr.mxu0 0.0
  %1842 = vmatpush1.msra.mxu0 0.0
  %1843 = vmatprep.subr.mxu0 0.0
  %1844 = vmatpush1.msra.mxu0 0.0
  %1845 = vmatprep.subr.mxu0 0.0
  %1846 = vmatpush1.msra.mxu0 0.0
  %1847 = vmatprep.subr.mxu0 0.0
  %1848 = vmatpush1.msra.mxu0 0.0
  %1849 = vmatprep.subr.mxu0 0.0
  %1850 = vmatpush1.msra.mxu0 0.0
  %1851 = vmatprep.subr.mxu0 0.0
  %1852 = vmatpush1.msra.mxu0 0.0
  %1853 = vmatprep.subr.mxu0 0.0
  %1854 = vmatpush1.msra.mxu0 0.0
  %1855 = vmatprep.subr.mxu0 0.0
  %1856 = vmatpush1.msra.mxu0 0.0
  %1857 = vmatprep.subr.mxu0 0.0
  %1858 = vmatpush1.msra.mxu0 0.0
  %1859 = vmatprep.subr.mxu0 0.0
  %1860 = vmatpush1.msra.mxu0 0.0
  %1861 = vmatprep.subr.mxu0 0.0
  %1862 = vmatpush1.msra.mxu0 0.0
  %1863 = vmatprep.subr.mxu0 0.0
  %1864 = vmatpush1.msra.mxu0 0.0
  %1865 = vmatprep.subr.mxu0 0.0
  %1866 = vmatpush1.msra.mxu0 0.0
  %1867 = vmatprep.subr.mxu0 0.0
  %1868 = vmatpush1.msra.mxu0 0.0
  %1869 = vmatprep.mubr.f32.mxu0 0.0
  %1870 = vmatmul.mubr.f32.gmra.mrb[0].mxu0 %v1794
  %v1871 = vpop.f32.mrb[0].mxu0
  %v1872 = vadd.f32 0.0, %v1871
  %v1873 = vpop.f32.mrb[0].mxu0
  %1874 = vmatprep.mubr.f32.mxu0 0.0
  %1875 = vmatmul.mubr.f32.gmra.mrb[0].mxu0 %v1797
  %v1876 = vpop.f32.mrb[0].mxu0
  %v1877 = vadd.f32 0.0, %v1876
  %v1878 = vpop.f32.mrb[0].mxu0
  %1879 = vmatprep.mubr.f32.mxu0 0.0
  %1880 = vmatmul.mubr.f32.gmra.mrb[0].mxu0 %v1800
  %v1881 = vpop.f32.mrb[0].mxu0
  %v1882 = vadd.f32 0.0, %v1881
  %v1883 = vpop.f32.mrb[0].mxu0
  %1884 = vmatprep.mubr.f32.mxu0 0.0
  %1885 = vmatmul.mubr.f32.gmra.mrb[0].mxu0 %v1803
  %v1886 = vpop.f32.mrb[0].mxu0
  %v1887 = vadd.f32 0.0, %v1886
  %v1888 = vpop.f32.mrb[0].mxu0
  %1889 = vdwg.mxu0
  %1890 = vrot.lane.b32.xlu0 %v1606, 120
  %v1891 = vpop.permute.xlu0 %1890
  %1892 = vrot.lane.b32.xlu0 %v1611, 120
  %v1893 = vpop.permute.xlu0 %1892
  %1894 = vrot.lane.b32.xlu0 %v1616, 120
  %v1895 = vpop.permute.xlu0 %1894
  %1896 = vrot.lane.b32.xlu0 %v1621, 120
  %v1897 = vpop.permute.xlu0 %1896
  %1898 = vrot.lane.b32.xlu0 %v1606, 88
  %v1899 = vpop.permute.xlu0 %1898
  %1900 = vrot.lane.b32.xlu0 %v1611, 88
  %v1901 = vpop.permute.xlu0 %1900
  %1902 = vrot.lane.b32.xlu0 %v1616, 88
  %v1903 = vpop.permute.xlu0 %1902
  %1904 = vrot.lane.b32.xlu0 %v1621, 88
  %v1905 = vpop.permute.xlu0 %1904
  %v1906 = vsel %vm273, %v1891, 0
  %v1908 = vsel %vm273, %v1893, 0
  %v1910 = vsel %vm273, %v1895, 0
  %v1912 = vsel %vm273, %v1897, 0
  %v1914 = vsel %vm273, %v1899, 0
  %v1916 = vsel %vm273, %v1901, 0
  %v1918 = vsel %vm273, %v1903, 0
  %v1920 = vsel %vm273, %v1905, 0
  %1922 = vmatprep.subr.mxu0 0.0
  %1923 = vmatpush1.xpose.msra.mxu0 %v1914
  %1924 = vmatprep.subr.mxu0 0.0
  %1925 = vmatpush1.xpose.msra.mxu0 %v1916
  %1926 = vmatprep.subr.mxu0 0.0
  %1927 = vmatpush1.xpose.msra.mxu0 %v1918
  %1928 = vmatprep.subr.mxu0 0.0
  %1929 = vmatpush1.xpose.msra.mxu0 %v1920
  %1930 = vmatprep.subr.mxu0 0.0
  %1931 = vmatpush1.xpose.msra.mxu0 0.0
  %1932 = vmatprep.subr.mxu0 0.0
  %1933 = vmatpush1.xpose.msra.mxu0 0.0
  %1934 = vmatprep.subr.mxu0 0.0
  %1935 = vmatpush1.xpose.msra.mxu0 0.0
  %1936 = vmatprep.subr.mxu0 0.0
  %1937 = vmatpush1.xpose.msra.mxu0 0.0
  %1938 = vmatprep.subr.mxu0 0.0
  %1939 = vmatpush1.xpose.msra.mxu0 0.0
  %1940 = vmatprep.subr.mxu0 0.0
  %1941 = vmatpush1.xpose.msra.mxu0 0.0
  %1942 = vmatprep.subr.mxu0 0.0
  %1943 = vmatpush1.xpose.msra.mxu0 0.0
  %1944 = vmatprep.subr.mxu0 0.0
  %1945 = vmatpush1.xpose.msra.mxu0 0.0
  %1946 = vmatprep.subr.mxu0 0.0
  %1947 = vmatpush1.xpose.msra.mxu0 0.0
  %1948 = vmatprep.subr.mxu0 0.0
  %1949 = vmatpush1.xpose.msra.mxu0 0.0
  %1950 = vmatprep.subr.mxu0 0.0
  %1951 = vmatpush1.xpose.msra.mxu0 0.0
  %1952 = vmatprep.subr.mxu0 0.0
  %1953 = vmatpush1.xpose.msra.mxu0 0.0
  %1954 = vmatprep.subr.mxu0 0.0
  %1955 = vmatpush1.xpose.msra.mxu0 0.0
  %1956 = vmatprep.subr.mxu0 0.0
  %1957 = vmatpush1.xpose.msra.mxu0 0.0
  %1958 = vmatprep.subr.mxu0 0.0
  %1959 = vmatpush1.xpose.msra.mxu0 0.0
  %1960 = vmatprep.subr.mxu0 0.0
  %1961 = vmatpush1.xpose.msra.mxu0 0.0
  %1962 = vmatprep.subr.mxu0 0.0
  %1963 = vmatpush1.xpose.msra.mxu0 0.0
  %1964 = vmatprep.subr.mxu0 0.0
  %1965 = vmatpush1.xpose.msra.mxu0 0.0
  %1966 = vmatprep.subr.mxu0 0.0
  %1967 = vmatpush1.xpose.msra.mxu0 0.0
  %1968 = vmatprep.subr.mxu0 0.0
  %1969 = vmatpush1.xpose.msra.mxu0 0.0
  %1970 = vmatprep.subr.mxu0 0.0
  %1971 = vmatpush1.xpose.msra.mxu0 0.0
  %1972 = vmatprep.subr.mxu0 0.0
  %1973 = vmatpush1.xpose.msra.mxu0 0.0
  %1974 = vmatprep.subr.mxu0 0.0
  %1975 = vmatpush1.xpose.msra.mxu0 0.0
  %1976 = vmatprep.subr.mxu0 0.0
  %1977 = vmatpush1.xpose.msra.mxu0 0.0
  %1978 = vmatprep.subr.mxu0 0.0
  %1979 = vmatpush1.xpose.msra.mxu0 0.0
  %1980 = vmatprep.subr.mxu0 0.0
  %1981 = vmatpush1.xpose.msra.mxu0 0.0
  %1982 = vmatprep.subr.mxu0 0.0
  %1983 = vmatpush1.xpose.msra.mxu0 0.0
  %1984 = vmatprep.subr.mxu0 0.0
  %1985 = vmatpush1.xpose.msra.mxu0 0.0
  %1986 = vmatprep.mubr.f32.mxu0 0.0
  %1987 = vmatmul.mubr.f32.gmra.mrb[0].mxu0 %v1906
  %v1988 = vpop.f32.mrb[0].mxu0
  %v1989 = vadd.f32 %v150, %v1988
  %v1990 = vpop.f32.mrb[0].mxu0
  %1991 = vmatprep.mubr.f32.mxu0 0.0
  %1992 = vmatmul.mubr.f32.gmra.mrb[0].mxu0 %v1908
  %v1993 = vpop.f32.mrb[0].mxu0
  %v1994 = vadd.f32 %v151, %v1993
  %v1995 = vpop.f32.mrb[0].mxu0
  %1996 = vmatprep.mubr.f32.mxu0 0.0
  %1997 = vmatmul.mubr.f32.gmra.mrb[0].mxu0 %v1910
  %v1998 = vpop.f32.mrb[0].mxu0
  %v1999 = vadd.f32 %v152, %v1998
  %v2000 = vpop.f32.mrb[0].mxu0
  %2001 = vmatprep.mubr.f32.mxu0 0.0
  %2002 = vmatmul.mubr.f32.gmra.mrb[0].mxu0 %v1912
  %v2003 = vpop.f32.mrb[0].mxu0
  %v2004 = vadd.f32 %v153, %v2003
  %v2005 = vpop.f32.mrb[0].mxu0
  %2006 = vdwg.mxu0
  %v2007 = vsel %vm163, %v1989, -inf
  %2008 = vmax.xlane.f32.xlu0 %v2007
  %v2009 = vpop.xlane.xlu0 %2008
  %v2010 = vsel %vm163, %v1994, -inf
  %2011 = vmax.xlane.f32.xlu0 %v2010
  %v2012 = vpop.xlane.xlu0 %2011
  %v2013 = vsel %vm163, %v1999, -inf
  %2014 = vmax.xlane.f32.xlu0 %v2013
  %v2015 = vpop.xlane.xlu0 %2014
  %v2016 = vsel %vm163, %v2004, -inf
  %2017 = vmax.xlane.f32.xlu0 %v2016
  %v2018 = vpop.xlane.xlu0 %2017
  %v2019 = vsub.f32 %v1989, %v2009
  %v2020 = vsub.f32 %v1994, %v2012
  %v2021 = vsub.f32 %v1999, %v2015
  %v2022 = vsub.f32 %v2004, %v2018
  %v2023 = vmul.f32 %v2019, 1.442695
  %v2024 = vpow.pop %v2023
  %v2025 = vmul.f32 %v2020, 1.442695
  %v2026 = vpow.pop %v2025
  %v2027 = vmul.f32 %v2021, 1.442695
  %v2028 = vpow.pop %v2027
  %v2029 = vmul.f32 %v2022, 1.442695
  %v2030 = vpow.pop %v2029
  %v2031 = vsel %vm163, %v2024, 0.0
  %2032 = vadd.xlane.f32.xlu0 %v2031
  %v2033 = vpop.xlane.xlu0 %2032
  %v2034 = vsel %vm163, %v2026, 0.0
  %2035 = vadd.xlane.f32.xlu0 %v2034
  %v2036 = vpop.xlane.xlu0 %2035
  %v2037 = vsel %vm163, %v2028, 0.0
  %2038 = vadd.xlane.f32.xlu0 %v2037
  %v2039 = vpop.xlane.xlu0 %2038
  %v2040 = vsel %vm163, %v2030, 0.0
  %2041 = vadd.xlane.f32.xlu0 %v2040
  %v2042 = vpop.xlane.xlu0 %2041
  %v2043 = vrcp.pop %v2033
  %v2044 = vrcp.pop %v2036
  %v2045 = vrcp.pop %v2039
  %v2046 = vrcp.pop %v2042
  %v2047 = vmul.f32 %v2024, %v2043
  %v2048 = vmul.f32 %v2026, %v2044
  %v2049 = vmul.f32 %v2028, %v2045
  %v2050 = vmul.f32 %v2030, %v2046
  %2051 = vrot.lane.b32.xlu0 %v1606, 56
  %v2052 = vpop.permute.xlu0 %2051
  %2053 = vrot.lane.b32.xlu0 %v1611, 56
  %v2054 = vpop.permute.xlu0 %2053
  %2055 = vrot.lane.b32.xlu0 %v1616, 56
  %v2056 = vpop.permute.xlu0 %2055
  %2057 = vrot.lane.b32.xlu0 %v1621, 56
  %v2058 = vpop.permute.xlu0 %2057
  %v2064 = vsel %vm163, %v2047, 0
  %v2067 = vsel %vm163, %v2048, 0
  %v2070 = vsel %vm163, %v2049, 0
  %v2073 = vsel %vm163, %v2050, 0
  %2075 = vmatprep.subr.mxu0 0.0
  %2076 = vmatpush1.msra.mxu0 %v2052
  %2077 = vmatprep.subr.mxu0 0.0
  %2078 = vmatpush1.msra.mxu0 %v2054
  %2079 = vmatprep.subr.mxu0 0.0
  %2080 = vmatpush1.msra.mxu0 %v2056
  %2081 = vmatprep.subr.mxu0 0.0
  %2082 = vmatpush1.msra.mxu0 %v2058
  %2083 = vmatprep.subr.mxu0 0.0
  %2084 = vmatpush1.msra.mxu0 0.0
  %2085 = vmatprep.subr.mxu0 0.0
  %2086 = vmatpush1.msra.mxu0 0.0
  %2087 = vmatprep.subr.mxu0 0.0
  %2088 = vmatpush1.msra.mxu0 0.0
  %2089 = vmatprep.subr.mxu0 0.0
  %2090 = vmatpush1.msra.mxu0 0.0
  %2091 = vmatprep.subr.mxu0 0.0
  %2092 = vmatpush1.msra.mxu0 0.0
  %2093 = vmatprep.subr.mxu0 0.0
  %2094 = vmatpush1.msra.mxu0 0.0
  %2095 = vmatprep.subr.mxu0 0.0
  %2096 = vmatpush1.msra.mxu0 0.0
  %2097 = vmatprep.subr.mxu0 0.0
  %2098 = vmatpush1.msra.mxu0 0.0
  %2099 = vmatprep.subr.mxu0 0.0
  %2100 = vmatpush1.msra.mxu0 0.0
  %2101 = vmatprep.subr.mxu0 0.0
  %2102 = vmatpush1.msra.mxu0 0.0
  %2103 = vmatprep.subr.mxu0 0.0
  %2104 = vmatpush1.msra.mxu0 0.0
  %2105 = vmatprep.subr.mxu0 0.0
  %2106 = vmatpush1.msra.mxu0 0.0
  %2107 = vmatprep.subr.mxu0 0.0
  %2108 = vmatpush1.msra.mxu0 0.0
  %2109 = vmatprep.subr.mxu0 0.0
  %2110 = vmatpush1.msra.mxu0 0.0
  %2111 = vmatprep.subr.mxu0 0.0
  %2112 = vmatpush1.msra.mxu0 0.0
  %2113 = vmatprep.subr.mxu0 0.0
  %2114 = vmatpush1.msra.mxu0 0.0
  %2115 = vmatprep.subr.mxu0 0.0
  %2116 = vmatpush1.msra.mxu0 0.0
  %2117 = vmatprep.subr.mxu0 0.0
  %2118 = vmatpush1.msra.mxu0 0.0
  %2119 = vmatprep.subr.mxu0 0.0
  %2120 = vmatpush1.msra.mxu0 0.0
  %2121 = vmatprep.subr.mxu0 0.0
  %2122 = vmatpush1.msra.mxu0 0.0
  %2123 = vmatprep.subr.mxu0 0.0
  %2124 = vmatpush1.msra.mxu0 0.0
  %2125 = vmatprep.subr.mxu0 0.0
  %2126 = vmatpush1.msra.mxu0 0.0
  %2127 = vmatprep.subr.mxu0 0.0
  %2128 = vmatpush1.msra.mxu0 0.0
  %2129 = vmatprep.subr.mxu0 0.0
  %2130 = vmatpush1.msra.mxu0 0.0
  %2131 = vmatprep.subr.mxu0 0.0
  %2132 = vmatpush1.msra.mxu0 0.0
  %2133 = vmatprep.subr.mxu0 0.0
  %2134 = vmatpush1.msra.mxu0 0.0
  %2135 = vmatprep.subr.mxu0 0.0
  %2136 = vmatpush1.msra.mxu0 0.0
  %2137 = vmatprep.subr.mxu0 0.0
  %2138 = vmatpush1.msra.mxu0 0.0
  %2139 = vmatprep.mubr.f32.mxu0 0.0
  %2140 = vmatmul.mubr.f32.gmra.mrb[0].mxu0 %v2064
  %v2141 = vpop.f32.mrb[0].mxu0
  %v2142 = vadd.f32 0.0, %v2141
  %v2143 = vpop.f32.mrb[0].mxu0
  %2144 = vmatprep.mubr.f32.mxu0 0.0
  %2145 = vmatmul.mubr.f32.gmra.mrb[0].mxu0 %v2067
  %v2146 = vpop.f32.mrb[0].mxu0
  %v2147 = vadd.f32 0.0, %v2146
  %v2148 = vpop.f32.mrb[0].mxu0
  %2149 = vmatprep.mubr.f32.mxu0 0.0
  %2150 = vmatmul.mubr.f32.gmra.mrb[0].mxu0 %v2070
  %v2151 = vpop.f32.mrb[0].mxu0
  %v2152 = vadd.f32 0.0, %v2151
  %v2153 = vpop.f32.mrb[0].mxu0
  %2154 = vmatprep.mubr.f32.mxu0 0.0
  %2155 = vmatmul.mubr.f32.gmra.mrb[0].mxu0 %v2073
  %v2156 = vpop.f32.mrb[0].mxu0
  %v2157 = vadd.f32 0.0, %v2156
  %v2158 = vpop.f32.mrb[0].mxu0
  %2159 = vdwg.mxu0
  %2160 = vrot.lane.b32.xlu0 %v1606, 112
  %v2161 = vpop.permute.xlu0 %2160
  %2162 = vrot.lane.b32.xlu0 %v1611, 112
  %v2163 = vpop.permute.xlu0 %2162
  %2164 = vrot.lane.b32.xlu0 %v1616, 112
  %v2165 = vpop.permute.xlu0 %2164
  %2166 = vrot.lane.b32.xlu0 %v1621, 112
  %v2167 = vpop.permute.xlu0 %2166
  %2168 = vrot.lane.b32.xlu0 %v1606, 80
  %v2169 = vpop.permute.xlu0 %2168
  %2170 = vrot.lane.b32.xlu0 %v1611, 80
  %v2171 = vpop.permute.xlu0 %2170
  %2172 = vrot.lane.b32.xlu0 %v1616, 80
  %v2173 = vpop.permute.xlu0 %2172
  %2174 = vrot.lane.b32.xlu0 %v1621, 80
  %v2175 = vpop.permute.xlu0 %2174
  %v2176 = vsel %vm273, %v2161, 0
  %v2178 = vsel %vm273, %v2163, 0
  %v2180 = vsel %vm273, %v2165, 0
  %v2182 = vsel %vm273, %v2167, 0
  %v2184 = vsel %vm273, %v2169, 0
  %v2186 = vsel %vm273, %v2171, 0
  %v2188 = vsel %vm273, %v2173, 0
  %v2190 = vsel %vm273, %v2175, 0
  %2192 = vmatprep.subr.mxu0 0.0
  %2193 = vmatpush1.xpose.msra.mxu0 %v2184
  %2194 = vmatprep.subr.mxu0 0.0
  %2195 = vmatpush1.xpose.msra.mxu0 %v2186
  %2196 = vmatprep.subr.mxu0 0.0
  %2197 = vmatpush1.xpose.msra.mxu0 %v2188
  %2198 = vmatprep.subr.mxu0 0.0
  %2199 = vmatpush1.xpose.msra.mxu0 %v2190
  %2200 = vmatprep.subr.mxu0 0.0
  %2201 = vmatpush1.xpose.msra.mxu0 0.0
  %2202 = vmatprep.subr.mxu0 0.0
  %2203 = vmatpush1.xpose.msra.mxu0 0.0
  %2204 = vmatprep.subr.mxu0 0.0
  %2205 = vmatpush1.xpose.msra.mxu0 0.0
  %2206 = vmatprep.subr.mxu0 0.0
  %2207 = vmatpush1.xpose.msra.mxu0 0.0
  %2208 = vmatprep.subr.mxu0 0.0
  %2209 = vmatpush1.xpose.msra.mxu0 0.0
  %2210 = vmatprep.subr.mxu0 0.0
  %2211 = vmatpush1.xpose.msra.mxu0 0.0
  %2212 = vmatprep.subr.mxu0 0.0
  %2213 = vmatpush1.xpose.msra.mxu0 0.0
  %2214 = vmatprep.subr.mxu0 0.0
  %2215 = vmatpush1.xpose.msra.mxu0 0.0
  %2216 = vmatprep.subr.mxu0 0.0
  %2217 = vmatpush1.xpose.msra.mxu0 0.0
  %2218 = vmatprep.subr.mxu0 0.0
  %2219 = vmatpush1.xpose.msra.mxu0 0.0
  %2220 = vmatprep.subr.mxu0 0.0
  %2221 = vmatpush1.xpose.msra.mxu0 0.0
  %2222 = vmatprep.subr.mxu0 0.0
  %2223 = vmatpush1.xpose.msra.mxu0 0.0
  %2224 = vmatprep.subr.mxu0 0.0
  %2225 = vmatpush1.xpose.msra.mxu0 0.0
  %2226 = vmatprep.subr.mxu0 0.0
  %2227 = vmatpush1.xpose.msra.mxu0 0.0
  %2228 = vmatprep.subr.mxu0 0.0
  %2229 = vmatpush1.xpose.msra.mxu0 0.0
  %2230 = vmatprep.subr.mxu0 0.0
  %2231 = vmatpush1.xpose.msra.mxu0 0.0
  %2232 = vmatprep.subr.mxu0 0.0
  %2233 = vmatpush1.xpose.msra.mxu0 0.0
  %2234 = vmatprep.subr.mxu0 0.0
  %2235 = vmatpush1.xpose.msra.mxu0 0.0
  %2236 = vmatprep.subr.mxu0 0.0
  %2237 = vmatpush1.xpose.msra.mxu0 0.0
  %2238 = vmatprep.subr.mxu0 0.0
  %2239 = vmatpush1.xpose.msra.mxu0 0.0
  %2240 = vmatprep.subr.mxu0 0.0
  %2241 = vmatpush1.xpose.msra.mxu0 0.0
  %2242 = vmatprep.subr.mxu0 0.0
  %2243 = vmatpush1.xpose.msra.mxu0 0.0
  %2244 = vmatprep.subr.mxu0 0.0
  %2245 = vmatpush1.xpose.msra.mxu0 0.0
  %2246 = vmatprep.subr.mxu0 0.0
  %2247 = vmatpush1.xpose.msra.mxu0 0.0
  %2248 = vmatprep.subr.mxu0 0.0
  %2249 = vmatpush1.xpose.msra.mxu0 0.0
  %2250 = vmatprep.subr.mxu0 0.0
  %2251 = vmatpush1.xpose.msra.mxu0 0.0
  %2252 = vmatprep.subr.mxu0 0.0
  %2253 = vmatpush1.xpose.msra.mxu0 0.0
  %2254 = vmatprep.subr.mxu0 0.0
  %2255 = vmatpush1.xpose.msra.mxu0 0.0
  %2256 = vmatprep.mubr.f32.mxu0 0.0
  %2257 = vmatmul.mubr.f32.gmra.mrb[0].mxu0 %v2176
  %v2258 = vpop.f32.mrb[0].mxu0
  %v2259 = vadd.f32 %v150, %v2258
  %v2260 = vpop.f32.mrb[0].mxu0
  %2261 = vmatprep.mubr.f32.mxu0 0.0
  %2262 = vmatmul.mubr.f32.gmra.mrb[0].mxu0 %v2178
  %v2263 = vpop.f32.mrb[0].mxu0
  %v2264 = vadd.f32 %v151, %v2263
  %v2265 = vpop.f32.mrb[0].mxu0
  %2266 = vmatprep.mubr.f32.mxu0 0.0
  %2267 = vmatmul.mubr.f32.gmra.mrb[0].mxu0 %v2180
  %v2268 = vpop.f32.mrb[0].mxu0
  %v2269 = vadd.f32 %v152, %v2268
  %v2270 = vpop.f32.mrb[0].mxu0
  %2271 = vmatprep.mubr.f32.mxu0 0.0
  %2272 = vmatmul.mubr.f32.gmra.mrb[0].mxu0 %v2182
  %v2273 = vpop.f32.mrb[0].mxu0
  %v2274 = vadd.f32 %v153, %v2273
  %v2275 = vpop.f32.mrb[0].mxu0
  %2276 = vdwg.mxu0
  %v2277 = vsel %vm163, %v2259, -inf
  %2278 = vmax.xlane.f32.xlu0 %v2277
  %v2279 = vpop.xlane.xlu0 %2278
  %v2280 = vsel %vm163, %v2264, -inf
  %2281 = vmax.xlane.f32.xlu0 %v2280
  %v2282 = vpop.xlane.xlu0 %2281
  %v2283 = vsel %vm163, %v2269, -inf
  %2284 = vmax.xlane.f32.xlu0 %v2283
  %v2285 = vpop.xlane.xlu0 %2284
  %v2286 = vsel %vm163, %v2274, -inf
  %2287 = vmax.xlane.f32.xlu0 %v2286
  %v2288 = vpop.xlane.xlu0 %2287
  %v2289 = vsub.f32 %v2259, %v2279
  %v2290 = vsub.f32 %v2264, %v2282
  %v2291 = vsub.f32 %v2269, %v2285
  %v2292 = vsub.f32 %v2274, %v2288
  %v2293 = vmul.f32 %v2289, 1.442695
  %v2294 = vpow.pop %v2293
  %v2295 = vmul.f32 %v2290, 1.442695
  %v2296 = vpow.pop %v2295
  %v2297 = vmul.f32 %v2291, 1.442695
  %v2298 = vpow.pop %v2297
  %v2299 = vmul.f32 %v2292, 1.442695
  %v2300 = vpow.pop %v2299
  %v2301 = vsel %vm163, %v2294, 0.0
  %2302 = vadd.xlane.f32.xlu0 %v2301
  %v2303 = vpop.xlane.xlu0 %2302
  %v2304 = vsel %vm163, %v2296, 0.0
  %2305 = vadd.xlane.f32.xlu0 %v2304
  %v2306 = vpop.xlane.xlu0 %2305
  %v2307 = vsel %vm163, %v2298, 0.0
  %2308 = vadd.xlane.f32.xlu0 %v2307
  %v2309 = vpop.xlane.xlu0 %2308
  %v2310 = vsel %vm163, %v2300, 0.0
  %2311 = vadd.xlane.f32.xlu0 %v2310
  %v2312 = vpop.xlane.xlu0 %2311
  %v2313 = vrcp.pop %v2303
  %v2314 = vrcp.pop %v2306
  %v2315 = vrcp.pop %v2309
  %v2316 = vrcp.pop %v2312
  %v2317 = vmul.f32 %v2294, %v2313
  %v2318 = vmul.f32 %v2296, %v2314
  %v2319 = vmul.f32 %v2298, %v2315
  %v2320 = vmul.f32 %v2300, %v2316
  %2321 = vrot.lane.b32.xlu0 %v1606, 48
  %v2322 = vpop.permute.xlu0 %2321
  %2323 = vrot.lane.b32.xlu0 %v1611, 48
  %v2324 = vpop.permute.xlu0 %2323
  %2325 = vrot.lane.b32.xlu0 %v1616, 48
  %v2326 = vpop.permute.xlu0 %2325
  %2327 = vrot.lane.b32.xlu0 %v1621, 48
  %v2328 = vpop.permute.xlu0 %2327
  %v2334 = vsel %vm163, %v2317, 0
  %v2337 = vsel %vm163, %v2318, 0
  %v2340 = vsel %vm163, %v2319, 0
  %v2343 = vsel %vm163, %v2320, 0
  %2345 = vmatprep.subr.mxu0 0.0
  %2346 = vmatpush1.msra.mxu0 %v2322
  %2347 = vmatprep.subr.mxu0 0.0
  %2348 = vmatpush1.msra.mxu0 %v2324
  %2349 = vmatprep.subr.mxu0 0.0
  %2350 = vmatpush1.msra.mxu0 %v2326
  %2351 = vmatprep.subr.mxu0 0.0
  %2352 = vmatpush1.msra.mxu0 %v2328
  %2353 = vmatprep.subr.mxu0 0.0
  %2354 = vmatpush1.msra.mxu0 0.0
  %2355 = vmatprep.subr.mxu0 0.0
  %2356 = vmatpush1.msra.mxu0 0.0
  %2357 = vmatprep.subr.mxu0 0.0
  %2358 = vmatpush1.msra.mxu0 0.0
  %2359 = vmatprep.subr.mxu0 0.0
  %2360 = vmatpush1.msra.mxu0 0.0
  %2361 = vmatprep.subr.mxu0 0.0
  %2362 = vmatpush1.msra.mxu0 0.0
  %2363 = vmatprep.subr.mxu0 0.0
  %2364 = vmatpush1.msra.mxu0 0.0
  %2365 = vmatprep.subr.mxu0 0.0
  %2366 = vmatpush1.msra.mxu0 0.0
  %2367 = vmatprep.subr.mxu0 0.0
  %2368 = vmatpush1.msra.mxu0 0.0
  %2369 = vmatprep.subr.mxu0 0.0
  %2370 = vmatpush1.msra.mxu0 0.0
  %2371 = vmatprep.subr.mxu0 0.0
  %2372 = vmatpush1.msra.mxu0 0.0
  %2373 = vmatprep.subr.mxu0 0.0
  %2374 = vmatpush1.msra.mxu0 0.0
  %2375 = vmatprep.subr.mxu0 0.0
  %2376 = vmatpush1.msra.mxu0 0.0
  %2377 = vmatprep.subr.mxu0 0.0
  %2378 = vmatpush1.msra.mxu0 0.0
  %2379 = vmatprep.subr.mxu0 0.0
  %2380 = vmatpush1.msra.mxu0 0.0
  %2381 = vmatprep.subr.mxu0 0.0
  %2382 = vmatpush1.msra.mxu0 0.0
  %2383 = vmatprep.subr.mxu0 0.0
  %2384 = vmatpush1.msra.mxu0 0.0
  %2385 = vmatprep.subr.mxu0 0.0
  %2386 = vmatpush1.msra.mxu0 0.0
  %2387 = vmatprep.subr.mxu0 0.0
  %2388 = vmatpush1.msra.mxu0 0.0
  %2389 = vmatprep.subr.mxu0 0.0
  %2390 = vmatpush1.msra.mxu0 0.0
  %2391 = vmatprep.subr.mxu0 0.0
  %2392 = vmatpush1.msra.mxu0 0.0
  %2393 = vmatprep.subr.mxu0 0.0
  %2394 = vmatpush1.msra.mxu0 0.0
  %2395 = vmatprep.subr.mxu0 0.0
  %2396 = vmatpush1.msra.mxu0 0.0
  %2397 = vmatprep.subr.mxu0 0.0
  %2398 = vmatpush1.msra.mxu0 0.0
  %2399 = vmatprep.subr.mxu0 0.0
  %2400 = vmatpush1.msra.mxu0 0.0
  %2401 = vmatprep.subr.mxu0 0.0
  %2402 = vmatpush1.msra.mxu0 0.0
  %2403 = vmatprep.subr.mxu0 0.0
  %2404 = vmatpush1.msra.mxu0 0.0
  %2405 = vmatprep.subr.mxu0 0.0
  %2406 = vmatpush1.msra.mxu0 0.0
  %2407 = vmatprep.subr.mxu0 0.0
  %2408 = vmatpush1.msra.mxu0 0.0
  %2409 = vmatprep.mubr.f32.mxu0 0.0
  %2410 = vmatmul.mubr.f32.gmra.mrb[0].mxu0 %v2334
  %v2411 = vpop.f32.mrb[0].mxu0
  %v2412 = vadd.f32 0.0, %v2411
  %v2413 = vpop.f32.mrb[0].mxu0
  %2414 = vmatprep.mubr.f32.mxu0 0.0
  %2415 = vmatmul.mubr.f32.gmra.mrb[0].mxu0 %v2337
  %v2416 = vpop.f32.mrb[0].mxu0
  %v2417 = vadd.f32 0.0, %v2416
  %v2418 = vpop.f32.mrb[0].mxu0
  %2419 = vmatprep.mubr.f32.mxu0 0.0
  %2420 = vmatmul.mubr.f32.gmra.mrb[0].mxu0 %v2340
  %v2421 = vpop.f32.mrb[0].mxu0
  %v2422 = vadd.f32 0.0, %v2421
  %v2423 = vpop.f32.mrb[0].mxu0
  %2424 = vmatprep.mubr.f32.mxu0 0.0
  %2425 = vmatmul.mubr.f32.gmra.mrb[0].mxu0 %v2343
  %v2426 = vpop.f32.mrb[0].mxu0
  %v2427 = vadd.f32 0.0, %v2426
  %v2428 = vpop.f32.mrb[0].mxu0
  %2429 = vdwg.mxu0
  %2430 = vrot.lane.b32.xlu0 %v1606, 104
  %v2431 = vpop.permute.xlu0 %2430
  %2432 = vrot.lane.b32.xlu0 %v1611, 104
  %v2433 = vpop.permute.xlu0 %2432
  %2434 = vrot.lane.b32.xlu0 %v1616, 104
  %v2435 = vpop.permute.xlu0 %2434
  %2436 = vrot.lane.b32.xlu0 %v1621, 104
  %v2437 = vpop.permute.xlu0 %2436
  %2438 = vrot.lane.b32.xlu0 %v1606, 72
  %v2439 = vpop.permute.xlu0 %2438
  %2440 = vrot.lane.b32.xlu0 %v1611, 72
  %v2441 = vpop.permute.xlu0 %2440
  %2442 = vrot.lane.b32.xlu0 %v1616, 72
  %v2443 = vpop.permute.xlu0 %2442
  %2444 = vrot.lane.b32.xlu0 %v1621, 72
  %v2445 = vpop.permute.xlu0 %2444
  %v2446 = vsel %vm273, %v2431, 0
  %v2448 = vsel %vm273, %v2433, 0
  %v2450 = vsel %vm273, %v2435, 0
  %v2452 = vsel %vm273, %v2437, 0
  %v2454 = vsel %vm273, %v2439, 0
  %v2456 = vsel %vm273, %v2441, 0
  %v2458 = vsel %vm273, %v2443, 0
  %v2460 = vsel %vm273, %v2445, 0
  %2462 = vmatprep.subr.mxu0 0.0
  %2463 = vmatpush1.xpose.msra.mxu0 %v2454
  %2464 = vmatprep.subr.mxu0 0.0
  %2465 = vmatpush1.xpose.msra.mxu0 %v2456
  %2466 = vmatprep.subr.mxu0 0.0
  %2467 = vmatpush1.xpose.msra.mxu0 %v2458
  %2468 = vmatprep.subr.mxu0 0.0
  %2469 = vmatpush1.xpose.msra.mxu0 %v2460
  %2470 = vmatprep.subr.mxu0 0.0
  %2471 = vmatpush1.xpose.msra.mxu0 0.0
  %2472 = vmatprep.subr.mxu0 0.0
  %2473 = vmatpush1.xpose.msra.mxu0 0.0
  %2474 = vmatprep.subr.mxu0 0.0
  %2475 = vmatpush1.xpose.msra.mxu0 0.0
  %2476 = vmatprep.subr.mxu0 0.0
  %2477 = vmatpush1.xpose.msra.mxu0 0.0
  %2478 = vmatprep.subr.mxu0 0.0
  %2479 = vmatpush1.xpose.msra.mxu0 0.0
  %2480 = vmatprep.subr.mxu0 0.0
  %2481 = vmatpush1.xpose.msra.mxu0 0.0
  %2482 = vmatprep.subr.mxu0 0.0
  %2483 = vmatpush1.xpose.msra.mxu0 0.0
  %2484 = vmatprep.subr.mxu0 0.0
  %2485 = vmatpush1.xpose.msra.mxu0 0.0
  %2486 = vmatprep.subr.mxu0 0.0
  %2487 = vmatpush1.xpose.msra.mxu0 0.0
  %2488 = vmatprep.subr.mxu0 0.0
  %2489 = vmatpush1.xpose.msra.mxu0 0.0
  %2490 = vmatprep.subr.mxu0 0.0
  %2491 = vmatpush1.xpose.msra.mxu0 0.0
  %2492 = vmatprep.subr.mxu0 0.0
  %2493 = vmatpush1.xpose.msra.mxu0 0.0
  %2494 = vmatprep.subr.mxu0 0.0
  %2495 = vmatpush1.xpose.msra.mxu0 0.0
  %2496 = vmatprep.subr.mxu0 0.0
  %2497 = vmatpush1.xpose.msra.mxu0 0.0
  %2498 = vmatprep.subr.mxu0 0.0
  %2499 = vmatpush1.xpose.msra.mxu0 0.0
  %2500 = vmatprep.subr.mxu0 0.0
  %2501 = vmatpush1.xpose.msra.mxu0 0.0
  %2502 = vmatprep.subr.mxu0 0.0
  %2503 = vmatpush1.xpose.msra.mxu0 0.0
  %2504 = vmatprep.subr.mxu0 0.0
  %2505 = vmatpush1.xpose.msra.mxu0 0.0
  %2506 = vmatprep.subr.mxu0 0.0
  %2507 = vmatpush1.xpose.msra.mxu0 0.0
  %2508 = vmatprep.subr.mxu0 0.0
  %2509 = vmatpush1.xpose.msra.mxu0 0.0
  %2510 = vmatprep.subr.mxu0 0.0
  %2511 = vmatpush1.xpose.msra.mxu0 0.0
  %2512 = vmatprep.subr.mxu0 0.0
  %2513 = vmatpush1.xpose.msra.mxu0 0.0
  %2514 = vmatprep.subr.mxu0 0.0
  %2515 = vmatpush1.xpose.msra.mxu0 0.0
  %2516 = vmatprep.subr.mxu0 0.0
  %2517 = vmatpush1.xpose.msra.mxu0 0.0
  %2518 = vmatprep.subr.mxu0 0.0
  %2519 = vmatpush1.xpose.msra.mxu0 0.0
  %2520 = vmatprep.subr.mxu0 0.0
  %2521 = vmatpush1.xpose.msra.mxu0 0.0
  %2522 = vmatprep.subr.mxu0 0.0
  %2523 = vmatpush1.xpose.msra.mxu0 0.0
  %2524 = vmatprep.subr.mxu0 0.0
  %2525 = vmatpush1.xpose.msra.mxu0 0.0
  %2526 = vmatprep.mubr.f32.mxu0 0.0
  %2527 = vmatmul.mubr.f32.gmra.mrb[0].mxu0 %v2446
  %v2528 = vpop.f32.mrb[0].mxu0
  %v2529 = vadd.f32 %v150, %v2528
  %v2530 = vpop.f32.mrb[0].mxu0
  %2531 = vmatprep.mubr.f32.mxu0 0.0
  %2532 = vmatmul.mubr.f32.gmra.mrb[0].mxu0 %v2448
  %v2533 = vpop.f32.mrb[0].mxu0
  %v2534 = vadd.f32 %v151, %v2533
  %v2535 = vpop.f32.mrb[0].mxu0
  %2536 = vmatprep.mubr.f32.mxu0 0.0
  %2537 = vmatmul.mubr.f32.gmra.mrb[0].mxu0 %v2450
  %v2538 = vpop.f32.mrb[0].mxu0
  %v2539 = vadd.f32 %v152, %v2538
  %v2540 = vpop.f32.mrb[0].mxu0
  %2541 = vmatprep.mubr.f32.mxu0 0.0
  %2542 = vmatmul.mubr.f32.gmra.mrb[0].mxu0 %v2452
  %v2543 = vpop.f32.mrb[0].mxu0
  %v2544 = vadd.f32 %v153, %v2543
  %v2545 = vpop.f32.mrb[0].mxu0
  %2546 = vdwg.mxu0
  %v2547 = vsel %vm163, %v2529, -inf
  %2548 = vmax.xlane.f32.xlu0 %v2547
  %v2549 = vpop.xlane.xlu0 %2548
  %v2550 = vsel %vm163, %v2534, -inf
  %2551 = vmax.xlane.f32.xlu0 %v2550
  %v2552 = vpop.xlane.xlu0 %2551
  %v2553 = vsel %vm163, %v2539, -inf
  %2554 = vmax.xlane.f32.xlu0 %v2553
  %v2555 = vpop.xlane.xlu0 %2554
  %v2556 = vsel %vm163, %v2544, -inf
  %2557 = vmax.xlane.f32.xlu0 %v2556
  %v2558 = vpop.xlane.xlu0 %2557
  %v2559 = vsub.f32 %v2529, %v2549
  %v2560 = vsub.f32 %v2534, %v2552
  %v2561 = vsub.f32 %v2539, %v2555
  %v2562 = vsub.f32 %v2544, %v2558
  %v2563 = vmul.f32 %v2559, 1.442695
  %v2564 = vpow.pop %v2563
  %v2565 = vmul.f32 %v2560, 1.442695
  %v2566 = vpow.pop %v2565
  %v2567 = vmul.f32 %v2561, 1.442695
  %v2568 = vpow.pop %v2567
  %v2569 = vmul.f32 %v2562, 1.442695
  %v2570 = vpow.pop %v2569
  %v2571 = vsel %vm163, %v2564, 0.0
  %2572 = vadd.xlane.f32.xlu0 %v2571
  %v2573 = vpop.xlane.xlu0 %2572
  %v2574 = vsel %vm163, %v2566, 0.0
  %2575 = vadd.xlane.f32.xlu0 %v2574
  %v2576 = vpop.xlane.xlu0 %2575
  %v2577 = vsel %vm163, %v2568, 0.0
  %2578 = vadd.xlane.f32.xlu0 %v2577
  %v2579 = vpop.xlane.xlu0 %2578
  %v2580 = vsel %vm163, %v2570, 0.0
  %2581 = vadd.xlane.f32.xlu0 %v2580
  %v2582 = vpop.xlane.xlu0 %2581
  %v2583 = vrcp.pop %v2573
  %v2584 = vrcp.pop %v2576
  %v2585 = vrcp.pop %v2579
  %v2586 = vrcp.pop %v2582
  %v2587 = vmul.f32 %v2564, %v2583
  %v2588 = vmul.f32 %v2566, %v2584
  %v2589 = vmul.f32 %v2568, %v2585
  %v2590 = vmul.f32 %v2570, %v2586
  %2591 = vrot.lane.b32.xlu0 %v1606, 40
  %v2592 = vpop.permute.xlu0 %2591
  %2593 = vrot.lane.b32.xlu0 %v1611, 40
  %v2594 = vpop.permute.xlu0 %2593
  %2595 = vrot.lane.b32.xlu0 %v1616, 40
  %v2596 = vpop.permute.xlu0 %2595
  %2597 = vrot.lane.b32.xlu0 %v1621, 40
  %v2598 = vpop.permute.xlu0 %2597
  %v2604 = vsel %vm163, %v2587, 0
  %v2607 = vsel %vm163, %v2588, 0
  %v2610 = vsel %vm163, %v2589, 0
  %v2613 = vsel %vm163, %v2590, 0
  %2615 = vmatprep.subr.mxu0 0.0
  %2616 = vmatpush1.msra.mxu0 %v2592
  %2617 = vmatprep.subr.mxu0 0.0
  %2618 = vmatpush1.msra.mxu0 %v2594
  %2619 = vmatprep.subr.mxu0 0.0
  %2620 = vmatpush1.msra.mxu0 %v2596
  %2621 = vmatprep.subr.mxu0 0.0
  %2622 = vmatpush1.msra.mxu0 %v2598
  %2623 = vmatprep.subr.mxu0 0.0
  %2624 = vmatpush1.msra.mxu0 0.0
  %2625 = vmatprep.subr.mxu0 0.0
  %2626 = vmatpush1.msra.mxu0 0.0
  %2627 = vmatprep.subr.mxu0 0.0
  %2628 = vmatpush1.msra.mxu0 0.0
  %2629 = vmatprep.subr.mxu0 0.0
  %2630 = vmatpush1.msra.mxu0 0.0
  %2631 = vmatprep.subr.mxu0 0.0
  %2632 = vmatpush1.msra.mxu0 0.0
  %2633 = vmatprep.subr.mxu0 0.0
  %2634 = vmatpush1.msra.mxu0 0.0
  %2635 = vmatprep.subr.mxu0 0.0
  %2636 = vmatpush1.msra.mxu0 0.0
  %2637 = vmatprep.subr.mxu0 0.0
  %2638 = vmatpush1.msra.mxu0 0.0
  %2639 = vmatprep.subr.mxu0 0.0
  %2640 = vmatpush1.msra.mxu0 0.0
  %2641 = vmatprep.subr.mxu0 0.0
  %2642 = vmatpush1.msra.mxu0 0.0
  %2643 = vmatprep.subr.mxu0 0.0
  %2644 = vmatpush1.msra.mxu0 0.0
  %2645 = vmatprep.subr.mxu0 0.0
  %2646 = vmatpush1.msra.mxu0 0.0
  %2647 = vmatprep.subr.mxu0 0.0
  %2648 = vmatpush1.msra.mxu0 0.0
  %2649 = vmatprep.subr.mxu0 0.0
  %2650 = vmatpush1.msra.mxu0 0.0
  %2651 = vmatprep.subr.mxu0 0.0
  %2652 = vmatpush1.msra.mxu0 0.0
  %2653 = vmatprep.subr.mxu0 0.0
  %2654 = vmatpush1.msra.mxu0 0.0
  %2655 = vmatprep.subr.mxu0 0.0
  %2656 = vmatpush1.msra.mxu0 0.0
  %2657 = vmatprep.subr.mxu0 0.0
  %2658 = vmatpush1.msra.mxu0 0.0
  %2659 = vmatprep.subr.mxu0 0.0
  %2660 = vmatpush1.msra.mxu0 0.0
  %2661 = vmatprep.subr.mxu0 0.0
  %2662 = vmatpush1.msra.mxu0 0.0
  %2663 = vmatprep.subr.mxu0 0.0
  %2664 = vmatpush1.msra.mxu0 0.0
  %2665 = vmatprep.subr.mxu0 0.0
  %2666 = vmatpush1.msra.mxu0 0.0
  %2667 = vmatprep.subr.mxu0 0.0
  %2668 = vmatpush1.msra.mxu0 0.0
  %2669 = vmatprep.subr.mxu0 0.0
  %2670 = vmatpush1.msra.mxu0 0.0
  %2671 = vmatprep.subr.mxu0 0.0
  %2672 = vmatpush1.msra.mxu0 0.0
  %2673 = vmatprep.subr.mxu0 0.0
  %2674 = vmatpush1.msra.mxu0 0.0
  %2675 = vmatprep.subr.mxu0 0.0
  %2676 = vmatpush1.msra.mxu0 0.0
  %2677 = vmatprep.subr.mxu0 0.0
  %2678 = vmatpush1.msra.mxu0 0.0
  %2679 = vmatprep.mubr.f32.mxu0 0.0
  %2680 = vmatmul.mubr.f32.gmra.mrb[0].mxu0 %v2604
  %v2681 = vpop.f32.mrb[0].mxu0
  %v2682 = vadd.f32 0.0, %v2681
  %v2683 = vpop.f32.mrb[0].mxu0
  %2684 = vmatprep.mubr.f32.mxu0 0.0
  %2685 = vmatmul.mubr.f32.gmra.mrb[0].mxu0 %v2607
  %v2686 = vpop.f32.mrb[0].mxu0
  %v2687 = vadd.f32 0.0, %v2686
  %v2688 = vpop.f32.mrb[0].mxu0
  %2689 = vmatprep.mubr.f32.mxu0 0.0
  %2690 = vmatmul.mubr.f32.gmra.mrb[0].mxu0 %v2610
  %v2691 = vpop.f32.mrb[0].mxu0
  %v2692 = vadd.f32 0.0, %v2691
  %v2693 = vpop.f32.mrb[0].mxu0
  %2694 = vmatprep.mubr.f32.mxu0 0.0
  %2695 = vmatmul.mubr.f32.gmra.mrb[0].mxu0 %v2613
  %v2696 = vpop.f32.mrb[0].mxu0
  %v2697 = vadd.f32 0.0, %v2696
  %v2698 = vpop.f32.mrb[0].mxu0
  %2699 = vdwg.mxu0
  %2704 = vrot.lane.b32.xlu0 %v2142, 8
  %v2705 = vpop.permute.xlu0 %2704
  %2706 = vrot.lane.b32.xlu0 %v2147, 8
  %v2707 = vpop.permute.xlu0 %2706
  %2708 = vrot.lane.b32.xlu0 %v2152, 8
  %v2709 = vpop.permute.xlu0 %2708
  %2710 = vrot.lane.b32.xlu0 %v2157, 8
  %v2711 = vpop.permute.xlu0 %2710
  %2720 = vrot.lane.b32.xlu0 %v2412, 16
  %v2721 = vpop.permute.xlu0 %2720
  %2722 = vrot.lane.b32.xlu0 %v2417, 16
  %v2723 = vpop.permute.xlu0 %2722
  %2724 = vrot.lane.b32.xlu0 %v2422, 16
  %v2725 = vpop.permute.xlu0 %2724
  %2726 = vrot.lane.b32.xlu0 %v2427, 16
  %v2727 = vpop.permute.xlu0 %2726
  %2736 = vrot.lane.b32.xlu0 %v2682, 24
  %v2737 = vpop.permute.xlu0 %2736
  %2738 = vrot.lane.b32.xlu0 %v2687, 24
  %v2739 = vpop.permute.xlu0 %2738
  %2740 = vrot.lane.b32.xlu0 %v2692, 24
  %v2741 = vpop.permute.xlu0 %2740
  %2742 = vrot.lane.b32.xlu0 %v2697, 24
  %v2743 = vpop.permute.xlu0 %2742
  %v2748 = vsel %vm273, %v1872, %v2705
  %v2749 = vsel %vm273, %v1877, %v2707
  %v2750 = vsel %vm273, %v1882, %v2709
  %v2751 = vsel %vm273, %v1887, %v2711
  %v2752 = vsel %vm1390, %v2748, %v2721
  %v2753 = vsel %vm1390, %v2749, %v2723
  %v2754 = vsel %vm1390, %v2750, %v2725
  %v2755 = vsel %vm1390, %v2751, %v2727
  %v2756 = vsel %vm1395, %v2752, %v2737
  %v2757 = vsel %vm1395, %v2753, %v2739
  %v2758 = vsel %vm1395, %v2754, %v2741
  %v2759 = vsel %vm1395, %v2755, %v2743
  %2764 = vrot.lane.b32.xlu0 %v1518, 32
  %v2765 = vpop.permute.xlu0 %2764
  %2766 = vrot.lane.b32.xlu0 %v1519, 32
  %v2767 = vpop.permute.xlu0 %2766
  %2768 = vrot.lane.b32.xlu0 %v1520, 32
  %v2769 = vpop.permute.xlu0 %2768
  %2770 = vrot.lane.b32.xlu0 %v1521, 32
  %v2771 = vpop.permute.xlu0 %2770
  %2777 = vrot.lane.b32.xlu0 %v1526, 32
  %v2778 = vpop.permute.xlu0 %2777
  %v2781 = vsel %vm163, %v2756, 0
  %v2784 = vsel %vm163, %v2757, 0
  %v2787 = vsel %vm163, %v2758, 0
  %v2790 = vsel %vm163, %v2759, 0
  %2792 = vmatprep.subr.mxu0 0.0
  %2793 = vmatpush1.msra.mxu0 %v2765
  %2794 = vmatprep.subr.mxu0 0.0
  %2795 = vmatpush1.msra.mxu0 %v2767
  %2796 = vmatprep.subr.mxu0 0.0
  %2797 = vmatpush1.msra.mxu0 %v2769
  %2798 = vmatprep.subr.mxu0 0.0
  %2799 = vmatpush1.msra.mxu0 %v2771
  %2800 = vmatprep.subr.mxu0 0.0
  %2801 = vmatpush1.msra.mxu0 0.0
  %2802 = vmatprep.subr.mxu0 0.0
  %2803 = vmatpush1.msra.mxu0 0.0
  %2804 = vmatprep.subr.mxu0 0.0
  %2805 = vmatpush1.msra.mxu0 0.0
  %2806 = vmatprep.subr.mxu0 0.0
  %2807 = vmatpush1.msra.mxu0 0.0
  %2808 = vmatprep.subr.mxu0 0.0
  %2809 = vmatpush1.msra.mxu0 0.0
  %2810 = vmatprep.subr.mxu0 0.0
  %2811 = vmatpush1.msra.mxu0 0.0
  %2812 = vmatprep.subr.mxu0 0.0
  %2813 = vmatpush1.msra.mxu0 0.0
  %2814 = vmatprep.subr.mxu0 0.0
  %2815 = vmatpush1.msra.mxu0 0.0
  %2816 = vmatprep.subr.mxu0 0.0
  %2817 = vmatpush1.msra.mxu0 0.0
  %2818 = vmatprep.subr.mxu0 0.0
  %2819 = vmatpush1.msra.mxu0 0.0
  %2820 = vmatprep.subr.mxu0 0.0
  %2821 = vmatpush1.msra.mxu0 0.0
  %2822 = vmatprep.subr.mxu0 0.0
  %2823 = vmatpush1.msra.mxu0 0.0
  %2824 = vmatprep.subr.mxu0 0.0
  %2825 = vmatpush1.msra.mxu0 0.0
  %2826 = vmatprep.subr.mxu0 0.0
  %2827 = vmatpush1.msra.mxu0 0.0
  %2828 = vmatprep.subr.mxu0 0.0
  %2829 = vmatpush1.msra.mxu0 0.0
  %2830 = vmatprep.subr.mxu0 0.0
  %2831 = vmatpush1.msra.mxu0 0.0
  %2832 = vmatprep.subr.mxu0 0.0
  %2833 = vmatpush1.msra.mxu0 0.0
  %2834 = vmatprep.subr.mxu0 0.0
  %2835 = vmatpush1.msra.mxu0 0.0
  %2836 = vmatprep.subr.mxu0 0.0
  %2837 = vmatpush1.msra.mxu0 0.0
  %2838 = vmatprep.subr.mxu0 0.0
  %2839 = vmatpush1.msra.mxu0 0.0
  %2840 = vmatprep.subr.mxu0 0.0
  %2841 = vmatpush1.msra.mxu0 0.0
  %2842 = vmatprep.subr.mxu0 0.0
  %2843 = vmatpush1.msra.mxu0 0.0
  %2844 = vmatprep.subr.mxu0 0.0
  %2845 = vmatpush1.msra.mxu0 0.0
  %2846 = vmatprep.subr.mxu0 0.0
  %2847 = vmatpush1.msra.mxu0 0.0
  %2848 = vmatprep.subr.mxu0 0.0
  %2849 = vmatpush1.msra.mxu0 0.0
  %2850 = vmatprep.subr.mxu0 0.0
  %2851 = vmatpush1.msra.mxu0 0.0
  %2852 = vmatprep.subr.mxu0 0.0
  %2853 = vmatpush1.msra.mxu0 0.0
  %2854 = vmatprep.subr.mxu0 0.0
  %2855 = vmatpush1.msra.mxu0 0.0
  %2856 = vmatprep.mubr.f32.mxu0 0.0
  %2857 = vmatmul.mubr.f32.gmra.mrb[0].mxu0 %v2781
  %v2858 = vpop.f32.mrb[0].mxu0
  %v2859 = vadd.f32 %v2778, %v2858
  %v2860 = vpop.f32.mrb[0].mxu0
  %2861 = vmatprep.mubr.f32.mxu0 0.0
  %2862 = vmatmul.mubr.f32.gmra.mrb[0].mxu0 %v2784
  %v2863 = vpop.f32.mrb[0].mxu0
  %v2864 = vadd.f32 %v2778, %v2863
  %v2865 = vpop.f32.mrb[0].mxu0
  %2866 = vmatprep.mubr.f32.mxu0 0.0
  %2867 = vmatmul.mubr.f32.gmra.mrb[0].mxu0 %v2787
  %v2868 = vpop.f32.mrb[0].mxu0
  %v2869 = vadd.f32 %v2778, %v2868
  %v2870 = vpop.f32.mrb[0].mxu0
  %2871 = vmatprep.mubr.f32.mxu0 0.0
  %2872 = vmatmul.mubr.f32.gmra.mrb[0].mxu0 %v2790
  %v2873 = vpop.f32.mrb[0].mxu0
  %v2874 = vadd.f32 %v2778, %v2873
  %v2875 = vpop.f32.mrb[0].mxu0
  %2876 = vdwg.mxu0
  %v2877 = vld [vmem:[%s3 + $0x2] sm:$0x1]
  %v2878 = vsel %vm163, %v2859, 0.0
  %2879 = vadd.xlane.f32.xlu0 %v2878
  %v2880 = vpop.xlane.xlu0 %2879
  %v2881 = vsel %vm163, %v2864, 0.0
  %2882 = vadd.xlane.f32.xlu0 %v2881
  %v2883 = vpop.xlane.xlu0 %2882
  %v2884 = vsel %vm163, %v2869, 0.0
  %2885 = vadd.xlane.f32.xlu0 %v2884
  %v2886 = vpop.xlane.xlu0 %2885
  %v2887 = vsel %vm163, %v2874, 0.0
  %2888 = vadd.xlane.f32.xlu0 %v2887
  %v2889 = vpop.xlane.xlu0 %2888
  %v2890 = vrcp.pop 32.0
  %v2891 = vmul.f32 %v2880, %v2890
  %v2892 = vmul.f32 %v2883, %v2890
  %v2893 = vmul.f32 %v2886, %v2890
  %v2894 = vmul.f32 %v2889, %v2890
  %v2895 = vsub.f32 %v2859, %v2891
  %v2896 = vsub.f32 %v2864, %v2892
  %v2897 = vsub.f32 %v2869, %v2893
  %v2898 = vsub.f32 %v2874, %v2894
  %v2899 = vmul.f32 %v2895, %v2895
  %v2900 = vmul.f32 %v2896, %v2896
  %v2901 = vmul.f32 %v2897, %v2897
  %v2902 = vmul.f32 %v2898, %v2898
  %v2903 = vsel %vm163, %v2899, 0.0
  %2904 = vadd.xlane.f32.xlu0 %v2903
  %v2905 = vpop.xlane.xlu0 %2904
  %v2906 = vsel %vm163, %v2900, 0.0
  %2907 = vadd.xlane.f32.xlu0 %v2906
  %v2908 = vpop.xlane.xlu0 %2907
  %v2909 = vsel %vm163, %v2901, 0.0
  %2910 = vadd.xlane.f32.xlu0 %v2909
  %v2911 = vpop.xlane.xlu0 %2910
  %v2912 = vsel %vm163, %v2902, 0.0
  %2913 = vadd.xlane.f32.xlu0 %v2912
  %v2914 = vpop.xlane.xlu0 %2913
  %v2915 = vmul.f32 %v2905, %v2890
  %v2916 = vmul.f32 %v2908, %v2890
  %v2917 = vmul.f32 %v2911, %v2890
  %v2918 = vmul.f32 %v2914, %v2890
  %v2919 = vadd.f32 %v2915, 1e-05
  %v2920 = vadd.f32 %v2916, 1e-05
  %v2921 = vadd.f32 %v2917, 1e-05
  %v2922 = vadd.f32 %v2918, 1e-05
  %v2923 = vrsqrt.pop %v2919
  %v2924 = vrsqrt.pop %v2920
  %v2925 = vrsqrt.pop %v2921
  %v2926 = vrsqrt.pop %v2922
  %v2927 = vmul.f32 %v2895, %v2923
  %v2928 = vmul.f32 %v2896, %v2924
  %v2929 = vmul.f32 %v2897, %v2925
  %v2930 = vmul.f32 %v2898, %v2926
  %v2931 = vlaneseq
  %v2932 = vshrl.u32 %v2931, 7
  %v2933 = vsub.s32 0, %v2932
  %v2934 = vrot.slane %v2877, %v2933
  %v2935 = vmul.f32 %v2927, %v2934
  %v2936 = vmul.f32 %v2928, %v2934
  %v2937 = vmul.f32 %v2929, %v2934
  %v2938 = vmul.f32 %v2930, %v2934
  %2940 = vrot.lane.b32.xlu0 %v2934, 96
  %v2941 = vpop.permute.xlu0 %2940
  %v2943 = vadd.f32 %v2935, %v2941
  %v2944 = vadd.f32 %v2936, %v2941
  %v2945 = vadd.f32 %v2937, %v2941
  %v2946 = vadd.f32 %v2938, %v2941
  %2947 = vst.msk [vmem:[%s4] sm:$0xff] %vm163, %v2943
  %2948 = vst.msk [vmem:[%s4 + $0x8] sm:$0xff] %vm163, %v2944
  %2949 = vst.msk [vmem:[%s4 + $0x10] sm:$0xff] %vm163, %v2945
  %2950 = vst.msk [vmem:[%s4 + $0x18] sm:$0xff] %vm163, %v2946
  // Predicated region
  $region18: #{_jitted_forward.1} parent=0 // pred_check
    _
  $region19: #{_jitted_forward.1} parent=0 // pred_check_branch
    %2952 = sbr.rel (0) target = $region21
  $region20: #{_jitted_forward.1} parent=0 // pred_region
    _
  $region21: #{_jitted_forward.1} parent=0 // pred_fallthru
    _
  // Predicated region
  $region22: #{_jitted_forward.1} parent=0 // pred_check
    _
  $region23: #{_jitted_forward.1} parent=0 // pred_check_branch
    %2954 = sbr.rel (0) target = $region25
  $region24: #{_jitted_forward.1} parent=0 // pred_region
    _
  $region25: #{_jitted_forward.1} parent=0 // pred_fallthru
    _

</llo_original>
